<compile_context>
chip_gen: v6e
topology: v6e:2x2x1
jax: 0.10.0
libtpu: 0.0.40
codegen_flags: <defaults>
</compile_context>

<pallas_src>
import functools

import jax
import jax.numpy as jnp
from jax import lax
from jax.experimental import pallas as pl
from jax.experimental.pallas import tpu as pltpu


LANE = 128                       # network-wide channel padding -> lane-dense
_VMEM_LIMIT = 32 * 1024 * 1024   # explicit scoped budget, safe on v5e/v6e/v7x


def _round_up(x, m):
    return (x + m - 1) // m * m


def _pick_tile(m, cap=2048):
    """Largest row tile <= cap (multiple of 8) that divides m; else m."""
    for t in (2048, 1024, 512, 256, 128, 64, 32, 16, 8):
        if t <= cap and t <= m and m % t == 0:
            return t
    return m


def _pack_conv_weight(w_oihw, cin_p, cout_p):
    """(Cout, Cin, KH, KW) -> (KH*KW*cin_p, cout_p) bf16, tap-major / chan-minor."""
    cout, cin, kh, kw = w_oihw.shape
    wk = jnp.transpose(w_oihw, (2, 3, 1, 0))                    # (KH, KW, Cin, Cout)
    wk = jnp.pad(wk, ((0, 0), (0, 0), (0, cin_p - cin), (0, cout_p - cout)))
    return wk.reshape(kh * kw * cin_p, cout_p).astype(jnp.bfloat16)


# ----------------------------------------------------------------------------
# Conv kernels (single MXU dot per image + fused per-image BN partial stats)
# ----------------------------------------------------------------------------
def _conv_epilogue(acc, o_ref, st_ref):
    s, cout_p = acc.shape
    o_ref[...] = acc.reshape(1, s, cout_p).astype(o_ref.dtype)
    # Per-image BN partial statistics (numerically stable centered form).
    mu = jnp.sum(acc, axis=0, keepdims=True) * (1.0 / s)         # (1, Cout)
    d = acc - mu
    m2 = jnp.sum(d * d, axis=0, keepdims=True)                   # (1, Cout)
    st_ref[...] = jnp.concatenate([mu, m2], axis=0).reshape(1, 2, cout_p)


def _conv3x3_s1_kernel(*refs, H, W, Cp, Coutp, fuse_in_bn):
    """3x3, stride 1, pad 1.  Optionally applies the previous layer's BN
    (scale/shift) + ReLU to the input tile before the dot."""
    if fuse_in_bn:
        x_ref, w_ref, isc_ref, ish_ref, o_ref, st_ref, xpad_ref = refs
    else:
        x_ref, w_ref, o_ref, st_ref, xpad_ref = refs

    OH, OW = H, W
    S = OH * OW

    xin = x_ref[0]                                               # (H, W, Cp) bf16
    if fuse_in_bn:
        xv = jnp.maximum(
            xin.astype(jnp.float32) * isc_ref[...].reshape(1, 1, Cp)
            + ish_ref[...].reshape(1, 1, Cp),
            0.0).astype(jnp.bfloat16)
    else:
        xv = xin

    # In-kernel zero padding (halo) into VMEM scratch: no HBM pad round trip.
    xpad_ref[...] = jnp.zeros((H + 2, W + 2, Cp), jnp.bfloat16)
    xpad_ref[1:H + 1, 1:W + 1, :] = xv

    # Pack the 9 taps along the contraction axis -> one MXU dot.
    cols = [xpad_ref[di:di + OH, dj:dj + OW, :].reshape(S, Cp)
            for di in range(3) for dj in range(3)]
    xmat = jnp.concatenate(cols, axis=-1)                        # (S, 9*Cp)
    acc = jnp.dot(xmat, w_ref[...], preferred_element_type=jnp.float32)
    _conv_epilogue(acc, o_ref, st_ref)


def _conv3x3_s2_kernel(x_ref, w_ref, o_ref, st_ref, *, OH, OW, Cp, Coutp):
    """3x3, stride 2, pad 1, on wrapper-de-interleaved phases (4, Hs, Ws, Cp)."""
    S = OH * OW
    cols = []
    for di in range(3):
        for dj in range(3):
            p = (di % 2) * 2 + (dj % 2)
            oi, oj = di // 2, dj // 2
            cols.append(x_ref[p, oi:oi + OH, oj:oj + OW, :].reshape(S, Cp))
    xmat = jnp.concatenate(cols, axis=-1)                        # (S, 9*Cp)
    acc = jnp.dot(xmat, w_ref[...], preferred_element_type=jnp.float32)
    _conv_epilogue(acc, o_ref, st_ref)


def _conv1x1_kernel(x_ref, w_ref, o_ref, st_ref):
    acc = jnp.dot(x_ref[0], w_ref[...], preferred_element_type=jnp.float32)
    _conv_epilogue(acc, o_ref, st_ref)


def conv3x3_s1(x_nhwc, w_oihw, in_scale=None, in_shift=None):
    """Returns (raw (N, H*W, Coutp) bf16, stats (N, 2, Coutp) f32)."""
    n, h, w, cp = x_nhwc.shape
    cout = w_oihw.shape[0]
    cout_p = _round_up(cout, LANE)
    wk = _pack_conv_weight(w_oihw, cp, cout_p)                   # (9*cp, cout_p)
    fuse = in_scale is not None
    s = h * w

    kern = functools.partial(_conv3x3_s1_kernel, H=h, W=w, Cp=cp, Coutp=cout_p,
                             fuse_in_bn=fuse)
    in_specs = [pl.BlockSpec((1, h, w, cp), lambda i: (i, 0, 0, 0)),
                pl.BlockSpec((9 * cp, cout_p), lambda i: (0, 0))]
    args = [x_nhwc.astype(jnp.bfloat16), wk]
    if fuse:
        in_specs += [pl.BlockSpec((1, cp), lambda i: (0, 0)),
                     pl.BlockSpec((1, cp), lambda i: (0, 0))]
        args += [in_scale, in_shift]

    out, stats = pl.pallas_call(
        kern,
        out_shape=(jax.ShapeDtypeStruct((n, s, cout_p), jnp.bfloat16),
                   jax.ShapeDtypeStruct((n, 2, cout_p), jnp.float32)),
        grid=(n,),
        in_specs=in_specs,
        out_specs=(pl.BlockSpec((1, s, cout_p), lambda i: (i, 0, 0)),
                   pl.BlockSpec((1, 2, cout_p), lambda i: (i, 0, 0))),
        scratch_shapes=[pltpu.VMEM((h + 2, w + 2, cp), jnp.bfloat16)],
        compiler_params=pltpu.CompilerParams(
            dimension_semantics=("parallel",),
            vmem_limit_bytes=_VMEM_LIMIT),
    )(*args)
    return out, stats


def conv3x3_s2(x_nhwc, w_oihw):
    """Stride-2 3x3 conv.  Returns (raw, stats, OH, OW)."""
    # TODO(synk): the pad + phase de-interleave below is a wrapper-side HBM pass;
    # it only runs for the one downsampling conv per segment.
    n, h, w, cp = x_nhwc.shape
    cout = w_oihw.shape[0]
    cout_p = _round_up(cout, LANE)
    wk = _pack_conv_weight(w_oihw, cp, cout_p)

    x = jnp.pad(x_nhwc.astype(jnp.bfloat16), ((0, 0), (1, 1), (1, 1), (0, 0)))
    hp, wp = h + 2, w + 2
    oh = (hp - 3) // 2 + 1
    ow = (wp - 3) // 2 + 1
    if hp % 2:
        x = jnp.pad(x, ((0, 0), (0, 1), (0, 0), (0, 0)))
        hp += 1
    if wp % 2:
        x = jnp.pad(x, ((0, 0), (0, 0), (0, 1), (0, 0)))
        wp += 1
    hs, ws = hp // 2, wp // 2
    xb = x.reshape(n, hs, 2, ws, 2, cp)
    xb = jnp.transpose(xb, (0, 2, 4, 1, 3, 5)).reshape(n * 4, hs, ws, cp)
    s = oh * ow

    kern = functools.partial(_conv3x3_s2_kernel, OH=oh, OW=ow, Cp=cp, Coutp=cout_p)
    out, stats = pl.pallas_call(
        kern,
        out_shape=(jax.ShapeDtypeStruct((n, s, cout_p), jnp.bfloat16),
                   jax.ShapeDtypeStruct((n, 2, cout_p), jnp.float32)),
        grid=(n,),
        in_specs=[pl.BlockSpec((4, hs, ws, cp), lambda i: (i, 0, 0, 0)),
                  pl.BlockSpec((9 * cp, cout_p), lambda i: (0, 0))],
        out_specs=(pl.BlockSpec((1, s, cout_p), lambda i: (i, 0, 0)),
                   pl.BlockSpec((1, 2, cout_p), lambda i: (i, 0, 0))),
        compiler_params=pltpu.CompilerParams(
            dimension_semantics=("parallel",),
            vmem_limit_bytes=_VMEM_LIMIT),
    )(xb, wk)
    return out, stats, oh, ow


def conv1x1(x_nhwc, w_oihw):
    """1x1 conv (stride handled by the caller's subsample)."""
    n, h, w, cp = x_nhwc.shape
    cout = w_oihw.shape[0]
    cout_p = _round_up(cout, LANE)
    wk = _pack_conv_weight(w_oihw, cp, cout_p)                   # (cp, cout_p)
    s = h * w
    x2 = x_nhwc.reshape(n, s, cp).astype(jnp.bfloat16)
    out, stats = pl.pallas_call(
        _conv1x1_kernel,
        out_shape=(jax.ShapeDtypeStruct((n, s, cout_p), jnp.bfloat16),
                   jax.ShapeDtypeStruct((n, 2, cout_p), jnp.float32)),
        grid=(n,),
        in_specs=[pl.BlockSpec((1, s, cp), lambda i: (i, 0, 0)),
                  pl.BlockSpec((cp, cout_p), lambda i: (0, 0))],
        out_specs=(pl.BlockSpec((1, s, cout_p), lambda i: (i, 0, 0)),
                   pl.BlockSpec((1, 2, cout_p), lambda i: (i, 0, 0))),
        compiler_params=pltpu.CompilerParams(
            dimension_semantics=("parallel",),
            vmem_limit_bytes=_VMEM_LIMIT),
    )(x2, wk)
    return out, stats


# ----------------------------------------------------------------------------
# Hoisted BN stat reduction (tiny wrapper math) + streaming finalize kernel
# ----------------------------------------------------------------------------
def _bn_scale_shift(stats, gamma, beta, s_per_img, eps=1e-5):
    """Reduce per-image (N,2,Cp) stats to (1,Cp) scale / shift (f32)."""
    cp = stats.shape[-1]
    g = jnp.pad(gamma.astype(jnp.float32), (0, cp - gamma.shape[0])).reshape(1, cp)
    b = jnp.pad(beta.astype(jnp.float32), (0, cp - beta.shape[0])).reshape(1, cp)
    mu_n = stats[:, 0, :]                                        # (N, Cp)
    m2_n = stats[:, 1, :]                                        # (N, Cp)
    n = stats.shape[0]
    mu = jnp.mean(mu_n, axis=0, keepdims=True)
    var = (jnp.sum(m2_n, axis=0, keepdims=True)
           + s_per_img * jnp.sum((mu_n - mu) ** 2, axis=0, keepdims=True)
           ) / float(n * s_per_img)
    scale = g * lax.rsqrt(var + eps)
    shift = b - mu * scale
    return scale, shift


def _finalize_kernel(*refs, add_res):
    """out = relu(x*scale + shift [+ res*res_scale + res_shift]); lane-dense."""
    if add_res:
        x_ref, sm_ref, bm_ref, r_ref, sr_ref, br_ref, o_ref = refs
    else:
        x_ref, sm_ref, bm_ref, o_ref = refs
    y = x_ref[...].astype(jnp.float32) * sm_ref[...] + bm_ref[...]
    if add_res:
        y = y + r_ref[...].astype(jnp.float32) * sr_ref[...] + br_ref[...]
    o_ref[...] = jnp.maximum(y, 0.0).astype(o_ref.dtype)


def bn_relu(x2d, scale, shift, residual=None, res_scale=None, res_shift=None,
            out_dtype=jnp.bfloat16):
    m, cp = x2d.shape
    tm = _pick_tile(m)
    add_res = residual is not None
    kern = functools.partial(_finalize_kernel, add_res=add_res)

    in_specs = [pl.BlockSpec((tm, cp), lambda i: (i, 0)),
                pl.BlockSpec((1, cp), lambda i: (0, 0)),
                pl.BlockSpec((1, cp), lambda i: (0, 0))]
    args = [x2d, scale, shift]
    if add_res:
        in_specs += [pl.BlockSpec((tm, cp), lambda i: (i, 0)),
                     pl.BlockSpec((1, cp), lambda i: (0, 0)),
                     pl.BlockSpec((1, cp), lambda i: (0, 0))]
        args += [residual, res_scale, res_shift]

    return pl.pallas_call(
        kern,
        out_shape=jax.ShapeDtypeStruct((m, cp), out_dtype),
        grid=(m // tm,),
        in_specs=in_specs,
        out_specs=pl.BlockSpec((tm, cp), lambda i: (i, 0)),
        compiler_params=pltpu.CompilerParams(
            dimension_semantics=("parallel",),
            vmem_limit_bytes=_VMEM_LIMIT),
    )(*args)


# ----------------------------------------------------------------------------
# Head: per-image global average pool + Linear (bf16 matmul, padded classes)
# ----------------------------------------------------------------------------
def _head_kernel(x_ref, w_ref, b_ref, o_ref, *, inv_s):
    pooled = jnp.sum(x_ref[0].astype(jnp.float32), axis=0, keepdims=True) * inv_s
    out = jnp.dot(pooled.astype(jnp.bfloat16), w_ref[...],
                  preferred_element_type=jnp.float32) + b_ref[...]
    o_ref[...] = out.reshape(1, 1, -1)


def head(x_nsc, fc_w, fc_b):
    n, s, cp = x_nsc.shape
    k = fc_w.shape[0]
    kp = _round_up(k, LANE)
    wt = jnp.transpose(fc_w)                                     # (C_true, K)
    wt = jnp.pad(wt, ((0, cp - wt.shape[0]), (0, kp - k))).astype(jnp.bfloat16)
    bias = jnp.pad(fc_b.astype(jnp.float32), (0, kp - k)).reshape(1, kp)
    out = pl.pallas_call(
        functools.partial(_head_kernel, inv_s=1.0 / s),
        out_shape=jax.ShapeDtypeStruct((n, 1, kp), jnp.float32),
        grid=(n,),
        in_specs=[pl.BlockSpec((1, s, cp), lambda i: (i, 0, 0)),
                  pl.BlockSpec((cp, kp), lambda i: (0, 0)),
                  pl.BlockSpec((1, kp), lambda i: (0, 0))],
        out_specs=pl.BlockSpec((1, 1, kp), lambda i: (i, 0, 0)),
        compiler_params=pltpu.CompilerParams(
            dimension_semantics=("parallel",),
            vmem_limit_bytes=_VMEM_LIMIT),
    )(x_nsc, wt, bias)
    return out.reshape(n, kp)[:, :k]


# ----------------------------------------------------------------------------
# ResNet forward
# ----------------------------------------------------------------------------
def block_forward(x, bp):
    n, h, w, cpad = x.shape

    if bp["downsample"]:
        raw1, st1, oh, ow = conv3x3_s2(x, bp["conv1"])
    else:
        raw1, st1 = conv3x3_s1(x, bp["conv1"])
        oh, ow = h, w
    s = oh * ow
    c = raw1.shape[-1]
    s1, b1 = _bn_scale_shift(st1, bp["bn1_g"], bp["bn1_b"], s)

    # conv2 consumes raw conv1 output with BN1+ReLU fused into its prologue.
    raw2, st2 = conv3x3_s1(raw1.reshape(n, oh, ow, c), bp["conv2"],
                           in_scale=s1, in_shift=b1)
    s2, b2 = _bn_scale_shift(st2, bp["bn2_g"], bp["bn2_b"], s)

    if "sc_conv" in bp:
        # Shortcut = 1x1 stride-2 conv + BN (matches the PyTorch module).
        xs = x[:, ::2, ::2, :]
        raw_sc, st_sc = conv1x1(xs, bp["sc_conv"])
        ssc, bsc = _bn_scale_shift(st_sc, bp["sc_bn_g"], bp["sc_bn_b"], s)
        res = raw_sc.reshape(n * s, c)
    else:
        res = x.reshape(n * h * w, cpad)
        ssc = jnp.ones((1, cpad), jnp.float32)
        bsc = jnp.zeros((1, cpad), jnp.float32)

    y = bn_relu(raw2.reshape(n * s, c), s2, b2,
                residual=res, res_scale=ssc, res_shift=bsc)
    return y.reshape(n, oh, ow, c)


def resnet_forward(params, x_nchw):
    x = jnp.transpose(x_nchw, (0, 2, 3, 1)).astype(jnp.bfloat16)     # NCHW -> NHWC
    n, h, w, cin = x.shape
    x = jnp.pad(x, ((0, 0), (0, 0), (0, 0), (0, LANE - cin)))        # lane-dense

    raw0, st0 = conv3x3_s1(x, params["conv"])
    s = h * w
    c = raw0.shape[-1]
    s0, b0 = _bn_scale_shift(st0, params["bn_g"], params["bn_b"], s)
    hact = bn_relu(raw0.reshape(n * s, c), s0, b0).reshape(n, h, w, c)

    for bp in params["blocks"]:
        hact = block_forward(hact, bp)

    n2, h2, w2, c2 = hact.shape
    return head(hact.reshape(n2, h2 * w2, c2), params["fc_w"], params["fc_b"])


# ----------------------------------------------------------------------------
# Deterministic parameter init (matches the PyTorch __init__ shapes)
# ----------------------------------------------------------------------------
def kaiming_normal(key, shape, fan_in):
    return jax.random.normal(key, shape, jnp.float32) * jnp.sqrt(2.0 / fan_in)


def init_params(key, plan, num_classes):
    keys = iter(jax.random.split(key, 256))
    params = {}
    c0 = plan[0][0]
    params["conv"] = kaiming_normal(next(keys), (c0, 3, 3, 3), 3 * 3 * 3)
    params["bn_g"] = jax.random.uniform(next(keys), (c0,), jnp.float32)
    params["bn_b"] = jnp.zeros((c0,), jnp.float32)

    blocks = []
    cur = c0
    for si, (f, nb) in enumerate(plan):
        for bi in range(nb):
            downsample = si > 0 and bi == 0
            bp = {"downsample": downsample}
            bp["conv1"] = kaiming_normal(next(keys), (f, cur, 3, 3), cur * 9)
            bp["bn1_g"] = jax.random.uniform(next(keys), (f,), jnp.float32)
            bp["bn1_b"] = jnp.zeros((f,), jnp.float32)
            bp["conv2"] = kaiming_normal(next(keys), (f, f, 3, 3), f * 9)
            bp["bn2_g"] = jax.random.uniform(next(keys), (f,), jnp.float32)
            bp["bn2_b"] = jnp.zeros((f,), jnp.float32)
            if downsample or cur != f:
                bp["sc_conv"] = kaiming_normal(next(keys), (f, cur, 1, 1), cur)
                bp["sc_bn_g"] = jax.random.uniform(next(keys), (f,), jnp.float32)
                bp["sc_bn_b"] = jnp.zeros((f,), jnp.float32)
            blocks.append(bp)
            cur = f
    params["blocks"] = blocks
    params["fc_w"] = kaiming_normal(next(keys), (num_classes, cur), cur)
    params["fc_b"] = jnp.zeros((num_classes,), jnp.float32)
    return params


# ----------------------------------------------------------------------------
if __name__ == "__main__":
    key = jax.random.PRNGKey(0)
    kp, kx = jax.random.split(key)

    # Small CIFAR-style plan: [(filters, num_blocks), ...]
    plan = [(8, 1), (16, 1)]
    num_classes = 10
    params = init_params(kp, plan, num_classes)

    # Input matches the PyTorch NCHW convention: (batch=2, channels=3, 16, 16).
    x = jax.random.normal(kx, (2, 3, 16, 16), jnp.float32)

    logits = resnet_forward(params, x)
    jax.block_until_ready(logits)
    assert logits.shape == (2, num_classes)
    print("KERNEL_OK")
</pallas_src>

<mosaic_0001>
module attributes {stable_mosaic.version = 11 : i64} {
  func.func @_conv3x3_s1_kernel(%arg0: i32, %arg1: memref<1x16x16x128xbf16, #tpu.memory_space<vmem>>, %arg2: memref<1152x128xbf16, #tpu.memory_space<vmem>>, %arg3: memref<1x256x128xbf16, #tpu.memory_space<vmem>>, %arg4: memref<1x2x128xf32, #tpu.memory_space<vmem>>, %arg5: memref<18x18x128xbf16, #tpu.memory_space<vmem>>) attributes {dimension_semantics = [#tpu.dimension_semantics<parallel>], iteration_bounds = array<i64: 2>, scalar_prefetch = 0 : i64, scratch_operands = 1 : i64, tpu.core_type = #tpu.core_type<tc>, window_params = [{transform_indices = @transform_0, window_bounds = array<i64: 1, 16, 16, 128>}, {pipeline_mode = #tpu.pipeline_mode<synchronous>, transform_indices = @transform_1, window_bounds = array<i64: 1152, 128>}, {transform_indices = @transform_2, window_bounds = array<i64: 1, 256, 128>}, {transform_indices = @transform_3, window_bounds = array<i64: 1, 2, 128>}]} {
    %c0 = arith.constant 0 : index
    %c0_0 = arith.constant 0 : index
    %c0_1 = arith.constant 0 : index
    %c0_2 = arith.constant 0 : index
    %0 = vector.load %arg1[%c0, %c0_0, %c0_1, %c0_2] : memref<1x16x16x128xbf16, #tpu.memory_space<vmem>>, vector<1x16x16x128xbf16>
    %1 = vector.shape_cast %0 : vector<1x16x16x128xbf16> to vector<16x16x128xbf16>
    %cst = arith.constant 0.000000e+00 : bf16
    %2 = vector.broadcast %cst : bf16 to vector<18x18x128xbf16>
    %c0_3 = arith.constant 0 : index
    %c0_4 = arith.constant 0 : index
    %c0_5 = arith.constant 0 : index
    %3 = vector.load %arg5[%c0_3, %c0_4, %c0_5] : memref<18x18x128xbf16, #tpu.memory_space<vmem>>, vector<18x18x128xbf16>
    tpu.vector_store %arg5[%c0_3, %c0_4, %c0_5], %2 {strides = array<i32>} : memref<18x18x128xbf16, #tpu.memory_space<vmem>>, vector<18x18x128xbf16>,
    %c1 = arith.constant 1 : index
    %c1_6 = arith.constant 1 : index
    %c0_7 = arith.constant 0 : index
    %4 = vector.load %arg5[%c1, %c1_6, %c0_7] : memref<18x18x128xbf16, #tpu.memory_space<vmem>>, vector<16x16x128xbf16>
    tpu.vector_store %arg5[%c1, %c1_6, %c0_7], %1 {strides = array<i32>} : memref<18x18x128xbf16, #tpu.memory_space<vmem>>, vector<16x16x128xbf16>,
    %c0_8 = arith.constant 0 : index
    %c0_9 = arith.constant 0 : index
    %c0_10 = arith.constant 0 : index
    %5 = vector.load %arg5[%c0_8, %c0_9, %c0_10] : memref<18x18x128xbf16, #tpu.memory_space<vmem>>, vector<16x16x128xbf16>
    %6 = vector.shape_cast %5 : vector<16x16x128xbf16> to vector<256x128xbf16>
    %c0_11 = arith.constant 0 : index
    %c1_12 = arith.constant 1 : index
    %c0_13 = arith.constant 0 : index
    %7 = vector.load %arg5[%c0_11, %c1_12, %c0_13] : memref<18x18x128xbf16, #tpu.memory_space<vmem>>, vector<16x16x128xbf16>
    %8 = vector.shape_cast %7 : vector<16x16x128xbf16> to vector<256x128xbf16>
    %c0_14 = arith.constant 0 : index
    %c2 = arith.constant 2 : index
    %c0_15 = arith.constant 0 : index
    %9 = vector.load %arg5[%c0_14, %c2, %c0_15] : memref<18x18x128xbf16, #tpu.memory_space<vmem>>, vector<16x16x128xbf16>
    %10 = vector.shape_cast %9 : vector<16x16x128xbf16> to vector<256x128xbf16>
    %c1_16 = arith.constant 1 : index
    %c0_17 = arith.constant 0 : index
    %c0_18 = arith.constant 0 : index
    %11 = vector.load %arg5[%c1_16, %c0_17, %c0_18] : memref<18x18x128xbf16, #tpu.memory_space<vmem>>, vector<16x16x128xbf16>
    %12 = vector.shape_cast %11 : vector<16x16x128xbf16> to vector<256x128xbf16>
    %c1_19 = arith.constant 1 : index
    %c1_20 = arith.constant 1 : index
    %c0_21 = arith.constant 0 : index
    %13 = vector.load %arg5[%c1_19, %c1_20, %c0_21] : memref<18x18x128xbf16, #tpu.memory_space<vmem>>, vector<16x16x128xbf16>
    %14 = vector.shape_cast %13 : vector<16x16x128xbf16> to vector<256x128xbf16>
    %c1_22 = arith.constant 1 : index
    %c2_23 = arith.constant 2 : index
    %c0_24 = arith.constant 0 : index
    %15 = vector.load %arg5[%c1_22, %c2_23, %c0_24] : memref<18x18x128xbf16, #tpu.memory_space<vmem>>, vector<16x16x128xbf16>
    %16 = vector.shape_cast %15 : vector<16x16x128xbf16> to vector<256x128xbf16>
    %c2_25 = arith.constant 2 : index
    %c0_26 = arith.constant 0 : index
    %c0_27 = arith.constant 0 : index
    %17 = vector.load %arg5[%c2_25, %c0_26, %c0_27] : memref<18x18x128xbf16, #tpu.memory_space<vmem>>, vector<16x16x128xbf16>
    %18 = vector.shape_cast %17 : vector<16x16x128xbf16> to vector<256x128xbf16>
    %c2_28 = arith.constant 2 : index
    %c1_29 = arith.constant 1 : index
    %c0_30 = arith.constant 0 : index
    %19 = vector.load %arg5[%c2_28, %c1_29, %c0_30] : memref<18x18x128xbf16, #tpu.memory_space<vmem>>, vector<16x16x128xbf16>
    %20 = vector.shape_cast %19 : vector<16x16x128xbf16> to vector<256x128xbf16>
    %c2_31 = arith.constant 2 : index
    %c2_32 = arith.constant 2 : index
    %c0_33 = arith.constant 0 : index
    %21 = vector.load %arg5[%c2_31, %c2_32, %c0_33] : memref<18x18x128xbf16, #tpu.memory_space<vmem>>, vector<16x16x128xbf16>
    %22 = vector.shape_cast %21 : vector<16x16x128xbf16> to vector<256x128xbf16>
    %23 = tpu.concatenate %6, %8, %10, %12, %14, %16, %18, %20, %22 in 1 : vector<256x128xbf16>, vector<256x128xbf16>, vector<256x128xbf16>, vector<256x128xbf16>, vector<256x128xbf16>, vector<256x128xbf16>, vector<256x128xbf16>, vector<256x128xbf16>, vector<256x128xbf16> -> vector<256x1152xbf16>
    %c0_34 = arith.constant 0 : index
    %c0_35 = arith.constant 0 : index
    %24 = vector.load %arg2[%c0_34, %c0_35] : memref<1152x128xbf16, #tpu.memory_space<vmem>>, vector<1152x128xbf16>
    %cst_36 = arith.constant dense<0.000000e+00> : vector<256x128xf32>
    %25 = tpu.matmul %23, %24, %cst_36 {dimension_numbers = #tpu.dot_dimension_numbers<[1], [0], [0], [1], [0, 0, 1, 1], [], []>} : vector<256x1152xbf16>, vector<1152x128xbf16>, vector<256x128xf32> -> vector<256x128xf32>
    %26 = vector.shape_cast %25 : vector<256x128xf32> to vector<1x256x128xf32>
    %27 = arith.truncf %26 : vector<1x256x128xf32> to vector<1x256x128xbf16>
    %c0_37 = arith.constant 0 : index
    %c0_38 = arith.constant 0 : index
    %c0_39 = arith.constant 0 : index
    %28 = vector.load %arg3[%c0_37, %c0_38, %c0_39] : memref<1x256x128xbf16, #tpu.memory_space<vmem>>, vector<1x256x128xbf16>
    tpu.vector_store %arg3[%c0_37, %c0_38, %c0_39], %27 {strides = array<i32>} : memref<1x256x128xbf16, #tpu.memory_space<vmem>>, vector<1x256x128xbf16>,
    %cst_40 = arith.constant dense<0.000000e+00> : vector<128xf32>
    %29 = vector.multi_reduction <add>, %25, %cst_40 [0] : vector<256x128xf32> to vector<128xf32>
    %30 = vector.shape_cast %29 : vector<128xf32> to vector<1x128xf32>
    %cst_41 = arith.constant 3.906250e-03 : f32
    %31 = vector.broadcast %cst_41 : f32 to vector<1x128xf32>
    %32 = arith.mulf %30, %31 : vector<1x128xf32>
    %33 = vector.broadcast %32 : vector<1x128xf32> to vector<256x128xf32>
    %34 = arith.subf %25, %33 : vector<256x128xf32>
    %35 = arith.mulf %34, %34 : vector<256x128xf32>
    %cst_42 = arith.constant dense<0.000000e+00> : vector<128xf32>
    %36 = vector.multi_reduction <add>, %35, %cst_42 [0] : vector<256x128xf32> to vector<128xf32>
    %37 = vector.shape_cast %36 : vector<128xf32> to vector<1x128xf32>
    %38 = tpu.concatenate %32, %37 in 0 : vector<1x128xf32>, vector<1x128xf32> -> vector<2x128xf32>
    %39 = vector.shape_cast %38 : vector<2x128xf32> to vector<1x2x128xf32>
    %c0_43 = arith.constant 0 : index
    %c0_44 = arith.constant 0 : index
    %c0_45 = arith.constant 0 : index
    %40 = vector.load %arg4[%c0_43, %c0_44, %c0_45] : memref<1x2x128xf32, #tpu.memory_space<vmem>>, vector<1x2x128xf32>
    tpu.vector_store %arg4[%c0_43, %c0_44, %c0_45], %39 {strides = array<i32>} : memref<1x2x128xf32, #tpu.memory_space<vmem>>, vector<1x2x128xf32>,
    return
  }
  func.func @transform_0(%arg0: i32) -> (i32, i32, i32, i32) {
    %c0_i32 = arith.constant 0 : i32
    %c0_i32_0 = arith.constant 0 : i32
    %c0_i32_1 = arith.constant 0 : i32
    %c0_i32_2 = arith.constant 0 : i32
    return %arg0, %c0_i32, %c0_i32_0, %c0_i32_1 : i32, i32, i32, i32
  }
  func.func @transform_1(%arg0: i32) -> (i32, i32) {
    %c0_i32 = arith.constant 0 : i32
    %c0_i32_0 = arith.constant 0 : i32
    %c0_i32_1 = arith.constant 0 : i32
    return %c0_i32, %c0_i32_0 : i32, i32
  }
  func.func @transform_2(%arg0: i32) -> (i32, i32, i32) {
    %c0_i32 = arith.constant 0 : i32
    %c0_i32_0 = arith.constant 0 : i32
    %c0_i32_1 = arith.constant 0 : i32
    return %arg0, %c0_i32, %c0_i32_0 : i32, i32, i32
  }
  func.func @transform_3(%arg0: i32) -> (i32, i32, i32) {
    %c0_i32 = arith.constant 0 : i32
    %c0_i32_0 = arith.constant 0 : i32
    %c0_i32_1 = arith.constant 0 : i32
    return %arg0, %c0_i32, %c0_i32_0 : i32, i32, i32
  }
}

</mosaic_0001>

<llo_original>
// kernel: tpu_custom_call.1
$region0: #{tpu_custom_call.1}
  #allocation0 [shape = 'u32[]', space=smem, size = 0x4, offset = 0x4, fixed_abs, tag = 'smem constant byte address 0x4 - core index']
  #allocation1 [shape = 'u32[144,128]{1,0:T(1,128)}', space=vmem, size = 0x12000, scoped, tag = 'internal scratch']
  #allocation2 [shape = 'bf16[18,18,128]{2,1,0:T(8,128)(2,1)}', space=vmem, size = 0x1b000, scoped, tag = 'scratch operand']
  %s0 = inlined_call_operand.hbm [shape: bf16[2,16,16,128], index: 0, kind: input, shape index: {}]
  %s1 = inlined_call_operand.hbm [shape: bf16[1152,128], index: 1, kind: input, shape index: {}]
  %s2 = inlined_call_operand.hbm [shape: bf16[2,256,128], index: 2, kind: output, shape index: {0}]
  %s3 = inlined_call_operand.hbm [shape: f32[2,2,128], index: 3, kind: output, shape index: {1}]
  %4 = xla_tuple %s2, %s3
  %s5 = sld [smem:[#allocation0]]
  $region57: #{tpu_custom_call.1} parent=0
    _
  %s7 = ssub.s32 1, %s5
  %s8 = scalar_select 0, %s7, %s5
  $region1: #{tpu_custom_call.1} parent=0
    #allocation3 [shape = 'u8[131072]{0}', space=vmem, size = 0x20000, scoped, tag = 'input window, operand 0']
    #allocation4 [shape = 's32[2]{0}', space=sflag, size = 0x8, scoped, tag = 'scoped memory for tpu_custom_call.1']
    #allocation5 [shape = 's32[2]{0}', space=sflag, size = 0x8, scoped, tag = 'scoped memory for tpu_custom_call.1']
    #allocation6 [shape = 'u8[294912]{0}', space=vmem, size = 0x48000, scoped, tag = 'input window, operand 1, single buffered']
    #allocation7 [shape = 's32[1]{0}', space=sflag, size = 0x4, scoped, tag = 'scoped memory for tpu_custom_call.1']
    #allocation8 [shape = 'u8[131072]{0}', space=vmem, size = 0x20000, scoped, tag = 'output window, operand 0']
    #allocation9 [shape = 'u8[2048]{0}', space=vmem, size = 0x800, scoped, tag = 'output window, operand 1']
    #allocation10 [shape = 's32[2]{0}', space=sflag, size = 0x8, scoped, tag = 'scoped memory for tpu_custom_call.1']
    %9 = vsyncpa [#allocation4], 0
    %s10 = scalar_lea.sflag [#allocation4], 1
    %11 = vsyncpa %s10, 0
    %12 = vsyncpa [#allocation7], 0
    %13 = vsyncpa [#allocation5], 0
    %s14 = scalar_lea.sflag [#allocation5], 1
    %15 = vsyncpa %s14, 0
    %16 = vsyncpa [#allocation10], 0
    %s17 = scalar_lea.sflag [#allocation10], 1
    %18 = vsyncpa %s17, 0
    loop: start=0, step=1, limit=4
    $region2: #{tpu_custom_call.1} parent=1 // loop_pre_header
      _
    $region3: #{tpu_custom_call.1} parent=1 // loop_header
      %s20 = sphi 0, %s24
      %p21 = scmp.ge.s32.totalorder %s20, 4
      %s30 = sphi 0, %s32
      %s33 = sphi 0, %s30
      %s34 = sphi 0, %s33
      %s50 = sphi 0, %s34
      %s54 = sphi 0, %s54
      %s56 = sphi 0, %s54
      %s57 = sphi 0, %s56
      %s71 = sphi 0, %s57
      %s77 = sphi 0, %s79
      %s80 = sphi 0, %s77
      %s81 = sphi 0, %s80
      %s97 = sphi 0, %s81
      %s103 = sphi 0, %s105
      %s106 = sphi 0, %s103
      %s107 = sphi 0, %s106
      %s123 = sphi 0, %s107
    $region4: #{tpu_custom_call.1} parent=1 // loop_header_branch
      %23 = sbr.rel (%p21) target = $region8
    $region5: #{tpu_custom_call.1} parent=1 // loop_body
      %s25 = ssub.s32 %s20, 1
      %s26 = ssub.s32 %s20, 2
      %s27 = sadd.s32 %s20, 1
      %s28 = ssub.s32 %s20, %s27
      %p29 = scmp.eq.s32.totalorder %s28, 0
      %s31 = sadd.s32 %s30, 1
      %s32 = scalar_select %p29, %s30, %s31
      %p35 = pneg %p29
      %p36 = scmp.eq.s32.totalorder %s20, 1
      %p37 = por %p35, %p36
      %p38 = scmp.ne.s32.totalorder %s30, %s33
      %p39 = scmp.eq.s32.totalorder %s20, 0
      %p40 = por %p38, %p39
      %p41 = scmp.ne.s32.totalorder %s30, %s33
      %p42 = scmp.eq.s32.totalorder %s25, 1
      %p43 = por %p41, %p42
      %p44 = scmp.ne.s32.totalorder %s33, %s34
      %p45 = scmp.eq.s32.totalorder %s25, 0
      %p46 = por %p44, %p45
      %p47 = scmp.ne.s32.totalorder %s33, %s34
      %p48 = scmp.eq.s32.totalorder %s26, 1
      %p49 = por %p47, %p48
      %p51 = scmp.ne.s32.totalorder %s34, %s50
      %p52 = scmp.eq.s32.totalorder %s26, 0
      %p53 = por %p51, %p52
      %s55 = sadd.s32 %s54, 1
      %p58 = scmp.eq.s32.totalorder %s20, 1
      %p59 = scmp.ne.s32.totalorder %s54, %s56
      %p60 = scmp.eq.s32.totalorder %s20, 0
      %p61 = por %p59, %p60
      %p62 = scmp.ne.s32.totalorder %s54, %s56
      %p63 = scmp.eq.s32.totalorder %s25, 1
      %p64 = por %p62, %p63
      %p65 = scmp.ne.s32.totalorder %s56, %s57
      %p66 = scmp.eq.s32.totalorder %s25, 0
      %p67 = por %p65, %p66
      %p68 = scmp.ne.s32.totalorder %s56, %s57
      %p69 = scmp.eq.s32.totalorder %s26, 1
      %p70 = por %p68, %p69
      %p72 = scmp.ne.s32.totalorder %s57, %s71
      %p73 = scmp.eq.s32.totalorder %s26, 0
      %p74 = por %p72, %p73
      %s75 = ssub.s32 %s20, %s27
      %p76 = scmp.eq.s32.totalorder %s75, 0
      %s78 = sadd.s32 %s77, 1
      %s79 = scalar_select %p76, %s77, %s78
      %p82 = pneg %p76
      %p83 = scmp.eq.s32.totalorder %s20, 1
      %p84 = por %p82, %p83
      %p85 = scmp.ne.s32.totalorder %s77, %s80
      %p86 = scmp.eq.s32.totalorder %s20, 0
      %p87 = por %p85, %p86
      %p88 = scmp.ne.s32.totalorder %s77, %s80
      %p89 = scmp.eq.s32.totalorder %s25, 1
      %p90 = por %p88, %p89
      %p91 = scmp.ne.s32.totalorder %s80, %s81
      %p92 = scmp.eq.s32.totalorder %s25, 0
      %p93 = por %p91, %p92
      %p94 = scmp.ne.s32.totalorder %s80, %s81
      %p95 = scmp.eq.s32.totalorder %s26, 1
      %p96 = por %p94, %p95
      %p98 = scmp.ne.s32.totalorder %s81, %s97
      %p99 = scmp.eq.s32.totalorder %s26, 0
      %p100 = por %p98, %p99
      %s101 = ssub.s32 %s20, %s27
      %p102 = scmp.eq.s32.totalorder %s101, 0
      %s104 = sadd.s32 %s103, 1
      %s105 = scalar_select %p102, %s103, %s104
      %p108 = pneg %p102
      %p109 = scmp.eq.s32.totalorder %s20, 1
      %p110 = por %p108, %p109
      %p111 = scmp.ne.s32.totalorder %s103, %s106
      %p112 = scmp.eq.s32.totalorder %s20, 0
      %p113 = por %p111, %p112
      %p114 = scmp.ne.s32.totalorder %s103, %s106
      %p115 = scmp.eq.s32.totalorder %s25, 1
      %p116 = por %p114, %p115
      %p117 = scmp.ne.s32.totalorder %s106, %s107
      %p118 = scmp.eq.s32.totalorder %s25, 0
      %p119 = por %p117, %p118
      %p120 = scmp.ne.s32.totalorder %s106, %s107
      %p121 = scmp.eq.s32.totalorder %s26, 1
      %p122 = por %p120, %p121
      %p124 = scmp.ne.s32.totalorder %s107, %s123
      %p125 = scmp.eq.s32.totalorder %s26, 0
      %p126 = por %p124, %p125
      %p127 = scmp.le.s32.totalorder 1, %s20
      %p128 = scmp.lt.s32.totalorder %s20, 3
      %p129 = pnand %p127, %p128
      %p130 = pneg %p129
      // Predicated region
      $region9: #{tpu_custom_call.1} parent=5 // pred_check
        _
      $region10: #{tpu_custom_call.1} parent=5 // pred_check_branch
        %132 = sbr.rel (%p129) target = $region12
      $region11: #{tpu_custom_call.1} parent=5 // pred_region
        %s133 = ssub.s32 %s20, 1
        // Predicated region
        $region13: #{tpu_custom_call.1} parent=11 // pred_check
          %p134 = pneg %p67
        $region14: #{tpu_custom_call.1} parent=11 // pred_check_branch
          %136 = sbr.rel (%p134) target = $region16
        $region15: #{tpu_custom_call.1} parent=11 // pred_region
          %s138 = ssub.s32 9216, 9216
          %139 = vsyncadd [#allocation7], %s138
          %s140 = sshll.u32 [#allocation6], 4
          %s141 = int_to_ptr.vmem [resolvable:$true] %s140
          %146 = dma.hbm_to_vmem [thread:$0]  %s1, 9216, %s141, [#allocation7], 64, 64, 4
        $region16: #{tpu_custom_call.1} parent=11 // pred_fallthru
          _
      $region12: #{tpu_custom_call.1} parent=5 // pred_fallthru
        _
      %p147 = scmp.lt.s32.totalorder %s20, 2
      // Predicated region
      $region17: #{tpu_custom_call.1} parent=5 // pred_check
        %p148 = pneg %p147
      $region18: #{tpu_custom_call.1} parent=5 // pred_check_branch
        %150 = sbr.rel (%p148) target = $region20
      $region19: #{tpu_custom_call.1} parent=5 // pred_region
        // Predicated region
        $region21: #{tpu_custom_call.1} parent=19 // pred_check
          %p151 = pneg %p40
        $region22: #{tpu_custom_call.1} parent=19 // pred_check_branch
          %153 = sbr.rel (%p151) target = $region24
        $region23: #{tpu_custom_call.1} parent=19 // pred_region
          %s154 = sand.u32 %s30, 1
          %s155 = scalar_lea.sflag [#allocation4], %s154
          %s156 = sand.u32 %s30, 1
          %s157 = smul.addr %s156, 128
          %s158 = scalar_lea.vmem [#allocation3], %s157
          %s160 = ssub.s32 2048, 2048
          %161 = vsyncadd %s155, %s160
          %s162 = smul.addr %s20, 32
          %s163 = smul.addr %s162, 64
          %s164 = scalar_lea.hbm %s0, %s163
          %s165 = sshll.u32 %s158, 4
          %s166 = int_to_ptr.vmem [resolvable:$true] %s165
          %171 = dma.hbm_to_vmem [thread:$0]  %s164, 2048, %s166, %s155, 64, 64, 4
        $region24: #{tpu_custom_call.1} parent=19 // pred_fallthru
          _
      $region20: #{tpu_custom_call.1} parent=5 // pred_fallthru
        _
      %p172 = scmp.le.s32.totalorder 1, %s20
      %p173 = scmp.lt.s32.totalorder %s20, 3
      %p174 = pnand %p172, %p173
      %p175 = pneg %p174
      // Predicated region
      $region25: #{tpu_custom_call.1} parent=5 // pred_check
        _
      $region26: #{tpu_custom_call.1} parent=5 // pred_check_branch
        %177 = sbr.rel (%p174) target = $region28
      $region27: #{tpu_custom_call.1} parent=5 // pred_region
        %s178 = ssub.s32 %s20, 1
        %s179 = sand.u32 %s33, 1
        %s180 = scalar_lea.sflag [#allocation4], %s179
        %s181 = sand.u32 %s33, 1
        %s182 = smul.addr %s181, 128
        %s183 = scalar_lea.vmem [#allocation3], %s182
        // Predicated region
        $region29: #{tpu_custom_call.1} parent=27 // pred_check
          %p184 = pneg %p46
        $region30: #{tpu_custom_call.1} parent=27 // pred_check_branch
          %186 = sbr.rel (%p184) target = $region32
        $region31: #{tpu_custom_call.1} parent=27 // pred_region
          %187 = dma.done %s180, 2048
        $region32: #{tpu_custom_call.1} parent=27 // pred_fallthru
          _
        // Predicated region
        $region33: #{tpu_custom_call.1} parent=27 // pred_check
          %p188 = pneg %p67
        $region34: #{tpu_custom_call.1} parent=27 // pred_check_branch
          %190 = sbr.rel (%p188) target = $region36
        $region35: #{tpu_custom_call.1} parent=27 // pred_region
          %191 = dma.done [#allocation7], 9216
        $region36: #{tpu_custom_call.1} parent=27 // pred_fallthru
          _
        %s192 = sand.u32 %s33, 1
        %s193 = scalar_lea.sflag [#allocation4], %s192
        %s194 = sand.u32 %s33, 1
        %s195 = smul.addr %s194, 128
        %s196 = scalar_lea.vmem [#allocation3], %s195
        %p197 = pneg %p46
        %p198 = pneg %p43
        %p199 = pneg %p67
        %p200 = pneg %p64
        %p201 = pneg %p93
        %p202 = pneg %p90
        %s203 = sand.u32 %s80, 1
        %s204 = scalar_lea.sflag [#allocation5], %s203
        %s205 = sand.u32 %s80, 1
        %s206 = smul.addr %s205, 128
        %s207 = scalar_lea.vmem [#allocation8], %s206
        %p208 = pneg %p119
        %p209 = pneg %p116
        %s210 = sand.u32 %s106, 1
        %s211 = scalar_lea.sflag [#allocation10], %s210
        %s212 = sand.u32 %s106, 1
        %s213 = smul.addr %s212, 2
        %s214 = scalar_lea.vmem [#allocation9], %s213
        %v216 = vld [vmem:[%s183] sm:$0xf]
        %v217 = vld [vmem:[%s183 + $0x4] sm:$0xf]
        %v218 = vld [vmem:[%s183 + $0x8] sm:$0xf]
        %v219 = vld [vmem:[%s183 + $0xc] sm:$0xf]
        %v220 = vld [vmem:[%s183 + $0x10] sm:$0xf]
        %v221 = vld [vmem:[%s183 + $0x14] sm:$0xf]
        %v222 = vld [vmem:[%s183 + $0x18] sm:$0xf]
        %v223 = vld [vmem:[%s183 + $0x1c] sm:$0xf]
        %v224 = vld [vmem:[%s183 + $0x20] sm:$0xf]
        %v225 = vld [vmem:[%s183 + $0x24] sm:$0xf]
        %v226 = vld [vmem:[%s183 + $0x28] sm:$0xf]
        %v227 = vld [vmem:[%s183 + $0x2c] sm:$0xf]
        %v228 = vld [vmem:[%s183 + $0x30] sm:$0xf]
        %v229 = vld [vmem:[%s183 + $0x34] sm:$0xf]
        %v230 = vld [vmem:[%s183 + $0x38] sm:$0xf]
        %v231 = vld [vmem:[%s183 + $0x3c] sm:$0xf]
        %v232 = vld [vmem:[%s183 + $0x40] sm:$0xf]
        %v233 = vld [vmem:[%s183 + $0x44] sm:$0xf]
        %v234 = vld [vmem:[%s183 + $0x48] sm:$0xf]
        %v235 = vld [vmem:[%s183 + $0x4c] sm:$0xf]
        %v236 = vld [vmem:[%s183 + $0x50] sm:$0xf]
        %v237 = vld [vmem:[%s183 + $0x54] sm:$0xf]
        %v238 = vld [vmem:[%s183 + $0x58] sm:$0xf]
        %v239 = vld [vmem:[%s183 + $0x5c] sm:$0xf]
        %v240 = vld [vmem:[%s183 + $0x60] sm:$0xf]
        %v241 = vld [vmem:[%s183 + $0x64] sm:$0xf]
        %v242 = vld [vmem:[%s183 + $0x68] sm:$0xf]
        %v243 = vld [vmem:[%s183 + $0x6c] sm:$0xf]
        %v244 = vld [vmem:[%s183 + $0x70] sm:$0xf]
        %v245 = vld [vmem:[%s183 + $0x74] sm:$0xf]
        %v246 = vld [vmem:[%s183 + $0x78] sm:$0xf]
        %v247 = vld [vmem:[%s183 + $0x7c] sm:$0xf]
        %248 = vst [vmem:[#allocation2] sm:$0xf] 0
        %249 = vst [vmem:[#allocation2 + $0x4] sm:$0xf] 0
        %250 = vst [vmem:[#allocation2 + $0x8] sm:$0x1] 0
        %251 = vst [vmem:[#allocation2 + $0xc] sm:$0xf] 0
        %252 = vst [vmem:[#allocation2 + $0x10] sm:$0xf] 0
        %253 = vst [vmem:[#allocation2 + $0x14] sm:$0x1] 0
        %254 = vst [vmem:[#allocation2 + $0x18] sm:$0xf] 0
        %255 = vst [vmem:[#allocation2 + $0x1c] sm:$0xf] 0
        %256 = vst [vmem:[#allocation2 + $0x20] sm:$0x1] 0
        %257 = vst [vmem:[#allocation2 + $0x24] sm:$0xf] 0
        %258 = vst [vmem:[#allocation2 + $0x28] sm:$0xf] 0
        %259 = vst [vmem:[#allocation2 + $0x2c] sm:$0x1] 0
        %260 = vst [vmem:[#allocation2 + $0x30] sm:$0xf] 0
        %261 = vst [vmem:[#allocation2 + $0x34] sm:$0xf] 0
        %262 = vst [vmem:[#allocation2 + $0x38] sm:$0x1] 0
        %263 = vst [vmem:[#allocation2 + $0x3c] sm:$0xf] 0
        %264 = vst [vmem:[#allocation2 + $0x40] sm:$0xf] 0
        %265 = vst [vmem:[#allocation2 + $0x44] sm:$0x1] 0
        %266 = vst [vmem:[#allocation2 + $0x48] sm:$0xf] 0
        %267 = vst [vmem:[#allocation2 + $0x4c] sm:$0xf] 0
        %268 = vst [vmem:[#allocation2 + $0x50] sm:$0x1] 0
        %269 = vst [vmem:[#allocation2 + $0x54] sm:$0xf] 0
        %270 = vst [vmem:[#allocation2 + $0x58] sm:$0xf] 0
        %271 = vst [vmem:[#allocation2 + $0x5c] sm:$0x1] 0
        %272 = vst [vmem:[#allocation2 + $0x60] sm:$0xf] 0
        %273 = vst [vmem:[#allocation2 + $0x64] sm:$0xf] 0
        %274 = vst [vmem:[#allocation2 + $0x68] sm:$0x1] 0
        %275 = vst [vmem:[#allocation2 + $0x6c] sm:$0xf] 0
        %276 = vst [vmem:[#allocation2 + $0x70] sm:$0xf] 0
        %277 = vst [vmem:[#allocation2 + $0x74] sm:$0x1] 0
        %278 = vst [vmem:[#allocation2 + $0x78] sm:$0xf] 0
        %279 = vst [vmem:[#allocation2 + $0x7c] sm:$0xf] 0
        %280 = vst [vmem:[#allocation2 + $0x80] sm:$0x1] 0
        %281 = vst [vmem:[#allocation2 + $0x84] sm:$0xf] 0
        %282 = vst [vmem:[#allocation2 + $0x88] sm:$0xf] 0
        %283 = vst [vmem:[#allocation2 + $0x8c] sm:$0x1] 0
        %284 = vst [vmem:[#allocation2 + $0x90] sm:$0xf] 0
        %285 = vst [vmem:[#allocation2 + $0x94] sm:$0xf] 0
        %286 = vst [vmem:[#allocation2 + $0x98] sm:$0x1] 0
        %287 = vst [vmem:[#allocation2 + $0x9c] sm:$0xf] 0
        %288 = vst [vmem:[#allocation2 + $0xa0] sm:$0xf] 0
        %289 = vst [vmem:[#allocation2 + $0xa4] sm:$0x1] 0
        %290 = vst [vmem:[#allocation2 + $0xa8] sm:$0xf] 0
        %291 = vst [vmem:[#allocation2 + $0xac] sm:$0xf] 0
        %292 = vst [vmem:[#allocation2 + $0xb0] sm:$0x1] 0
        %293 = vst [vmem:[#allocation2 + $0xb4] sm:$0xf] 0
        %294 = vst [vmem:[#allocation2 + $0xb8] sm:$0xf] 0
        %295 = vst [vmem:[#allocation2 + $0xbc] sm:$0x1] 0
        %296 = vst [vmem:[#allocation2 + $0xc0] sm:$0xf] 0
        %297 = vst [vmem:[#allocation2 + $0xc4] sm:$0xf] 0
        %298 = vst [vmem:[#allocation2 + $0xc8] sm:$0x1] 0
        %299 = vst [vmem:[#allocation2 + $0xcc] sm:$0xf] 0
        %300 = vst [vmem:[#allocation2 + $0xd0] sm:$0xf] 0
        %301 = vst [vmem:[#allocation2 + $0xd4] sm:$0x1] 0
        %vm302 = vsmask.f32 256
        %vm303 = vsmask.f32 4368
        %vm304 = vmor %vm302, %vm303
        %v306 = vshrl.u32 %v216, 16
        %v308 = vrot.slane %v306, 7
        %v309 = vshll.u32 %v216, 16
        %v311 = vor.u32 %v308, %v309
        %v312 = vrot.slane %v308, 4
        %v314 = vshrl.u32 %v217, 16
        %v316 = vrot.slane %v314, 7
        %v317 = vshll.u32 %v217, 16
        %v319 = vor.u32 %v316, %v317
        %v320 = vsel %vm304, %v312, %v319
        %v321 = vrot.slane %v316, 4
        %v323 = vshrl.u32 %v218, 16
        %v325 = vrot.slane %v323, 7
        %v326 = vshll.u32 %v218, 16
        %v328 = vor.u32 %v325, %v326
        %v329 = vrot.slane %v325, 4
        %v331 = vshrl.u32 %v219, 16
        %v333 = vrot.slane %v331, 7
        %v334 = vshll.u32 %v219, 16
        %v336 = vor.u32 %v333, %v334
        %v337 = vsel %vm304, %v329, %v336
        %v338 = vrot.slane %v333, 4
        %v340 = vshrl.u32 %v220, 16
        %v342 = vrot.slane %v340, 7
        %v343 = vshll.u32 %v220, 16
        %v345 = vor.u32 %v342, %v343
        %v346 = vrot.slane %v342, 4
        %v348 = vshrl.u32 %v221, 16
        %v350 = vrot.slane %v348, 7
        %v351 = vshll.u32 %v221, 16
        %v353 = vor.u32 %v350, %v351
        %v354 = vsel %vm304, %v346, %v353
        %v355 = vrot.slane %v350, 4
        %v357 = vshrl.u32 %v222, 16
        %v359 = vrot.slane %v357, 7
        %v360 = vshll.u32 %v222, 16
        %v362 = vor.u32 %v359, %v360
        %v363 = vrot.slane %v359, 4
        %v365 = vshrl.u32 %v223, 16
        %v367 = vrot.slane %v365, 7
        %v368 = vshll.u32 %v223, 16
        %v370 = vor.u32 %v367, %v368
        %v371 = vsel %vm304, %v363, %v370
        %v372 = vrot.slane %v367, 4
        %v374 = vshrl.u32 %v224, 16
        %v376 = vrot.slane %v374, 7
        %v377 = vshll.u32 %v224, 16
        %v379 = vor.u32 %v376, %v377
        %v380 = vrot.slane %v376, 4
        %v382 = vshrl.u32 %v225, 16
        %v384 = vrot.slane %v382, 7
        %v385 = vshll.u32 %v225, 16
        %v387 = vor.u32 %v384, %v385
        %v388 = vsel %vm304, %v380, %v387
        %v389 = vrot.slane %v384, 4
        %v391 = vshrl.u32 %v226, 16
        %v393 = vrot.slane %v391, 7
        %v394 = vshll.u32 %v226, 16
        %v396 = vor.u32 %v393, %v394
        %v397 = vrot.slane %v393, 4
        %v399 = vshrl.u32 %v227, 16
        %v401 = vrot.slane %v399, 7
        %v402 = vshll.u32 %v227, 16
        %v404 = vor.u32 %v401, %v402
        %v405 = vsel %vm304, %v397, %v404
        %v406 = vrot.slane %v401, 4
        %v408 = vshrl.u32 %v228, 16
        %v410 = vrot.slane %v408, 7
        %v411 = vshll.u32 %v228, 16
        %v413 = vor.u32 %v410, %v411
        %v414 = vrot.slane %v410, 4
        %v416 = vshrl.u32 %v229, 16
        %v418 = vrot.slane %v416, 7
        %v419 = vshll.u32 %v229, 16
        %v421 = vor.u32 %v418, %v419
        %v422 = vsel %vm304, %v414, %v421
        %v423 = vrot.slane %v418, 4
        %v425 = vshrl.u32 %v230, 16
        %v427 = vrot.slane %v425, 7
        %v428 = vshll.u32 %v230, 16
        %v430 = vor.u32 %v427, %v428
        %v431 = vrot.slane %v427, 4
        %v433 = vshrl.u32 %v231, 16
        %v435 = vrot.slane %v433, 7
        %v436 = vshll.u32 %v231, 16
        %v438 = vor.u32 %v435, %v436
        %v439 = vsel %vm304, %v431, %v438
        %v440 = vrot.slane %v435, 4
        %v442 = vshrl.u32 %v232, 16
        %v444 = vrot.slane %v442, 7
        %v445 = vshll.u32 %v232, 16
        %v447 = vor.u32 %v444, %v445
        %v448 = vrot.slane %v444, 4
        %v450 = vshrl.u32 %v233, 16
        %v452 = vrot.slane %v450, 7
        %v453 = vshll.u32 %v233, 16
        %v455 = vor.u32 %v452, %v453
        %v456 = vsel %vm304, %v448, %v455
        %v457 = vrot.slane %v452, 4
        %v459 = vshrl.u32 %v234, 16
        %v461 = vrot.slane %v459, 7
        %v462 = vshll.u32 %v234, 16
        %v464 = vor.u32 %v461, %v462
        %v465 = vrot.slane %v461, 4
        %v467 = vshrl.u32 %v235, 16
        %v469 = vrot.slane %v467, 7
        %v470 = vshll.u32 %v235, 16
        %v472 = vor.u32 %v469, %v470
        %v473 = vsel %vm304, %v465, %v472
        %v474 = vrot.slane %v469, 4
        %v476 = vshrl.u32 %v236, 16
        %v478 = vrot.slane %v476, 7
        %v479 = vshll.u32 %v236, 16
        %v481 = vor.u32 %v478, %v479
        %v482 = vrot.slane %v478, 4
        %v484 = vshrl.u32 %v237, 16
        %v486 = vrot.slane %v484, 7
        %v487 = vshll.u32 %v237, 16
        %v489 = vor.u32 %v486, %v487
        %v490 = vsel %vm304, %v482, %v489
        %v491 = vrot.slane %v486, 4
        %v493 = vshrl.u32 %v238, 16
        %v495 = vrot.slane %v493, 7
        %v496 = vshll.u32 %v238, 16
        %v498 = vor.u32 %v495, %v496
        %v499 = vrot.slane %v495, 4
        %v501 = vshrl.u32 %v239, 16
        %v503 = vrot.slane %v501, 7
        %v504 = vshll.u32 %v239, 16
        %v506 = vor.u32 %v503, %v504
        %v507 = vsel %vm304, %v499, %v506
        %v508 = vrot.slane %v503, 4
        %v510 = vshrl.u32 %v240, 16
        %v512 = vrot.slane %v510, 7
        %v513 = vshll.u32 %v240, 16
        %v515 = vor.u32 %v512, %v513
        %v516 = vrot.slane %v512, 4
        %v518 = vshrl.u32 %v241, 16
        %v520 = vrot.slane %v518, 7
        %v521 = vshll.u32 %v241, 16
        %v523 = vor.u32 %v520, %v521
        %v524 = vsel %vm304, %v516, %v523
        %v525 = vrot.slane %v520, 4
        %v527 = vshrl.u32 %v242, 16
        %v529 = vrot.slane %v527, 7
        %v530 = vshll.u32 %v242, 16
        %v532 = vor.u32 %v529, %v530
        %v533 = vrot.slane %v529, 4
        %v535 = vshrl.u32 %v243, 16
        %v537 = vrot.slane %v535, 7
        %v538 = vshll.u32 %v243, 16
        %v540 = vor.u32 %v537, %v538
        %v541 = vsel %vm304, %v533, %v540
        %v542 = vrot.slane %v537, 4
        %v544 = vshrl.u32 %v244, 16
        %v546 = vrot.slane %v544, 7
        %v547 = vshll.u32 %v244, 16
        %v549 = vor.u32 %v546, %v547
        %v550 = vrot.slane %v546, 4
        %v552 = vshrl.u32 %v245, 16
        %v554 = vrot.slane %v552, 7
        %v555 = vshll.u32 %v245, 16
        %v557 = vor.u32 %v554, %v555
        %v558 = vsel %vm304, %v550, %v557
        %v559 = vrot.slane %v554, 4
        %v561 = vshrl.u32 %v246, 16
        %v563 = vrot.slane %v561, 7
        %v564 = vshll.u32 %v246, 16
        %v566 = vor.u32 %v563, %v564
        %v567 = vrot.slane %v563, 4
        %v569 = vshrl.u32 %v247, 16
        %v571 = vrot.slane %v569, 7
        %v572 = vshll.u32 %v247, 16
        %v574 = vor.u32 %v571, %v572
        %v575 = vsel %vm304, %v567, %v574
        %v576 = vrot.slane %v571, 4
        %s625 = scalar_lea.vmem [#allocation2], 12
        %vm626 = vcmask 1043456
        %vm627 = vsmask.f32 7938
        %vm628 = vmand %vm626, %vm627
        %v629 = vld [vmem:[%s625] sm:$0xf]
        %v630 = vsel %vm628, %v311, %v629
        %631 = vst [vmem:[%s625] sm:$0xf] %v630
        %632 = vst [vmem:[%s625 + $0x4] sm:$0xf] %v320
        %vm633 = vcmask 1040384
        %vm634 = vmand %vm633, %vm302
        %v635 = vld [vmem:[%s625 + $0x8] sm:$0x1]
        %v636 = vsel %vm634, %v321, %v635
        %637 = vst [vmem:[%s625 + $0x8] sm:$0x1] %v636
        %v638 = vld [vmem:[%s625 + $0xc] sm:$0xf]
        %v639 = vsel %vm628, %v328, %v638
        %640 = vst [vmem:[%s625 + $0xc] sm:$0xf] %v639
        %641 = vst [vmem:[%s625 + $0x10] sm:$0xf] %v337
        %v642 = vld [vmem:[%s625 + $0x14] sm:$0x1]
        %v643 = vsel %vm634, %v338, %v642
        %644 = vst [vmem:[%s625 + $0x14] sm:$0x1] %v643
        %v645 = vld [vmem:[%s625 + $0x18] sm:$0xf]
        %v646 = vsel %vm628, %v345, %v645
        %647 = vst [vmem:[%s625 + $0x18] sm:$0xf] %v646
        %648 = vst [vmem:[%s625 + $0x1c] sm:$0xf] %v354
        %v649 = vld [vmem:[%s625 + $0x20] sm:$0x1]
        %v650 = vsel %vm634, %v355, %v649
        %651 = vst [vmem:[%s625 + $0x20] sm:$0x1] %v650
        %v652 = vld [vmem:[%s625 + $0x24] sm:$0xf]
        %v653 = vsel %vm628, %v362, %v652
        %654 = vst [vmem:[%s625 + $0x24] sm:$0xf] %v653
        %655 = vst [vmem:[%s625 + $0x28] sm:$0xf] %v371
        %v656 = vld [vmem:[%s625 + $0x2c] sm:$0x1]
        %v657 = vsel %vm634, %v372, %v656
        %658 = vst [vmem:[%s625 + $0x2c] sm:$0x1] %v657
        %v659 = vld [vmem:[%s625 + $0x30] sm:$0xf]
        %v660 = vsel %vm628, %v379, %v659
        %661 = vst [vmem:[%s625 + $0x30] sm:$0xf] %v660
        %662 = vst [vmem:[%s625 + $0x34] sm:$0xf] %v388
        %v663 = vld [vmem:[%s625 + $0x38] sm:$0x1]
        %v664 = vsel %vm634, %v389, %v663
        %665 = vst [vmem:[%s625 + $0x38] sm:$0x1] %v664
        %v666 = vld [vmem:[%s625 + $0x3c] sm:$0xf]
        %v667 = vsel %vm628, %v396, %v666
        %668 = vst [vmem:[%s625 + $0x3c] sm:$0xf] %v667
        %669 = vst [vmem:[%s625 + $0x40] sm:$0xf] %v405
        %v670 = vld [vmem:[%s625 + $0x44] sm:$0x1]
        %v671 = vsel %vm634, %v406, %v670
        %672 = vst [vmem:[%s625 + $0x44] sm:$0x1] %v671
        %v673 = vld [vmem:[%s625 + $0x48] sm:$0xf]
        %v674 = vsel %vm628, %v413, %v673
        %675 = vst [vmem:[%s625 + $0x48] sm:$0xf] %v674
        %676 = vst [vmem:[%s625 + $0x4c] sm:$0xf] %v422
        %v677 = vld [vmem:[%s625 + $0x50] sm:$0x1]
        %v678 = vsel %vm634, %v423, %v677
        %679 = vst [vmem:[%s625 + $0x50] sm:$0x1] %v678
        %v680 = vld [vmem:[%s625 + $0x54] sm:$0xf]
        %v681 = vsel %vm628, %v430, %v680
        %682 = vst [vmem:[%s625 + $0x54] sm:$0xf] %v681
        %683 = vst [vmem:[%s625 + $0x58] sm:$0xf] %v439
        %v684 = vld [vmem:[%s625 + $0x5c] sm:$0x1]
        %v685 = vsel %vm634, %v440, %v684
        %686 = vst [vmem:[%s625 + $0x5c] sm:$0x1] %v685
        %v687 = vld [vmem:[%s625 + $0x60] sm:$0xf]
        %v688 = vsel %vm628, %v447, %v687
        %689 = vst [vmem:[%s625 + $0x60] sm:$0xf] %v688
        %690 = vst [vmem:[%s625 + $0x64] sm:$0xf] %v456
        %v691 = vld [vmem:[%s625 + $0x68] sm:$0x1]
        %v692 = vsel %vm634, %v457, %v691
        %693 = vst [vmem:[%s625 + $0x68] sm:$0x1] %v692
        %v694 = vld [vmem:[%s625 + $0x6c] sm:$0xf]
        %v695 = vsel %vm628, %v464, %v694
        %696 = vst [vmem:[%s625 + $0x6c] sm:$0xf] %v695
        %697 = vst [vmem:[%s625 + $0x70] sm:$0xf] %v473
        %v698 = vld [vmem:[%s625 + $0x74] sm:$0x1]
        %v699 = vsel %vm634, %v474, %v698
        %700 = vst [vmem:[%s625 + $0x74] sm:$0x1] %v699
        %v701 = vld [vmem:[%s625 + $0x78] sm:$0xf]
        %v702 = vsel %vm628, %v481, %v701
        %703 = vst [vmem:[%s625 + $0x78] sm:$0xf] %v702
        %704 = vst [vmem:[%s625 + $0x7c] sm:$0xf] %v490
        %v705 = vld [vmem:[%s625 + $0x80] sm:$0x1]
        %v706 = vsel %vm634, %v491, %v705
        %707 = vst [vmem:[%s625 + $0x80] sm:$0x1] %v706
        %v708 = vld [vmem:[%s625 + $0x84] sm:$0xf]
        %v709 = vsel %vm628, %v498, %v708
        %710 = vst [vmem:[%s625 + $0x84] sm:$0xf] %v709
        %711 = vst [vmem:[%s625 + $0x88] sm:$0xf] %v507
        %v712 = vld [vmem:[%s625 + $0x8c] sm:$0x1]
        %v713 = vsel %vm634, %v508, %v712
        %714 = vst [vmem:[%s625 + $0x8c] sm:$0x1] %v713
        %v715 = vld [vmem:[%s625 + $0x90] sm:$0xf]
        %v716 = vsel %vm628, %v515, %v715
        %717 = vst [vmem:[%s625 + $0x90] sm:$0xf] %v716
        %718 = vst [vmem:[%s625 + $0x94] sm:$0xf] %v524
        %v719 = vld [vmem:[%s625 + $0x98] sm:$0x1]
        %v720 = vsel %vm634, %v525, %v719
        %721 = vst [vmem:[%s625 + $0x98] sm:$0x1] %v720
        %v722 = vld [vmem:[%s625 + $0x9c] sm:$0xf]
        %v723 = vsel %vm628, %v532, %v722
        %724 = vst [vmem:[%s625 + $0x9c] sm:$0xf] %v723
        %725 = vst [vmem:[%s625 + $0xa0] sm:$0xf] %v541
        %v726 = vld [vmem:[%s625 + $0xa4] sm:$0x1]
        %v727 = vsel %vm634, %v542, %v726
        %728 = vst [vmem:[%s625 + $0xa4] sm:$0x1] %v727
        %v729 = vld [vmem:[%s625 + $0xa8] sm:$0xf]
        %v730 = vsel %vm628, %v549, %v729
        %731 = vst [vmem:[%s625 + $0xa8] sm:$0xf] %v730
        %732 = vst [vmem:[%s625 + $0xac] sm:$0xf] %v558
        %v733 = vld [vmem:[%s625 + $0xb0] sm:$0x1]
        %v734 = vsel %vm634, %v559, %v733
        %735 = vst [vmem:[%s625 + $0xb0] sm:$0x1] %v734
        %v736 = vld [vmem:[%s625 + $0xb4] sm:$0xf]
        %v737 = vsel %vm628, %v566, %v736
        %738 = vst [vmem:[%s625 + $0xb4] sm:$0xf] %v737
        %739 = vst [vmem:[%s625 + $0xb8] sm:$0xf] %v575
        %v740 = vld [vmem:[%s625 + $0xbc] sm:$0x1]
        %v741 = vsel %vm634, %v576, %v740
        %742 = vst [vmem:[%s625 + $0xbc] sm:$0x1] %v741
        %v743 = vld [vmem:[#allocation2] sm:$0xf]
        %v744 = vld [vmem:[#allocation2 + $0x4] sm:$0xf]
        %v745 = vld [vmem:[#allocation2 + $0xc] sm:$0xf]
        %v746 = vld [vmem:[#allocation2 + $0x10] sm:$0xf]
        %v747 = vld [vmem:[#allocation2 + $0x18] sm:$0xf]
        %v748 = vld [vmem:[#allocation2 + $0x1c] sm:$0xf]
        %v749 = vld [vmem:[#allocation2 + $0x24] sm:$0xf]
        %v750 = vld [vmem:[#allocation2 + $0x28] sm:$0xf]
        %v751 = vld [vmem:[#allocation2 + $0x30] sm:$0xf]
        %v752 = vld [vmem:[#allocation2 + $0x34] sm:$0xf]
        %v753 = vld [vmem:[#allocation2 + $0x3c] sm:$0xf]
        %v754 = vld [vmem:[#allocation2 + $0x40] sm:$0xf]
        %v755 = vld [vmem:[#allocation2 + $0x48] sm:$0xf]
        %v756 = vld [vmem:[#allocation2 + $0x4c] sm:$0xf]
        %v757 = vld [vmem:[#allocation2 + $0x54] sm:$0xf]
        %v758 = vld [vmem:[#allocation2 + $0x58] sm:$0xf]
        %v759 = vld [vmem:[#allocation2 + $0x60] sm:$0xf]
        %v760 = vld [vmem:[#allocation2 + $0x64] sm:$0xf]
        %v761 = vld [vmem:[#allocation2 + $0x6c] sm:$0xf]
        %v762 = vld [vmem:[#allocation2 + $0x70] sm:$0xf]
        %v763 = vld [vmem:[#allocation2 + $0x78] sm:$0xf]
        %v764 = vld [vmem:[#allocation2 + $0x7c] sm:$0xf]
        %v765 = vld [vmem:[#allocation2 + $0x84] sm:$0xf]
        %v766 = vld [vmem:[#allocation2 + $0x88] sm:$0xf]
        %v767 = vld [vmem:[#allocation2 + $0x90] sm:$0xf]
        %v768 = vld [vmem:[#allocation2 + $0x94] sm:$0xf]
        %v769 = vld [vmem:[#allocation2 + $0x9c] sm:$0xf]
        %v770 = vld [vmem:[#allocation2 + $0xa0] sm:$0xf]
        %v771 = vld [vmem:[#allocation2 + $0xa8] sm:$0xf]
        %v772 = vld [vmem:[#allocation2 + $0xac] sm:$0xf]
        %v773 = vld [vmem:[#allocation2 + $0xb4] sm:$0xf]
        %v774 = vld [vmem:[#allocation2 + $0xb8] sm:$0xf]
        %v775 = vld [vmem:[#allocation2 + $0x8] sm:$0x1]
        %v776 = vld [vmem:[#allocation2 + $0x14] sm:$0x1]
        %v777 = vld [vmem:[#allocation2 + $0x20] sm:$0x1]
        %v778 = vld [vmem:[#allocation2 + $0x2c] sm:$0x1]
        %v779 = vld [vmem:[#allocation2 + $0x38] sm:$0x1]
        %v780 = vld [vmem:[#allocation2 + $0x44] sm:$0x1]
        %v781 = vld [vmem:[#allocation2 + $0x50] sm:$0x1]
        %v782 = vld [vmem:[#allocation2 + $0x5c] sm:$0x1]
        %v783 = vld [vmem:[#allocation2 + $0x68] sm:$0x1]
        %v784 = vld [vmem:[#allocation2 + $0x74] sm:$0x1]
        %v785 = vld [vmem:[#allocation2 + $0x80] sm:$0x1]
        %v786 = vld [vmem:[#allocation2 + $0x8c] sm:$0x1]
        %v787 = vld [vmem:[#allocation2 + $0x98] sm:$0x1]
        %v788 = vld [vmem:[#allocation2 + $0xa4] sm:$0x1]
        %v789 = vld [vmem:[#allocation2 + $0xb0] sm:$0x1]
        %v790 = vld [vmem:[#allocation2 + $0xbc] sm:$0x1]
        %vm791 = vsmask.f32 3328
        %vm792 = vsmask.f32 7440
        %vm793 = vmor %vm791, %vm792
        %v795 = vshrl.u32 %v743, 16
        %v797 = vrot.slane %v795, 4
        %v798 = vshll.u32 %v743, 16
        %v800 = vrot.slane %v798, 5
        %v801 = vor.u32 %v797, %v800
        %v802 = vrot.slane %v801, 4
        %v804 = vshll.u32 %v744, 16
        %v806 = vrot.slane %v804, 5
        %v807 = vsel %vm793, %v802, %v806
        %v808 = vshrl.u32 %v744, 16
        %v810 = vrot.slane %v808, 4
        %v811 = vor.u32 %v810, %v806
        %v812 = vrot.slane %v811, 4
        %v814 = vshll.u32 %v775, 16
        %v816 = vrot.slane %v814, 5
        %v817 = vsel %vm793, %v812, %v816
        %v819 = vshrl.u32 %v745, 16
        %v821 = vrot.slane %v819, 4
        %v822 = vshll.u32 %v745, 16
        %v824 = vrot.slane %v822, 5
        %v825 = vor.u32 %v821, %v824
        %v826 = vrot.slane %v825, 4
        %v828 = vshll.u32 %v746, 16
        %v830 = vrot.slane %v828, 5
        %v831 = vsel %vm793, %v826, %v830
        %v832 = vshrl.u32 %v746, 16
        %v834 = vrot.slane %v832, 4
        %v835 = vor.u32 %v834, %v830
        %v836 = vrot.slane %v835, 4
        %v838 = vshll.u32 %v776, 16
        %v840 = vrot.slane %v838, 5
        %v841 = vsel %vm793, %v836, %v840
        %v843 = vshrl.u32 %v747, 16
        %v845 = vrot.slane %v843, 4
        %v846 = vshll.u32 %v747, 16
        %v848 = vrot.slane %v846, 5
        %v849 = vor.u32 %v845, %v848
        %v850 = vrot.slane %v849, 4
        %v852 = vshll.u32 %v748, 16
        %v854 = vrot.slane %v852, 5
        %v855 = vsel %vm793, %v850, %v854
        %v856 = vshrl.u32 %v748, 16
        %v858 = vrot.slane %v856, 4
        %v859 = vor.u32 %v858, %v854
        %v860 = vrot.slane %v859, 4
        %v862 = vshll.u32 %v777, 16
        %v864 = vrot.slane %v862, 5
        %v865 = vsel %vm793, %v860, %v864
        %v867 = vshrl.u32 %v749, 16
        %v869 = vrot.slane %v867, 4
        %v870 = vshll.u32 %v749, 16
        %v872 = vrot.slane %v870, 5
        %v873 = vor.u32 %v869, %v872
        %v874 = vrot.slane %v873, 4
        %v876 = vshll.u32 %v750, 16
        %v878 = vrot.slane %v876, 5
        %v879 = vsel %vm793, %v874, %v878
        %v880 = vshrl.u32 %v750, 16
        %v882 = vrot.slane %v880, 4
        %v883 = vor.u32 %v882, %v878
        %v884 = vrot.slane %v883, 4
        %v886 = vshll.u32 %v778, 16
        %v888 = vrot.slane %v886, 5
        %v889 = vsel %vm793, %v884, %v888
        %v891 = vshrl.u32 %v751, 16
        %v893 = vrot.slane %v891, 4
        %v894 = vshll.u32 %v751, 16
        %v896 = vrot.slane %v894, 5
        %v897 = vor.u32 %v893, %v896
        %v898 = vrot.slane %v897, 4
        %v900 = vshll.u32 %v752, 16
        %v902 = vrot.slane %v900, 5
        %v903 = vsel %vm793, %v898, %v902
        %v904 = vshrl.u32 %v752, 16
        %v906 = vrot.slane %v904, 4
        %v907 = vor.u32 %v906, %v902
        %v908 = vrot.slane %v907, 4
        %v910 = vshll.u32 %v779, 16
        %v912 = vrot.slane %v910, 5
        %v913 = vsel %vm793, %v908, %v912
        %v915 = vshrl.u32 %v753, 16
        %v917 = vrot.slane %v915, 4
        %v918 = vshll.u32 %v753, 16
        %v920 = vrot.slane %v918, 5
        %v921 = vor.u32 %v917, %v920
        %v922 = vrot.slane %v921, 4
        %v924 = vshll.u32 %v754, 16
        %v926 = vrot.slane %v924, 5
        %v927 = vsel %vm793, %v922, %v926
        %v928 = vshrl.u32 %v754, 16
        %v930 = vrot.slane %v928, 4
        %v931 = vor.u32 %v930, %v926
        %v932 = vrot.slane %v931, 4
        %v934 = vshll.u32 %v780, 16
        %v936 = vrot.slane %v934, 5
        %v937 = vsel %vm793, %v932, %v936
        %v939 = vshrl.u32 %v755, 16
        %v941 = vrot.slane %v939, 4
        %v942 = vshll.u32 %v755, 16
        %v944 = vrot.slane %v942, 5
        %v945 = vor.u32 %v941, %v944
        %v946 = vrot.slane %v945, 4
        %v948 = vshll.u32 %v756, 16
        %v950 = vrot.slane %v948, 5
        %v951 = vsel %vm793, %v946, %v950
        %v952 = vshrl.u32 %v756, 16
        %v954 = vrot.slane %v952, 4
        %v955 = vor.u32 %v954, %v950
        %v956 = vrot.slane %v955, 4
        %v958 = vshll.u32 %v781, 16
        %v960 = vrot.slane %v958, 5
        %v961 = vsel %vm793, %v956, %v960
        %v963 = vshrl.u32 %v757, 16
        %v965 = vrot.slane %v963, 4
        %v966 = vshll.u32 %v757, 16
        %v968 = vrot.slane %v966, 5
        %v969 = vor.u32 %v965, %v968
        %v970 = vrot.slane %v969, 4
        %v972 = vshll.u32 %v758, 16
        %v974 = vrot.slane %v972, 5
        %v975 = vsel %vm793, %v970, %v974
        %v976 = vshrl.u32 %v758, 16
        %v978 = vrot.slane %v976, 4
        %v979 = vor.u32 %v978, %v974
        %v980 = vrot.slane %v979, 4
        %v982 = vshll.u32 %v782, 16
        %v984 = vrot.slane %v982, 5
        %v985 = vsel %vm793, %v980, %v984
        %v987 = vshrl.u32 %v759, 16
        %v989 = vrot.slane %v987, 4
        %v990 = vshll.u32 %v759, 16
        %v992 = vrot.slane %v990, 5
        %v993 = vor.u32 %v989, %v992
        %v994 = vrot.slane %v993, 4
        %v996 = vshll.u32 %v760, 16
        %v998 = vrot.slane %v996, 5
        %v999 = vsel %vm793, %v994, %v998
        %v1000 = vshrl.u32 %v760, 16
        %v1002 = vrot.slane %v1000, 4
        %v1003 = vor.u32 %v1002, %v998
        %v1004 = vrot.slane %v1003, 4
        %v1006 = vshll.u32 %v783, 16
        %v1008 = vrot.slane %v1006, 5
        %v1009 = vsel %vm793, %v1004, %v1008
        %v1011 = vshrl.u32 %v761, 16
        %v1013 = vrot.slane %v1011, 4
        %v1014 = vshll.u32 %v761, 16
        %v1016 = vrot.slane %v1014, 5
        %v1017 = vor.u32 %v1013, %v1016
        %v1018 = vrot.slane %v1017, 4
        %v1020 = vshll.u32 %v762, 16
        %v1022 = vrot.slane %v1020, 5
        %v1023 = vsel %vm793, %v1018, %v1022
        %v1024 = vshrl.u32 %v762, 16
        %v1026 = vrot.slane %v1024, 4
        %v1027 = vor.u32 %v1026, %v1022
        %v1028 = vrot.slane %v1027, 4
        %v1030 = vshll.u32 %v784, 16
        %v1032 = vrot.slane %v1030, 5
        %v1033 = vsel %vm793, %v1028, %v1032
        %v1035 = vshrl.u32 %v763, 16
        %v1037 = vrot.slane %v1035, 4
        %v1038 = vshll.u32 %v763, 16
        %v1040 = vrot.slane %v1038, 5
        %v1041 = vor.u32 %v1037, %v1040
        %v1042 = vrot.slane %v1041, 4
        %v1044 = vshll.u32 %v764, 16
        %v1046 = vrot.slane %v1044, 5
        %v1047 = vsel %vm793, %v1042, %v1046
        %v1048 = vshrl.u32 %v764, 16
        %v1050 = vrot.slane %v1048, 4
        %v1051 = vor.u32 %v1050, %v1046
        %v1052 = vrot.slane %v1051, 4
        %v1054 = vshll.u32 %v785, 16
        %v1056 = vrot.slane %v1054, 5
        %v1057 = vsel %vm793, %v1052, %v1056
        %v1059 = vshrl.u32 %v765, 16
        %v1061 = vrot.slane %v1059, 4
        %v1062 = vshll.u32 %v765, 16
        %v1064 = vrot.slane %v1062, 5
        %v1065 = vor.u32 %v1061, %v1064
        %v1066 = vrot.slane %v1065, 4
        %v1068 = vshll.u32 %v766, 16
        %v1070 = vrot.slane %v1068, 5
        %v1071 = vsel %vm793, %v1066, %v1070
        %v1072 = vshrl.u32 %v766, 16
        %v1074 = vrot.slane %v1072, 4
        %v1075 = vor.u32 %v1074, %v1070
        %v1076 = vrot.slane %v1075, 4
        %v1078 = vshll.u32 %v786, 16
        %v1080 = vrot.slane %v1078, 5
        %v1081 = vsel %vm793, %v1076, %v1080
        %v1083 = vshrl.u32 %v767, 16
        %v1085 = vrot.slane %v1083, 4
        %v1086 = vshll.u32 %v767, 16
        %v1088 = vrot.slane %v1086, 5
        %v1089 = vor.u32 %v1085, %v1088
        %v1090 = vrot.slane %v1089, 4
        %v1092 = vshll.u32 %v768, 16
        %v1094 = vrot.slane %v1092, 5
        %v1095 = vsel %vm793, %v1090, %v1094
        %v1096 = vshrl.u32 %v768, 16
        %v1098 = vrot.slane %v1096, 4
        %v1099 = vor.u32 %v1098, %v1094
        %v1100 = vrot.slane %v1099, 4
        %v1102 = vshll.u32 %v787, 16
        %v1104 = vrot.slane %v1102, 5
        %v1105 = vsel %vm793, %v1100, %v1104
        %v1107 = vshrl.u32 %v769, 16
        %v1109 = vrot.slane %v1107, 4
        %v1110 = vshll.u32 %v769, 16
        %v1112 = vrot.slane %v1110, 5
        %v1113 = vor.u32 %v1109, %v1112
        %v1114 = vrot.slane %v1113, 4
        %v1116 = vshll.u32 %v770, 16
        %v1118 = vrot.slane %v1116, 5
        %v1119 = vsel %vm793, %v1114, %v1118
        %v1120 = vshrl.u32 %v770, 16
        %v1122 = vrot.slane %v1120, 4
        %v1123 = vor.u32 %v1122, %v1118
        %v1124 = vrot.slane %v1123, 4
        %v1126 = vshll.u32 %v788, 16
        %v1128 = vrot.slane %v1126, 5
        %v1129 = vsel %vm793, %v1124, %v1128
        %v1131 = vshrl.u32 %v771, 16
        %v1133 = vrot.slane %v1131, 4
        %v1134 = vshll.u32 %v771, 16
        %v1136 = vrot.slane %v1134, 5
        %v1137 = vor.u32 %v1133, %v1136
        %v1138 = vrot.slane %v1137, 4
        %v1140 = vshll.u32 %v772, 16
        %v1142 = vrot.slane %v1140, 5
        %v1143 = vsel %vm793, %v1138, %v1142
        %v1144 = vshrl.u32 %v772, 16
        %v1146 = vrot.slane %v1144, 4
        %v1147 = vor.u32 %v1146, %v1142
        %v1148 = vrot.slane %v1147, 4
        %v1150 = vshll.u32 %v789, 16
        %v1152 = vrot.slane %v1150, 5
        %v1153 = vsel %vm793, %v1148, %v1152
        %v1155 = vshrl.u32 %v773, 16
        %v1157 = vrot.slane %v1155, 4
        %v1158 = vshll.u32 %v773, 16
        %v1160 = vrot.slane %v1158, 5
        %v1161 = vor.u32 %v1157, %v1160
        %v1162 = vrot.slane %v1161, 4
        %v1164 = vshll.u32 %v774, 16
        %v1166 = vrot.slane %v1164, 5
        %v1167 = vsel %vm793, %v1162, %v1166
        %v1168 = vshrl.u32 %v774, 16
        %v1170 = vrot.slane %v1168, 4
        %v1171 = vor.u32 %v1170, %v1166
        %v1172 = vrot.slane %v1171, 4
        %v1174 = vshll.u32 %v790, 16
        %v1176 = vrot.slane %v1174, 5
        %v1177 = vsel %vm793, %v1172, %v1176
        %v1178 = vld [vmem:[#allocation2] sm:$0xe]
        %v1179 = vld [vmem:[#allocation2 + $0xc] sm:$0xe]
        %v1180 = vld [vmem:[#allocation2 + $0x18] sm:$0xe]
        %v1181 = vld [vmem:[#allocation2 + $0x24] sm:$0xe]
        %v1182 = vld [vmem:[#allocation2 + $0x30] sm:$0xe]
        %v1183 = vld [vmem:[#allocation2 + $0x3c] sm:$0xe]
        %v1184 = vld [vmem:[#allocation2 + $0x48] sm:$0xe]
        %v1185 = vld [vmem:[#allocation2 + $0x54] sm:$0xe]
        %v1186 = vld [vmem:[#allocation2 + $0x60] sm:$0xe]
        %v1187 = vld [vmem:[#allocation2 + $0x6c] sm:$0xe]
        %v1188 = vld [vmem:[#allocation2 + $0x78] sm:$0xe]
        %v1189 = vld [vmem:[#allocation2 + $0x84] sm:$0xe]
        %v1190 = vld [vmem:[#allocation2 + $0x90] sm:$0xe]
        %v1191 = vld [vmem:[#allocation2 + $0x9c] sm:$0xe]
        %v1192 = vld [vmem:[#allocation2 + $0xa8] sm:$0xe]
        %v1193 = vld [vmem:[#allocation2 + $0xb4] sm:$0xe]
        %vm1242 = vcmask 1042432
        %vm1243 = vcmask 1046532
        %vm1244 = vmor %vm1242, %vm1243
        %v1245 = vrot.slane %v1178, 5
        %v1246 = vrot.slane %v1245, 4
        %v1247 = vrot.slane %v744, 5
        %v1248 = vsel %vm1244, %v1246, %v1247
        %v1249 = vrot.slane %v1247, 4
        %v1250 = vrot.slane %v775, 5
        %v1251 = vsel %vm1244, %v1249, %v1250
        %v1252 = vrot.slane %v1179, 5
        %v1253 = vrot.slane %v1252, 4
        %v1254 = vrot.slane %v746, 5
        %v1255 = vsel %vm1244, %v1253, %v1254
        %v1256 = vrot.slane %v1254, 4
        %v1257 = vrot.slane %v776, 5
        %v1258 = vsel %vm1244, %v1256, %v1257
        %v1259 = vrot.slane %v1180, 5
        %v1260 = vrot.slane %v1259, 4
        %v1261 = vrot.slane %v748, 5
        %v1262 = vsel %vm1244, %v1260, %v1261
        %v1263 = vrot.slane %v1261, 4
        %v1264 = vrot.slane %v777, 5
        %v1265 = vsel %vm1244, %v1263, %v1264
        %v1266 = vrot.slane %v1181, 5
        %v1267 = vrot.slane %v1266, 4
        %v1268 = vrot.slane %v750, 5
        %v1269 = vsel %vm1244, %v1267, %v1268
        %v1270 = vrot.slane %v1268, 4
        %v1271 = vrot.slane %v778, 5
        %v1272 = vsel %vm1244, %v1270, %v1271
        %v1273 = vrot.slane %v1182, 5
        %v1274 = vrot.slane %v1273, 4
        %v1275 = vrot.slane %v752, 5
        %v1276 = vsel %vm1244, %v1274, %v1275
        %v1277 = vrot.slane %v1275, 4
        %v1278 = vrot.slane %v779, 5
        %v1279 = vsel %vm1244, %v1277, %v1278
        %v1280 = vrot.slane %v1183, 5
        %v1281 = vrot.slane %v1280, 4
        %v1282 = vrot.slane %v754, 5
        %v1283 = vsel %vm1244, %v1281, %v1282
        %v1284 = vrot.slane %v1282, 4
        %v1285 = vrot.slane %v780, 5
        %v1286 = vsel %vm1244, %v1284, %v1285
        %v1287 = vrot.slane %v1184, 5
        %v1288 = vrot.slane %v1287, 4
        %v1289 = vrot.slane %v756, 5
        %v1290 = vsel %vm1244, %v1288, %v1289
        %v1291 = vrot.slane %v1289, 4
        %v1292 = vrot.slane %v781, 5
        %v1293 = vsel %vm1244, %v1291, %v1292
        %v1294 = vrot.slane %v1185, 5
        %v1295 = vrot.slane %v1294, 4
        %v1296 = vrot.slane %v758, 5
        %v1297 = vsel %vm1244, %v1295, %v1296
        %v1298 = vrot.slane %v1296, 4
        %v1299 = vrot.slane %v782, 5
        %v1300 = vsel %vm1244, %v1298, %v1299
        %v1301 = vrot.slane %v1186, 5
        %v1302 = vrot.slane %v1301, 4
        %v1303 = vrot.slane %v760, 5
        %v1304 = vsel %vm1244, %v1302, %v1303
        %v1305 = vrot.slane %v1303, 4
        %v1306 = vrot.slane %v783, 5
        %v1307 = vsel %vm1244, %v1305, %v1306
        %v1308 = vrot.slane %v1187, 5
        %v1309 = vrot.slane %v1308, 4
        %v1310 = vrot.slane %v762, 5
        %v1311 = vsel %vm1244, %v1309, %v1310
        %v1312 = vrot.slane %v1310, 4
        %v1313 = vrot.slane %v784, 5
        %v1314 = vsel %vm1244, %v1312, %v1313
        %v1315 = vrot.slane %v1188, 5
        %v1316 = vrot.slane %v1315, 4
        %v1317 = vrot.slane %v764, 5
        %v1318 = vsel %vm1244, %v1316, %v1317
        %v1319 = vrot.slane %v1317, 4
        %v1320 = vrot.slane %v785, 5
        %v1321 = vsel %vm1244, %v1319, %v1320
        %v1322 = vrot.slane %v1189, 5
        %v1323 = vrot.slane %v1322, 4
        %v1324 = vrot.slane %v766, 5
        %v1325 = vsel %vm1244, %v1323, %v1324
        %v1326 = vrot.slane %v1324, 4
        %v1327 = vrot.slane %v786, 5
        %v1328 = vsel %vm1244, %v1326, %v1327
        %v1329 = vrot.slane %v1190, 5
        %v1330 = vrot.slane %v1329, 4
        %v1331 = vrot.slane %v768, 5
        %v1332 = vsel %vm1244, %v1330, %v1331
        %v1333 = vrot.slane %v1331, 4
        %v1334 = vrot.slane %v787, 5
        %v1335 = vsel %vm1244, %v1333, %v1334
        %v1336 = vrot.slane %v1191, 5
        %v1337 = vrot.slane %v1336, 4
        %v1338 = vrot.slane %v770, 5
        %v1339 = vsel %vm1244, %v1337, %v1338
        %v1340 = vrot.slane %v1338, 4
        %v1341 = vrot.slane %v788, 5
        %v1342 = vsel %vm1244, %v1340, %v1341
        %v1343 = vrot.slane %v1192, 5
        %v1344 = vrot.slane %v1343, 4
        %v1345 = vrot.slane %v772, 5
        %v1346 = vsel %vm1244, %v1344, %v1345
        %v1347 = vrot.slane %v1345, 4
        %v1348 = vrot.slane %v789, 5
        %v1349 = vsel %vm1244, %v1347, %v1348
        %v1350 = vrot.slane %v1193, 5
        %v1351 = vrot.slane %v1350, 4
        %v1352 = vrot.slane %v774, 5
        %v1353 = vsel %vm1244, %v1351, %v1352
        %v1354 = vrot.slane %v1352, 4
        %v1355 = vrot.slane %v790, 5
        %v1356 = vsel %vm1244, %v1354, %v1355
        %v1357 = vld [vmem:[%s625] sm:$0xf]
        %v1358 = vld [vmem:[%s625 + $0x4] sm:$0xf]
        %v1359 = vld [vmem:[%s625 + $0xc] sm:$0xf]
        %v1360 = vld [vmem:[%s625 + $0x10] sm:$0xf]
        %v1361 = vld [vmem:[%s625 + $0x18] sm:$0xf]
        %v1362 = vld [vmem:[%s625 + $0x1c] sm:$0xf]
        %v1363 = vld [vmem:[%s625 + $0x24] sm:$0xf]
        %v1364 = vld [vmem:[%s625 + $0x28] sm:$0xf]
        %v1365 = vld [vmem:[%s625 + $0x30] sm:$0xf]
        %v1366 = vld [vmem:[%s625 + $0x34] sm:$0xf]
        %v1367 = vld [vmem:[%s625 + $0x3c] sm:$0xf]
        %v1368 = vld [vmem:[%s625 + $0x40] sm:$0xf]
        %v1369 = vld [vmem:[%s625 + $0x48] sm:$0xf]
        %v1370 = vld [vmem:[%s625 + $0x4c] sm:$0xf]
        %v1371 = vld [vmem:[%s625 + $0x54] sm:$0xf]
        %v1372 = vld [vmem:[%s625 + $0x58] sm:$0xf]
        %v1373 = vld [vmem:[%s625 + $0x60] sm:$0xf]
        %v1374 = vld [vmem:[%s625 + $0x64] sm:$0xf]
        %v1375 = vld [vmem:[%s625 + $0x6c] sm:$0xf]
        %v1376 = vld [vmem:[%s625 + $0x70] sm:$0xf]
        %v1377 = vld [vmem:[%s625 + $0x78] sm:$0xf]
        %v1378 = vld [vmem:[%s625 + $0x7c] sm:$0xf]
        %v1379 = vld [vmem:[%s625 + $0x84] sm:$0xf]
        %v1380 = vld [vmem:[%s625 + $0x88] sm:$0xf]
        %v1381 = vld [vmem:[%s625 + $0x90] sm:$0xf]
        %v1382 = vld [vmem:[%s625 + $0x94] sm:$0xf]
        %v1383 = vld [vmem:[%s625 + $0x9c] sm:$0xf]
        %v1384 = vld [vmem:[%s625 + $0xa0] sm:$0xf]
        %v1385 = vld [vmem:[%s625 + $0xa8] sm:$0xf]
        %v1386 = vld [vmem:[%s625 + $0xac] sm:$0xf]
        %v1387 = vld [vmem:[%s625 + $0xb4] sm:$0xf]
        %v1388 = vld [vmem:[%s625 + $0xb8] sm:$0xf]
        %v1389 = vld [vmem:[%s625 + $0x8] sm:$0x1]
        %v1390 = vld [vmem:[%s625 + $0x14] sm:$0x1]
        %v1391 = vld [vmem:[%s625 + $0x20] sm:$0x1]
        %v1392 = vld [vmem:[%s625 + $0x2c] sm:$0x1]
        %v1393 = vld [vmem:[%s625 + $0x38] sm:$0x1]
        %v1394 = vld [vmem:[%s625 + $0x44] sm:$0x1]
        %v1395 = vld [vmem:[%s625 + $0x50] sm:$0x1]
        %v1396 = vld [vmem:[%s625 + $0x5c] sm:$0x1]
        %v1397 = vld [vmem:[%s625 + $0x68] sm:$0x1]
        %v1398 = vld [vmem:[%s625 + $0x74] sm:$0x1]
        %v1399 = vld [vmem:[%s625 + $0x80] sm:$0x1]
        %v1400 = vld [vmem:[%s625 + $0x8c] sm:$0x1]
        %v1401 = vld [vmem:[%s625 + $0x98] sm:$0x1]
        %v1402 = vld [vmem:[%s625 + $0xa4] sm:$0x1]
        %v1403 = vld [vmem:[%s625 + $0xb0] sm:$0x1]
        %v1404 = vld [vmem:[%s625 + $0xbc] sm:$0x1]
        %v1406 = vshrl.u32 %v1357, 16
        %v1408 = vrot.slane %v1406, 4
        %v1409 = vshll.u32 %v1357, 16
        %v1411 = vrot.slane %v1409, 5
        %v1412 = vor.u32 %v1408, %v1411
        %v1413 = vrot.slane %v1412, 4
        %v1415 = vshll.u32 %v1358, 16
        %v1417 = vrot.slane %v1415, 5
        %v1418 = vsel %vm793, %v1413, %v1417
        %v1419 = vshrl.u32 %v1358, 16
        %v1421 = vrot.slane %v1419, 4
        %v1422 = vor.u32 %v1421, %v1417
        %v1423 = vrot.slane %v1422, 4
        %v1425 = vshll.u32 %v1389, 16
        %v1427 = vrot.slane %v1425, 5
        %v1428 = vsel %vm793, %v1423, %v1427
        %v1430 = vshrl.u32 %v1359, 16
        %v1432 = vrot.slane %v1430, 4
        %v1433 = vshll.u32 %v1359, 16
        %v1435 = vrot.slane %v1433, 5
        %v1436 = vor.u32 %v1432, %v1435
        %v1437 = vrot.slane %v1436, 4
        %v1439 = vshll.u32 %v1360, 16
        %v1441 = vrot.slane %v1439, 5
        %v1442 = vsel %vm793, %v1437, %v1441
        %v1443 = vshrl.u32 %v1360, 16
        %v1445 = vrot.slane %v1443, 4
        %v1446 = vor.u32 %v1445, %v1441
        %v1447 = vrot.slane %v1446, 4
        %v1449 = vshll.u32 %v1390, 16
        %v1451 = vrot.slane %v1449, 5
        %v1452 = vsel %vm793, %v1447, %v1451
        %v1454 = vshrl.u32 %v1361, 16
        %v1456 = vrot.slane %v1454, 4
        %v1457 = vshll.u32 %v1361, 16
        %v1459 = vrot.slane %v1457, 5
        %v1460 = vor.u32 %v1456, %v1459
        %v1461 = vrot.slane %v1460, 4
        %v1463 = vshll.u32 %v1362, 16
        %v1465 = vrot.slane %v1463, 5
        %v1466 = vsel %vm793, %v1461, %v1465
        %v1467 = vshrl.u32 %v1362, 16
        %v1469 = vrot.slane %v1467, 4
        %v1470 = vor.u32 %v1469, %v1465
        %v1471 = vrot.slane %v1470, 4
        %v1473 = vshll.u32 %v1391, 16
        %v1475 = vrot.slane %v1473, 5
        %v1476 = vsel %vm793, %v1471, %v1475
        %v1478 = vshrl.u32 %v1363, 16
        %v1480 = vrot.slane %v1478, 4
        %v1481 = vshll.u32 %v1363, 16
        %v1483 = vrot.slane %v1481, 5
        %v1484 = vor.u32 %v1480, %v1483
        %v1485 = vrot.slane %v1484, 4
        %v1487 = vshll.u32 %v1364, 16
        %v1489 = vrot.slane %v1487, 5
        %v1490 = vsel %vm793, %v1485, %v1489
        %v1491 = vshrl.u32 %v1364, 16
        %v1493 = vrot.slane %v1491, 4
        %v1494 = vor.u32 %v1493, %v1489
        %v1495 = vrot.slane %v1494, 4
        %v1497 = vshll.u32 %v1392, 16
        %v1499 = vrot.slane %v1497, 5
        %v1500 = vsel %vm793, %v1495, %v1499
        %v1502 = vshrl.u32 %v1365, 16
        %v1504 = vrot.slane %v1502, 4
        %v1505 = vshll.u32 %v1365, 16
        %v1507 = vrot.slane %v1505, 5
        %v1508 = vor.u32 %v1504, %v1507
        %v1509 = vrot.slane %v1508, 4
        %v1511 = vshll.u32 %v1366, 16
        %v1513 = vrot.slane %v1511, 5
        %v1514 = vsel %vm793, %v1509, %v1513
        %v1515 = vshrl.u32 %v1366, 16
        %v1517 = vrot.slane %v1515, 4
        %v1518 = vor.u32 %v1517, %v1513
        %v1519 = vrot.slane %v1518, 4
        %v1521 = vshll.u32 %v1393, 16
        %v1523 = vrot.slane %v1521, 5
        %v1524 = vsel %vm793, %v1519, %v1523
        %v1526 = vshrl.u32 %v1367, 16
        %v1528 = vrot.slane %v1526, 4
        %v1529 = vshll.u32 %v1367, 16
        %v1531 = vrot.slane %v1529, 5
        %v1532 = vor.u32 %v1528, %v1531
        %v1533 = vrot.slane %v1532, 4
        %v1535 = vshll.u32 %v1368, 16
        %v1537 = vrot.slane %v1535, 5
        %v1538 = vsel %vm793, %v1533, %v1537
        %v1539 = vshrl.u32 %v1368, 16
        %v1541 = vrot.slane %v1539, 4
        %v1542 = vor.u32 %v1541, %v1537
        %v1543 = vrot.slane %v1542, 4
        %v1545 = vshll.u32 %v1394, 16
        %v1547 = vrot.slane %v1545, 5
        %v1548 = vsel %vm793, %v1543, %v1547
        %v1550 = vshrl.u32 %v1369, 16
        %v1552 = vrot.slane %v1550, 4
        %v1553 = vshll.u32 %v1369, 16
        %v1555 = vrot.slane %v1553, 5
        %v1556 = vor.u32 %v1552, %v1555
        %v1557 = vrot.slane %v1556, 4
        %v1559 = vshll.u32 %v1370, 16
        %v1561 = vrot.slane %v1559, 5
        %v1562 = vsel %vm793, %v1557, %v1561
        %v1563 = vshrl.u32 %v1370, 16
        %v1565 = vrot.slane %v1563, 4
        %v1566 = vor.u32 %v1565, %v1561
        %v1567 = vrot.slane %v1566, 4
        %v1569 = vshll.u32 %v1395, 16
        %v1571 = vrot.slane %v1569, 5
        %v1572 = vsel %vm793, %v1567, %v1571
        %v1574 = vshrl.u32 %v1371, 16
        %v1576 = vrot.slane %v1574, 4
        %v1577 = vshll.u32 %v1371, 16
        %v1579 = vrot.slane %v1577, 5
        %v1580 = vor.u32 %v1576, %v1579
        %v1581 = vrot.slane %v1580, 4
        %v1583 = vshll.u32 %v1372, 16
        %v1585 = vrot.slane %v1583, 5
        %v1586 = vsel %vm793, %v1581, %v1585
        %v1587 = vshrl.u32 %v1372, 16
        %v1589 = vrot.slane %v1587, 4
        %v1590 = vor.u32 %v1589, %v1585
        %v1591 = vrot.slane %v1590, 4
        %v1593 = vshll.u32 %v1396, 16
        %v1595 = vrot.slane %v1593, 5
        %v1596 = vsel %vm793, %v1591, %v1595
        %v1598 = vshrl.u32 %v1373, 16
        %v1600 = vrot.slane %v1598, 4
        %v1601 = vshll.u32 %v1373, 16
        %v1603 = vrot.slane %v1601, 5
        %v1604 = vor.u32 %v1600, %v1603
        %v1605 = vrot.slane %v1604, 4
        %v1607 = vshll.u32 %v1374, 16
        %v1609 = vrot.slane %v1607, 5
        %v1610 = vsel %vm793, %v1605, %v1609
        %v1611 = vshrl.u32 %v1374, 16
        %v1613 = vrot.slane %v1611, 4
        %v1614 = vor.u32 %v1613, %v1609
        %v1615 = vrot.slane %v1614, 4
        %v1617 = vshll.u32 %v1397, 16
        %v1619 = vrot.slane %v1617, 5
        %v1620 = vsel %vm793, %v1615, %v1619
        %v1622 = vshrl.u32 %v1375, 16
        %v1624 = vrot.slane %v1622, 4
        %v1625 = vshll.u32 %v1375, 16
        %v1627 = vrot.slane %v1625, 5
        %v1628 = vor.u32 %v1624, %v1627
        %v1629 = vrot.slane %v1628, 4
        %v1631 = vshll.u32 %v1376, 16
        %v1633 = vrot.slane %v1631, 5
        %v1634 = vsel %vm793, %v1629, %v1633
        %v1635 = vshrl.u32 %v1376, 16
        %v1637 = vrot.slane %v1635, 4
        %v1638 = vor.u32 %v1637, %v1633
        %v1639 = vrot.slane %v1638, 4
        %v1641 = vshll.u32 %v1398, 16
        %v1643 = vrot.slane %v1641, 5
        %v1644 = vsel %vm793, %v1639, %v1643
        %v1646 = vshrl.u32 %v1377, 16
        %v1648 = vrot.slane %v1646, 4
        %v1649 = vshll.u32 %v1377, 16
        %v1651 = vrot.slane %v1649, 5
        %v1652 = vor.u32 %v1648, %v1651
        %v1653 = vrot.slane %v1652, 4
        %v1655 = vshll.u32 %v1378, 16
        %v1657 = vrot.slane %v1655, 5
        %v1658 = vsel %vm793, %v1653, %v1657
        %v1659 = vshrl.u32 %v1378, 16
        %v1661 = vrot.slane %v1659, 4
        %v1662 = vor.u32 %v1661, %v1657
        %v1663 = vrot.slane %v1662, 4
        %v1665 = vshll.u32 %v1399, 16
        %v1667 = vrot.slane %v1665, 5
        %v1668 = vsel %vm793, %v1663, %v1667
        %v1670 = vshrl.u32 %v1379, 16
        %v1672 = vrot.slane %v1670, 4
        %v1673 = vshll.u32 %v1379, 16
        %v1675 = vrot.slane %v1673, 5
        %v1676 = vor.u32 %v1672, %v1675
        %v1677 = vrot.slane %v1676, 4
        %v1679 = vshll.u32 %v1380, 16
        %v1681 = vrot.slane %v1679, 5
        %v1682 = vsel %vm793, %v1677, %v1681
        %v1683 = vshrl.u32 %v1380, 16
        %v1685 = vrot.slane %v1683, 4
        %v1686 = vor.u32 %v1685, %v1681
        %v1687 = vrot.slane %v1686, 4
        %v1689 = vshll.u32 %v1400, 16
        %v1691 = vrot.slane %v1689, 5
        %v1692 = vsel %vm793, %v1687, %v1691
        %v1694 = vshrl.u32 %v1381, 16
        %v1696 = vrot.slane %v1694, 4
        %v1697 = vshll.u32 %v1381, 16
        %v1699 = vrot.slane %v1697, 5
        %v1700 = vor.u32 %v1696, %v1699
        %v1701 = vrot.slane %v1700, 4
        %v1703 = vshll.u32 %v1382, 16
        %v1705 = vrot.slane %v1703, 5
        %v1706 = vsel %vm793, %v1701, %v1705
        %v1707 = vshrl.u32 %v1382, 16
        %v1709 = vrot.slane %v1707, 4
        %v1710 = vor.u32 %v1709, %v1705
        %v1711 = vrot.slane %v1710, 4
        %v1713 = vshll.u32 %v1401, 16
        %v1715 = vrot.slane %v1713, 5
        %v1716 = vsel %vm793, %v1711, %v1715
        %v1718 = vshrl.u32 %v1383, 16
        %v1720 = vrot.slane %v1718, 4
        %v1721 = vshll.u32 %v1383, 16
        %v1723 = vrot.slane %v1721, 5
        %v1724 = vor.u32 %v1720, %v1723
        %v1725 = vrot.slane %v1724, 4
        %v1727 = vshll.u32 %v1384, 16
        %v1729 = vrot.slane %v1727, 5
        %v1730 = vsel %vm793, %v1725, %v1729
        %v1731 = vshrl.u32 %v1384, 16
        %v1733 = vrot.slane %v1731, 4
        %v1734 = vor.u32 %v1733, %v1729
        %v1735 = vrot.slane %v1734, 4
        %v1737 = vshll.u32 %v1402, 16
        %v1739 = vrot.slane %v1737, 5
        %v1740 = vsel %vm793, %v1735, %v1739
        %v1742 = vshrl.u32 %v1385, 16
        %v1744 = vrot.slane %v1742, 4
        %v1745 = vshll.u32 %v1385, 16
        %v1747 = vrot.slane %v1745, 5
        %v1748 = vor.u32 %v1744, %v1747
        %v1749 = vrot.slane %v1748, 4
        %v1751 = vshll.u32 %v1386, 16
        %v1753 = vrot.slane %v1751, 5
        %v1754 = vsel %vm793, %v1749, %v1753
        %v1755 = vshrl.u32 %v1386, 16
        %v1757 = vrot.slane %v1755, 4
        %v1758 = vor.u32 %v1757, %v1753
        %v1759 = vrot.slane %v1758, 4
        %v1761 = vshll.u32 %v1403, 16
        %v1763 = vrot.slane %v1761, 5
        %v1764 = vsel %vm793, %v1759, %v1763
        %v1766 = vshrl.u32 %v1387, 16
        %v1768 = vrot.slane %v1766, 4
        %v1769 = vshll.u32 %v1387, 16
        %v1771 = vrot.slane %v1769, 5
        %v1772 = vor.u32 %v1768, %v1771
        %v1773 = vrot.slane %v1772, 4
        %v1775 = vshll.u32 %v1388, 16
        %v1777 = vrot.slane %v1775, 5
        %v1778 = vsel %vm793, %v1773, %v1777
        %v1779 = vshrl.u32 %v1388, 16
        %v1781 = vrot.slane %v1779, 4
        %v1782 = vor.u32 %v1781, %v1777
        %v1783 = vrot.slane %v1782, 4
        %v1785 = vshll.u32 %v1404, 16
        %v1787 = vrot.slane %v1785, 5
        %v1788 = vsel %vm793, %v1783, %v1787
        %v1789 = vld [vmem:[%s625] sm:$0xe]
        %v1790 = vld [vmem:[%s625 + $0xc] sm:$0xe]
        %v1791 = vld [vmem:[%s625 + $0x18] sm:$0xe]
        %v1792 = vld [vmem:[%s625 + $0x24] sm:$0xe]
        %v1793 = vld [vmem:[%s625 + $0x30] sm:$0xe]
        %v1794 = vld [vmem:[%s625 + $0x3c] sm:$0xe]
        %v1795 = vld [vmem:[%s625 + $0x48] sm:$0xe]
        %v1796 = vld [vmem:[%s625 + $0x54] sm:$0xe]
        %v1797 = vld [vmem:[%s625 + $0x60] sm:$0xe]
        %v1798 = vld [vmem:[%s625 + $0x6c] sm:$0xe]
        %v1799 = vld [vmem:[%s625 + $0x78] sm:$0xe]
        %v1800 = vld [vmem:[%s625 + $0x84] sm:$0xe]
        %v1801 = vld [vmem:[%s625 + $0x90] sm:$0xe]
        %v1802 = vld [vmem:[%s625 + $0x9c] sm:$0xe]
        %v1803 = vld [vmem:[%s625 + $0xa8] sm:$0xe]
        %v1804 = vld [vmem:[%s625 + $0xb4] sm:$0xe]
        %v1853 = vrot.slane %v1789, 5
        %v1854 = vrot.slane %v1853, 4
        %v1855 = vrot.slane %v1358, 5
        %v1856 = vsel %vm1244, %v1854, %v1855
        %v1857 = vrot.slane %v1855, 4
        %v1858 = vrot.slane %v1389, 5
        %v1859 = vsel %vm1244, %v1857, %v1858
        %v1860 = vrot.slane %v1790, 5
        %v1861 = vrot.slane %v1860, 4
        %v1862 = vrot.slane %v1360, 5
        %v1863 = vsel %vm1244, %v1861, %v1862
        %v1864 = vrot.slane %v1862, 4
        %v1865 = vrot.slane %v1390, 5
        %v1866 = vsel %vm1244, %v1864, %v1865
        %v1867 = vrot.slane %v1791, 5
        %v1868 = vrot.slane %v1867, 4
        %v1869 = vrot.slane %v1362, 5
        %v1870 = vsel %vm1244, %v1868, %v1869
        %v1871 = vrot.slane %v1869, 4
        %v1872 = vrot.slane %v1391, 5
        %v1873 = vsel %vm1244, %v1871, %v1872
        %v1874 = vrot.slane %v1792, 5
        %v1875 = vrot.slane %v1874, 4
        %v1876 = vrot.slane %v1364, 5
        %v1877 = vsel %vm1244, %v1875, %v1876
        %v1878 = vrot.slane %v1876, 4
        %v1879 = vrot.slane %v1392, 5
        %v1880 = vsel %vm1244, %v1878, %v1879
        %v1881 = vrot.slane %v1793, 5
        %v1882 = vrot.slane %v1881, 4
        %v1883 = vrot.slane %v1366, 5
        %v1884 = vsel %vm1244, %v1882, %v1883
        %v1885 = vrot.slane %v1883, 4
        %v1886 = vrot.slane %v1393, 5
        %v1887 = vsel %vm1244, %v1885, %v1886
        %v1888 = vrot.slane %v1794, 5
        %v1889 = vrot.slane %v1888, 4
        %v1890 = vrot.slane %v1368, 5
        %v1891 = vsel %vm1244, %v1889, %v1890
        %v1892 = vrot.slane %v1890, 4
        %v1893 = vrot.slane %v1394, 5
        %v1894 = vsel %vm1244, %v1892, %v1893
        %v1895 = vrot.slane %v1795, 5
        %v1896 = vrot.slane %v1895, 4
        %v1897 = vrot.slane %v1370, 5
        %v1898 = vsel %vm1244, %v1896, %v1897
        %v1899 = vrot.slane %v1897, 4
        %v1900 = vrot.slane %v1395, 5
        %v1901 = vsel %vm1244, %v1899, %v1900
        %v1902 = vrot.slane %v1796, 5
        %v1903 = vrot.slane %v1902, 4
        %v1904 = vrot.slane %v1372, 5
        %v1905 = vsel %vm1244, %v1903, %v1904
        %v1906 = vrot.slane %v1904, 4
        %v1907 = vrot.slane %v1396, 5
        %v1908 = vsel %vm1244, %v1906, %v1907
        %v1909 = vrot.slane %v1797, 5
        %v1910 = vrot.slane %v1909, 4
        %v1911 = vrot.slane %v1374, 5
        %v1912 = vsel %vm1244, %v1910, %v1911
        %v1913 = vrot.slane %v1911, 4
        %v1914 = vrot.slane %v1397, 5
        %v1915 = vsel %vm1244, %v1913, %v1914
        %v1916 = vrot.slane %v1798, 5
        %v1917 = vrot.slane %v1916, 4
        %v1918 = vrot.slane %v1376, 5
        %v1919 = vsel %vm1244, %v1917, %v1918
        %v1920 = vrot.slane %v1918, 4
        %v1921 = vrot.slane %v1398, 5
        %v1922 = vsel %vm1244, %v1920, %v1921
        %v1923 = vrot.slane %v1799, 5
        %v1924 = vrot.slane %v1923, 4
        %v1925 = vrot.slane %v1378, 5
        %v1926 = vsel %vm1244, %v1924, %v1925
        %v1927 = vrot.slane %v1925, 4
        %v1928 = vrot.slane %v1399, 5
        %v1929 = vsel %vm1244, %v1927, %v1928
        %v1930 = vrot.slane %v1800, 5
        %v1931 = vrot.slane %v1930, 4
        %v1932 = vrot.slane %v1380, 5
        %v1933 = vsel %vm1244, %v1931, %v1932
        %v1934 = vrot.slane %v1932, 4
        %v1935 = vrot.slane %v1400, 5
        %v1936 = vsel %vm1244, %v1934, %v1935
        %v1937 = vrot.slane %v1801, 5
        %v1938 = vrot.slane %v1937, 4
        %v1939 = vrot.slane %v1382, 5
        %v1940 = vsel %vm1244, %v1938, %v1939
        %v1941 = vrot.slane %v1939, 4
        %v1942 = vrot.slane %v1401, 5
        %v1943 = vsel %vm1244, %v1941, %v1942
        %v1944 = vrot.slane %v1802, 5
        %v1945 = vrot.slane %v1944, 4
        %v1946 = vrot.slane %v1384, 5
        %v1947 = vsel %vm1244, %v1945, %v1946
        %v1948 = vrot.slane %v1946, 4
        %v1949 = vrot.slane %v1402, 5
        %v1950 = vsel %vm1244, %v1948, %v1949
        %v1951 = vrot.slane %v1803, 5
        %v1952 = vrot.slane %v1951, 4
        %v1953 = vrot.slane %v1386, 5
        %v1954 = vsel %vm1244, %v1952, %v1953
        %v1955 = vrot.slane %v1953, 4
        %v1956 = vrot.slane %v1403, 5
        %v1957 = vsel %vm1244, %v1955, %v1956
        %v1958 = vrot.slane %v1804, 5
        %v1959 = vrot.slane %v1958, 4
        %v1960 = vrot.slane %v1388, 5
        %v1961 = vsel %vm1244, %v1959, %v1960
        %v1962 = vrot.slane %v1960, 4
        %v1963 = vrot.slane %v1404, 5
        %v1964 = vsel %vm1244, %v1962, %v1963
        %s1965 = scalar_lea.vmem [#allocation2], 24
        %v1966 = vld [vmem:[%s1965] sm:$0xf]
        %v1967 = vld [vmem:[%s1965 + $0x4] sm:$0xf]
        %v1968 = vld [vmem:[%s1965 + $0xc] sm:$0xf]
        %v1969 = vld [vmem:[%s1965 + $0x10] sm:$0xf]
        %v1970 = vld [vmem:[%s1965 + $0x18] sm:$0xf]
        %v1971 = vld [vmem:[%s1965 + $0x1c] sm:$0xf]
        %v1972 = vld [vmem:[%s1965 + $0x24] sm:$0xf]
        %v1973 = vld [vmem:[%s1965 + $0x28] sm:$0xf]
        %v1974 = vld [vmem:[%s1965 + $0x30] sm:$0xf]
        %v1975 = vld [vmem:[%s1965 + $0x34] sm:$0xf]
        %v1976 = vld [vmem:[%s1965 + $0x3c] sm:$0xf]
        %v1977 = vld [vmem:[%s1965 + $0x40] sm:$0xf]
        %v1978 = vld [vmem:[%s1965 + $0x48] sm:$0xf]
        %v1979 = vld [vmem:[%s1965 + $0x4c] sm:$0xf]
        %v1980 = vld [vmem:[%s1965 + $0x54] sm:$0xf]
        %v1981 = vld [vmem:[%s1965 + $0x58] sm:$0xf]
        %v1982 = vld [vmem:[%s1965 + $0x60] sm:$0xf]
        %v1983 = vld [vmem:[%s1965 + $0x64] sm:$0xf]
        %v1984 = vld [vmem:[%s1965 + $0x6c] sm:$0xf]
        %v1985 = vld [vmem:[%s1965 + $0x70] sm:$0xf]
        %v1986 = vld [vmem:[%s1965 + $0x78] sm:$0xf]
        %v1987 = vld [vmem:[%s1965 + $0x7c] sm:$0xf]
        %v1988 = vld [vmem:[%s1965 + $0x84] sm:$0xf]
        %v1989 = vld [vmem:[%s1965 + $0x88] sm:$0xf]
        %v1990 = vld [vmem:[%s1965 + $0x90] sm:$0xf]
        %v1991 = vld [vmem:[%s1965 + $0x94] sm:$0xf]
        %v1992 = vld [vmem:[%s1965 + $0x9c] sm:$0xf]
        %v1993 = vld [vmem:[%s1965 + $0xa0] sm:$0xf]
        %v1994 = vld [vmem:[%s1965 + $0xa8] sm:$0xf]
        %v1995 = vld [vmem:[%s1965 + $0xac] sm:$0xf]
        %v1996 = vld [vmem:[%s1965 + $0xb4] sm:$0xf]
        %v1997 = vld [vmem:[%s1965 + $0xb8] sm:$0xf]
        %v1998 = vld [vmem:[%s1965 + $0x8] sm:$0x1]
        %v1999 = vld [vmem:[%s1965 + $0x14] sm:$0x1]
        %v2000 = vld [vmem:[%s1965 + $0x20] sm:$0x1]
        %v2001 = vld [vmem:[%s1965 + $0x2c] sm:$0x1]
        %v2002 = vld [vmem:[%s1965 + $0x38] sm:$0x1]
        %v2003 = vld [vmem:[%s1965 + $0x44] sm:$0x1]
        %v2004 = vld [vmem:[%s1965 + $0x50] sm:$0x1]
        %v2005 = vld [vmem:[%s1965 + $0x5c] sm:$0x1]
        %v2006 = vld [vmem:[%s1965 + $0x68] sm:$0x1]
        %v2007 = vld [vmem:[%s1965 + $0x74] sm:$0x1]
        %v2008 = vld [vmem:[%s1965 + $0x80] sm:$0x1]
        %v2009 = vld [vmem:[%s1965 + $0x8c] sm:$0x1]
        %v2010 = vld [vmem:[%s1965 + $0x98] sm:$0x1]
        %v2011 = vld [vmem:[%s1965 + $0xa4] sm:$0x1]
        %v2012 = vld [vmem:[%s1965 + $0xb0] sm:$0x1]
        %v2013 = vld [vmem:[%s1965 + $0xbc] sm:$0x1]
        %v2015 = vshrl.u32 %v1966, 16
        %v2017 = vrot.slane %v2015, 4
        %v2018 = vshll.u32 %v1966, 16
        %v2020 = vrot.slane %v2018, 5
        %v2021 = vor.u32 %v2017, %v2020
        %v2022 = vrot.slane %v2021, 4
        %v2024 = vshll.u32 %v1967, 16
        %v2026 = vrot.slane %v2024, 5
        %v2027 = vsel %vm793, %v2022, %v2026
        %v2028 = vshrl.u32 %v1967, 16
        %v2030 = vrot.slane %v2028, 4
        %v2031 = vor.u32 %v2030, %v2026
        %v2032 = vrot.slane %v2031, 4
        %v2034 = vshll.u32 %v1998, 16
        %v2036 = vrot.slane %v2034, 5
        %v2037 = vsel %vm793, %v2032, %v2036
        %v2039 = vshrl.u32 %v1968, 16
        %v2041 = vrot.slane %v2039, 4
        %v2042 = vshll.u32 %v1968, 16
        %v2044 = vrot.slane %v2042, 5
        %v2045 = vor.u32 %v2041, %v2044
        %v2046 = vrot.slane %v2045, 4
        %v2048 = vshll.u32 %v1969, 16
        %v2050 = vrot.slane %v2048, 5
        %v2051 = vsel %vm793, %v2046, %v2050
        %v2052 = vshrl.u32 %v1969, 16
        %v2054 = vrot.slane %v2052, 4
        %v2055 = vor.u32 %v2054, %v2050
        %v2056 = vrot.slane %v2055, 4
        %v2058 = vshll.u32 %v1999, 16
        %v2060 = vrot.slane %v2058, 5
        %v2061 = vsel %vm793, %v2056, %v2060
        %v2063 = vshrl.u32 %v1970, 16
        %v2065 = vrot.slane %v2063, 4
        %v2066 = vshll.u32 %v1970, 16
        %v2068 = vrot.slane %v2066, 5
        %v2069 = vor.u32 %v2065, %v2068
        %v2070 = vrot.slane %v2069, 4
        %v2072 = vshll.u32 %v1971, 16
        %v2074 = vrot.slane %v2072, 5
        %v2075 = vsel %vm793, %v2070, %v2074
        %v2076 = vshrl.u32 %v1971, 16
        %v2078 = vrot.slane %v2076, 4
        %v2079 = vor.u32 %v2078, %v2074
        %v2080 = vrot.slane %v2079, 4
        %v2082 = vshll.u32 %v2000, 16
        %v2084 = vrot.slane %v2082, 5
        %v2085 = vsel %vm793, %v2080, %v2084
        %v2087 = vshrl.u32 %v1972, 16
        %v2089 = vrot.slane %v2087, 4
        %v2090 = vshll.u32 %v1972, 16
        %v2092 = vrot.slane %v2090, 5
        %v2093 = vor.u32 %v2089, %v2092
        %v2094 = vrot.slane %v2093, 4
        %v2096 = vshll.u32 %v1973, 16
        %v2098 = vrot.slane %v2096, 5
        %v2099 = vsel %vm793, %v2094, %v2098
        %v2100 = vshrl.u32 %v1973, 16
        %v2102 = vrot.slane %v2100, 4
        %v2103 = vor.u32 %v2102, %v2098
        %v2104 = vrot.slane %v2103, 4
        %v2106 = vshll.u32 %v2001, 16
        %v2108 = vrot.slane %v2106, 5
        %v2109 = vsel %vm793, %v2104, %v2108
        %v2111 = vshrl.u32 %v1974, 16
        %v2113 = vrot.slane %v2111, 4
        %v2114 = vshll.u32 %v1974, 16
        %v2116 = vrot.slane %v2114, 5
        %v2117 = vor.u32 %v2113, %v2116
        %v2118 = vrot.slane %v2117, 4
        %v2120 = vshll.u32 %v1975, 16
        %v2122 = vrot.slane %v2120, 5
        %v2123 = vsel %vm793, %v2118, %v2122
        %v2124 = vshrl.u32 %v1975, 16
        %v2126 = vrot.slane %v2124, 4
        %v2127 = vor.u32 %v2126, %v2122
        %v2128 = vrot.slane %v2127, 4
        %v2130 = vshll.u32 %v2002, 16
        %v2132 = vrot.slane %v2130, 5
        %v2133 = vsel %vm793, %v2128, %v2132
        %v2135 = vshrl.u32 %v1976, 16
        %v2137 = vrot.slane %v2135, 4
        %v2138 = vshll.u32 %v1976, 16
        %v2140 = vrot.slane %v2138, 5
        %v2141 = vor.u32 %v2137, %v2140
        %v2142 = vrot.slane %v2141, 4
        %v2144 = vshll.u32 %v1977, 16
        %v2146 = vrot.slane %v2144, 5
        %v2147 = vsel %vm793, %v2142, %v2146
        %v2148 = vshrl.u32 %v1977, 16
        %v2150 = vrot.slane %v2148, 4
        %v2151 = vor.u32 %v2150, %v2146
        %v2152 = vrot.slane %v2151, 4
        %v2154 = vshll.u32 %v2003, 16
        %v2156 = vrot.slane %v2154, 5
        %v2157 = vsel %vm793, %v2152, %v2156
        %v2159 = vshrl.u32 %v1978, 16
        %v2161 = vrot.slane %v2159, 4
        %v2162 = vshll.u32 %v1978, 16
        %v2164 = vrot.slane %v2162, 5
        %v2165 = vor.u32 %v2161, %v2164
        %v2166 = vrot.slane %v2165, 4
        %v2168 = vshll.u32 %v1979, 16
        %v2170 = vrot.slane %v2168, 5
        %v2171 = vsel %vm793, %v2166, %v2170
        %v2172 = vshrl.u32 %v1979, 16
        %v2174 = vrot.slane %v2172, 4
        %v2175 = vor.u32 %v2174, %v2170
        %v2176 = vrot.slane %v2175, 4
        %v2178 = vshll.u32 %v2004, 16
        %v2180 = vrot.slane %v2178, 5
        %v2181 = vsel %vm793, %v2176, %v2180
        %v2183 = vshrl.u32 %v1980, 16
        %v2185 = vrot.slane %v2183, 4
        %v2186 = vshll.u32 %v1980, 16
        %v2188 = vrot.slane %v2186, 5
        %v2189 = vor.u32 %v2185, %v2188
        %v2190 = vrot.slane %v2189, 4
        %v2192 = vshll.u32 %v1981, 16
        %v2194 = vrot.slane %v2192, 5
        %v2195 = vsel %vm793, %v2190, %v2194
        %v2196 = vshrl.u32 %v1981, 16
        %v2198 = vrot.slane %v2196, 4
        %v2199 = vor.u32 %v2198, %v2194
        %v2200 = vrot.slane %v2199, 4
        %v2202 = vshll.u32 %v2005, 16
        %v2204 = vrot.slane %v2202, 5
        %v2205 = vsel %vm793, %v2200, %v2204
        %v2207 = vshrl.u32 %v1982, 16
        %v2209 = vrot.slane %v2207, 4
        %v2210 = vshll.u32 %v1982, 16
        %v2212 = vrot.slane %v2210, 5
        %v2213 = vor.u32 %v2209, %v2212
        %v2214 = vrot.slane %v2213, 4
        %v2216 = vshll.u32 %v1983, 16
        %v2218 = vrot.slane %v2216, 5
        %v2219 = vsel %vm793, %v2214, %v2218
        %v2220 = vshrl.u32 %v1983, 16
        %v2222 = vrot.slane %v2220, 4
        %v2223 = vor.u32 %v2222, %v2218
        %v2224 = vrot.slane %v2223, 4
        %v2226 = vshll.u32 %v2006, 16
        %v2228 = vrot.slane %v2226, 5
        %v2229 = vsel %vm793, %v2224, %v2228
        %v2231 = vshrl.u32 %v1984, 16
        %v2233 = vrot.slane %v2231, 4
        %v2234 = vshll.u32 %v1984, 16
        %v2236 = vrot.slane %v2234, 5
        %v2237 = vor.u32 %v2233, %v2236
        %v2238 = vrot.slane %v2237, 4
        %v2240 = vshll.u32 %v1985, 16
        %v2242 = vrot.slane %v2240, 5
        %v2243 = vsel %vm793, %v2238, %v2242
        %v2244 = vshrl.u32 %v1985, 16
        %v2246 = vrot.slane %v2244, 4
        %v2247 = vor.u32 %v2246, %v2242
        %v2248 = vrot.slane %v2247, 4
        %v2250 = vshll.u32 %v2007, 16
        %v2252 = vrot.slane %v2250, 5
        %v2253 = vsel %vm793, %v2248, %v2252
        %v2255 = vshrl.u32 %v1986, 16
        %v2257 = vrot.slane %v2255, 4
        %v2258 = vshll.u32 %v1986, 16
        %v2260 = vrot.slane %v2258, 5
        %v2261 = vor.u32 %v2257, %v2260
        %v2262 = vrot.slane %v2261, 4
        %v2264 = vshll.u32 %v1987, 16
        %v2266 = vrot.slane %v2264, 5
        %v2267 = vsel %vm793, %v2262, %v2266
        %v2268 = vshrl.u32 %v1987, 16
        %v2270 = vrot.slane %v2268, 4
        %v2271 = vor.u32 %v2270, %v2266
        %v2272 = vrot.slane %v2271, 4
        %v2274 = vshll.u32 %v2008, 16
        %v2276 = vrot.slane %v2274, 5
        %v2277 = vsel %vm793, %v2272, %v2276
        %v2279 = vshrl.u32 %v1988, 16
        %v2281 = vrot.slane %v2279, 4
        %v2282 = vshll.u32 %v1988, 16
        %v2284 = vrot.slane %v2282, 5
        %v2285 = vor.u32 %v2281, %v2284
        %v2286 = vrot.slane %v2285, 4
        %v2288 = vshll.u32 %v1989, 16
        %v2290 = vrot.slane %v2288, 5
        %v2291 = vsel %vm793, %v2286, %v2290
        %v2292 = vshrl.u32 %v1989, 16
        %v2294 = vrot.slane %v2292, 4
        %v2295 = vor.u32 %v2294, %v2290
        %v2296 = vrot.slane %v2295, 4
        %v2298 = vshll.u32 %v2009, 16
        %v2300 = vrot.slane %v2298, 5
        %v2301 = vsel %vm793, %v2296, %v2300
        %v2303 = vshrl.u32 %v1990, 16
        %v2305 = vrot.slane %v2303, 4
        %v2306 = vshll.u32 %v1990, 16
        %v2308 = vrot.slane %v2306, 5
        %v2309 = vor.u32 %v2305, %v2308
        %v2310 = vrot.slane %v2309, 4
        %v2312 = vshll.u32 %v1991, 16
        %v2314 = vrot.slane %v2312, 5
        %v2315 = vsel %vm793, %v2310, %v2314
        %v2316 = vshrl.u32 %v1991, 16
        %v2318 = vrot.slane %v2316, 4
        %v2319 = vor.u32 %v2318, %v2314
        %v2320 = vrot.slane %v2319, 4
        %v2322 = vshll.u32 %v2010, 16
        %v2324 = vrot.slane %v2322, 5
        %v2325 = vsel %vm793, %v2320, %v2324
        %v2327 = vshrl.u32 %v1992, 16
        %v2329 = vrot.slane %v2327, 4
        %v2330 = vshll.u32 %v1992, 16
        %v2332 = vrot.slane %v2330, 5
        %v2333 = vor.u32 %v2329, %v2332
        %v2334 = vrot.slane %v2333, 4
        %v2336 = vshll.u32 %v1993, 16
        %v2338 = vrot.slane %v2336, 5
        %v2339 = vsel %vm793, %v2334, %v2338
        %v2340 = vshrl.u32 %v1993, 16
        %v2342 = vrot.slane %v2340, 4
        %v2343 = vor.u32 %v2342, %v2338
        %v2344 = vrot.slane %v2343, 4
        %v2346 = vshll.u32 %v2011, 16
        %v2348 = vrot.slane %v2346, 5
        %v2349 = vsel %vm793, %v2344, %v2348
        %v2351 = vshrl.u32 %v1994, 16
        %v2353 = vrot.slane %v2351, 4
        %v2354 = vshll.u32 %v1994, 16
        %v2356 = vrot.slane %v2354, 5
        %v2357 = vor.u32 %v2353, %v2356
        %v2358 = vrot.slane %v2357, 4
        %v2360 = vshll.u32 %v1995, 16
        %v2362 = vrot.slane %v2360, 5
        %v2363 = vsel %vm793, %v2358, %v2362
        %v2364 = vshrl.u32 %v1995, 16
        %v2366 = vrot.slane %v2364, 4
        %v2367 = vor.u32 %v2366, %v2362
        %v2368 = vrot.slane %v2367, 4
        %v2370 = vshll.u32 %v2012, 16
        %v2372 = vrot.slane %v2370, 5
        %v2373 = vsel %vm793, %v2368, %v2372
        %v2375 = vshrl.u32 %v1996, 16
        %v2377 = vrot.slane %v2375, 4
        %v2378 = vshll.u32 %v1996, 16
        %v2380 = vrot.slane %v2378, 5
        %v2381 = vor.u32 %v2377, %v2380
        %v2382 = vrot.slane %v2381, 4
        %v2384 = vshll.u32 %v1997, 16
        %v2386 = vrot.slane %v2384, 5
        %v2387 = vsel %vm793, %v2382, %v2386
        %v2388 = vshrl.u32 %v1997, 16
        %v2390 = vrot.slane %v2388, 4
        %v2391 = vor.u32 %v2390, %v2386
        %v2392 = vrot.slane %v2391, 4
        %v2394 = vshll.u32 %v2013, 16
        %v2396 = vrot.slane %v2394, 5
        %v2397 = vsel %vm793, %v2392, %v2396
        %v2398 = vld [vmem:[%s1965] sm:$0xe]
        %v2399 = vld [vmem:[%s1965 + $0xc] sm:$0xe]
        %v2400 = vld [vmem:[%s1965 + $0x18] sm:$0xe]
        %v2401 = vld [vmem:[%s1965 + $0x24] sm:$0xe]
        %v2402 = vld [vmem:[%s1965 + $0x30] sm:$0xe]
        %v2403 = vld [vmem:[%s1965 + $0x3c] sm:$0xe]
        %v2404 = vld [vmem:[%s1965 + $0x48] sm:$0xe]
        %v2405 = vld [vmem:[%s1965 + $0x54] sm:$0xe]
        %v2406 = vld [vmem:[%s1965 + $0x60] sm:$0xe]
        %v2407 = vld [vmem:[%s1965 + $0x6c] sm:$0xe]
        %v2408 = vld [vmem:[%s1965 + $0x78] sm:$0xe]
        %v2409 = vld [vmem:[%s1965 + $0x84] sm:$0xe]
        %v2410 = vld [vmem:[%s1965 + $0x90] sm:$0xe]
        %v2411 = vld [vmem:[%s1965 + $0x9c] sm:$0xe]
        %v2412 = vld [vmem:[%s1965 + $0xa8] sm:$0xe]
        %v2413 = vld [vmem:[%s1965 + $0xb4] sm:$0xe]
        %v2462 = vrot.slane %v2398, 5
        %v2463 = vrot.slane %v2462, 4
        %v2464 = vrot.slane %v1967, 5
        %v2465 = vsel %vm1244, %v2463, %v2464
        %v2466 = vrot.slane %v2464, 4
        %v2467 = vrot.slane %v1998, 5
        %v2468 = vsel %vm1244, %v2466, %v2467
        %v2469 = vrot.slane %v2399, 5
        %v2470 = vrot.slane %v2469, 4
        %v2471 = vrot.slane %v1969, 5
        %v2472 = vsel %vm1244, %v2470, %v2471
        %v2473 = vrot.slane %v2471, 4
        %v2474 = vrot.slane %v1999, 5
        %v2475 = vsel %vm1244, %v2473, %v2474
        %v2476 = vrot.slane %v2400, 5
        %v2477 = vrot.slane %v2476, 4
        %v2478 = vrot.slane %v1971, 5
        %v2479 = vsel %vm1244, %v2477, %v2478
        %v2480 = vrot.slane %v2478, 4
        %v2481 = vrot.slane %v2000, 5
        %v2482 = vsel %vm1244, %v2480, %v2481
        %v2483 = vrot.slane %v2401, 5
        %v2484 = vrot.slane %v2483, 4
        %v2485 = vrot.slane %v1973, 5
        %v2486 = vsel %vm1244, %v2484, %v2485
        %v2487 = vrot.slane %v2485, 4
        %v2488 = vrot.slane %v2001, 5
        %v2489 = vsel %vm1244, %v2487, %v2488
        %v2490 = vrot.slane %v2402, 5
        %v2491 = vrot.slane %v2490, 4
        %v2492 = vrot.slane %v1975, 5
        %v2493 = vsel %vm1244, %v2491, %v2492
        %v2494 = vrot.slane %v2492, 4
        %v2495 = vrot.slane %v2002, 5
        %v2496 = vsel %vm1244, %v2494, %v2495
        %v2497 = vrot.slane %v2403, 5
        %v2498 = vrot.slane %v2497, 4
        %v2499 = vrot.slane %v1977, 5
        %v2500 = vsel %vm1244, %v2498, %v2499
        %v2501 = vrot.slane %v2499, 4
        %v2502 = vrot.slane %v2003, 5
        %v2503 = vsel %vm1244, %v2501, %v2502
        %v2504 = vrot.slane %v2404, 5
        %v2505 = vrot.slane %v2504, 4
        %v2506 = vrot.slane %v1979, 5
        %v2507 = vsel %vm1244, %v2505, %v2506
        %v2508 = vrot.slane %v2506, 4
        %v2509 = vrot.slane %v2004, 5
        %v2510 = vsel %vm1244, %v2508, %v2509
        %v2511 = vrot.slane %v2405, 5
        %v2512 = vrot.slane %v2511, 4
        %v2513 = vrot.slane %v1981, 5
        %v2514 = vsel %vm1244, %v2512, %v2513
        %v2515 = vrot.slane %v2513, 4
        %v2516 = vrot.slane %v2005, 5
        %v2517 = vsel %vm1244, %v2515, %v2516
        %v2518 = vrot.slane %v2406, 5
        %v2519 = vrot.slane %v2518, 4
        %v2520 = vrot.slane %v1983, 5
        %v2521 = vsel %vm1244, %v2519, %v2520
        %v2522 = vrot.slane %v2520, 4
        %v2523 = vrot.slane %v2006, 5
        %v2524 = vsel %vm1244, %v2522, %v2523
        %v2525 = vrot.slane %v2407, 5
        %v2526 = vrot.slane %v2525, 4
        %v2527 = vrot.slane %v1985, 5
        %v2528 = vsel %vm1244, %v2526, %v2527
        %v2529 = vrot.slane %v2527, 4
        %v2530 = vrot.slane %v2007, 5
        %v2531 = vsel %vm1244, %v2529, %v2530
        %v2532 = vrot.slane %v2408, 5
        %v2533 = vrot.slane %v2532, 4
        %v2534 = vrot.slane %v1987, 5
        %v2535 = vsel %vm1244, %v2533, %v2534
        %v2536 = vrot.slane %v2534, 4
        %v2537 = vrot.slane %v2008, 5
        %v2538 = vsel %vm1244, %v2536, %v2537
        %v2539 = vrot.slane %v2409, 5
        %v2540 = vrot.slane %v2539, 4
        %v2541 = vrot.slane %v1989, 5
        %v2542 = vsel %vm1244, %v2540, %v2541
        %v2543 = vrot.slane %v2541, 4
        %v2544 = vrot.slane %v2009, 5
        %v2545 = vsel %vm1244, %v2543, %v2544
        %v2546 = vrot.slane %v2410, 5
        %v2547 = vrot.slane %v2546, 4
        %v2548 = vrot.slane %v1991, 5
        %v2549 = vsel %vm1244, %v2547, %v2548
        %v2550 = vrot.slane %v2548, 4
        %v2551 = vrot.slane %v2010, 5
        %v2552 = vsel %vm1244, %v2550, %v2551
        %v2553 = vrot.slane %v2411, 5
        %v2554 = vrot.slane %v2553, 4
        %v2555 = vrot.slane %v1993, 5
        %v2556 = vsel %vm1244, %v2554, %v2555
        %v2557 = vrot.slane %v2555, 4
        %v2558 = vrot.slane %v2011, 5
        %v2559 = vsel %vm1244, %v2557, %v2558
        %v2560 = vrot.slane %v2412, 5
        %v2561 = vrot.slane %v2560, 4
        %v2562 = vrot.slane %v1995, 5
        %v2563 = vsel %vm1244, %v2561, %v2562
        %v2564 = vrot.slane %v2562, 4
        %v2565 = vrot.slane %v2012, 5
        %v2566 = vsel %vm1244, %v2564, %v2565
        %v2567 = vrot.slane %v2413, 5
        %v2568 = vrot.slane %v2567, 4
        %v2569 = vrot.slane %v1997, 5
        %v2570 = vsel %vm1244, %v2568, %v2569
        %v2571 = vrot.slane %v2569, 4
        %v2572 = vrot.slane %v2013, 5
        %v2573 = vsel %vm1244, %v2571, %v2572
        %v2590 = vunpack.c.l.b16 %v743
        %v2591 = vunpack.c.l.b16 %v744
        %v2592 = vunpack.c.l.b16 %v745
        %v2593 = vunpack.c.l.b16 %v746
        %v2594 = vunpack.c.l.b16 %v747
        %v2595 = vunpack.c.l.b16 %v748
        %v2596 = vunpack.c.l.b16 %v749
        %v2597 = vunpack.c.l.b16 %v750
        %v2598 = vunpack.c.l.b16 %v751
        %v2599 = vunpack.c.l.b16 %v752
        %v2600 = vunpack.c.l.b16 %v753
        %v2601 = vunpack.c.l.b16 %v754
        %v2602 = vunpack.c.l.b16 %v755
        %v2603 = vunpack.c.l.b16 %v756
        %v2604 = vunpack.c.l.b16 %v757
        %v2605 = vunpack.c.l.b16 %v758
        %v2606 = vunpack.c.l.b16 %v759
        %v2607 = vunpack.c.l.b16 %v760
        %v2608 = vunpack.c.l.b16 %v761
        %v2609 = vunpack.c.l.b16 %v762
        %v2610 = vunpack.c.l.b16 %v763
        %v2611 = vunpack.c.l.b16 %v764
        %v2612 = vunpack.c.l.b16 %v765
        %v2613 = vunpack.c.l.b16 %v766
        %v2614 = vunpack.c.l.b16 %v767
        %v2615 = vunpack.c.l.b16 %v768
        %v2616 = vunpack.c.l.b16 %v769
        %v2617 = vunpack.c.l.b16 %v770
        %v2618 = vunpack.c.l.b16 %v771
        %v2619 = vunpack.c.l.b16 %v772
        %v2620 = vunpack.c.l.b16 %v773
        %v2621 = vunpack.c.l.b16 %v774
        %v2622 = vpack.c.b16 %v2591, %v2590
        %v2623 = vpack.c.b16 %v2593, %v2592
        %v2624 = vpack.c.b16 %v2595, %v2594
        %v2625 = vpack.c.b16 %v2597, %v2596
        %v2626 = vpack.c.b16 %v2599, %v2598
        %v2627 = vpack.c.b16 %v2601, %v2600
        %v2628 = vpack.c.b16 %v2603, %v2602
        %v2629 = vpack.c.b16 %v2605, %v2604
        %v2630 = vpack.c.b16 %v2607, %v2606
        %v2631 = vpack.c.b16 %v2609, %v2608
        %v2632 = vpack.c.b16 %v2611, %v2610
        %v2633 = vpack.c.b16 %v2613, %v2612
        %v2634 = vpack.c.b16 %v2615, %v2614
        %v2635 = vpack.c.b16 %v2617, %v2616
        %v2636 = vpack.c.b16 %v2619, %v2618
        %v2637 = vpack.c.b16 %v2621, %v2620
        %v2654 = vunpack.c.l.b16 %v807
        %v2655 = vunpack.c.l.b16 %v817
        %v2656 = vunpack.c.l.b16 %v831
        %v2657 = vunpack.c.l.b16 %v841
        %v2658 = vunpack.c.l.b16 %v855
        %v2659 = vunpack.c.l.b16 %v865
        %v2660 = vunpack.c.l.b16 %v879
        %v2661 = vunpack.c.l.b16 %v889
        %v2662 = vunpack.c.l.b16 %v903
        %v2663 = vunpack.c.l.b16 %v913
        %v2664 = vunpack.c.l.b16 %v927
        %v2665 = vunpack.c.l.b16 %v937
        %v2666 = vunpack.c.l.b16 %v951
        %v2667 = vunpack.c.l.b16 %v961
        %v2668 = vunpack.c.l.b16 %v975
        %v2669 = vunpack.c.l.b16 %v985
        %v2670 = vunpack.c.l.b16 %v999
        %v2671 = vunpack.c.l.b16 %v1009
        %v2672 = vunpack.c.l.b16 %v1023
        %v2673 = vunpack.c.l.b16 %v1033
        %v2674 = vunpack.c.l.b16 %v1047
        %v2675 = vunpack.c.l.b16 %v1057
        %v2676 = vunpack.c.l.b16 %v1071
        %v2677 = vunpack.c.l.b16 %v1081
        %v2678 = vunpack.c.l.b16 %v1095
        %v2679 = vunpack.c.l.b16 %v1105
        %v2680 = vunpack.c.l.b16 %v1119
        %v2681 = vunpack.c.l.b16 %v1129
        %v2682 = vunpack.c.l.b16 %v1143
        %v2683 = vunpack.c.l.b16 %v1153
        %v2684 = vunpack.c.l.b16 %v1167
        %v2685 = vunpack.c.l.b16 %v1177
        %v2686 = vpack.c.b16 %v2655, %v2654
        %v2687 = vpack.c.b16 %v2657, %v2656
        %v2688 = vpack.c.b16 %v2659, %v2658
        %v2689 = vpack.c.b16 %v2661, %v2660
        %v2690 = vpack.c.b16 %v2663, %v2662
        %v2691 = vpack.c.b16 %v2665, %v2664
        %v2692 = vpack.c.b16 %v2667, %v2666
        %v2693 = vpack.c.b16 %v2669, %v2668
        %v2694 = vpack.c.b16 %v2671, %v2670
        %v2695 = vpack.c.b16 %v2673, %v2672
        %v2696 = vpack.c.b16 %v2675, %v2674
        %v2697 = vpack.c.b16 %v2677, %v2676
        %v2698 = vpack.c.b16 %v2679, %v2678
        %v2699 = vpack.c.b16 %v2681, %v2680
        %v2700 = vpack.c.b16 %v2683, %v2682
        %v2701 = vpack.c.b16 %v2685, %v2684
        %v2718 = vunpack.c.l.b16 %v1248
        %v2719 = vunpack.c.l.b16 %v1251
        %v2720 = vunpack.c.l.b16 %v1255
        %v2721 = vunpack.c.l.b16 %v1258
        %v2722 = vunpack.c.l.b16 %v1262
        %v2723 = vunpack.c.l.b16 %v1265
        %v2724 = vunpack.c.l.b16 %v1269
        %v2725 = vunpack.c.l.b16 %v1272
        %v2726 = vunpack.c.l.b16 %v1276
        %v2727 = vunpack.c.l.b16 %v1279
        %v2728 = vunpack.c.l.b16 %v1283
        %v2729 = vunpack.c.l.b16 %v1286
        %v2730 = vunpack.c.l.b16 %v1290
        %v2731 = vunpack.c.l.b16 %v1293
        %v2732 = vunpack.c.l.b16 %v1297
        %v2733 = vunpack.c.l.b16 %v1300
        %v2734 = vunpack.c.l.b16 %v1304
        %v2735 = vunpack.c.l.b16 %v1307
        %v2736 = vunpack.c.l.b16 %v1311
        %v2737 = vunpack.c.l.b16 %v1314
        %v2738 = vunpack.c.l.b16 %v1318
        %v2739 = vunpack.c.l.b16 %v1321
        %v2740 = vunpack.c.l.b16 %v1325
        %v2741 = vunpack.c.l.b16 %v1328
        %v2742 = vunpack.c.l.b16 %v1332
        %v2743 = vunpack.c.l.b16 %v1335
        %v2744 = vunpack.c.l.b16 %v1339
        %v2745 = vunpack.c.l.b16 %v1342
        %v2746 = vunpack.c.l.b16 %v1346
        %v2747 = vunpack.c.l.b16 %v1349
        %v2748 = vunpack.c.l.b16 %v1353
        %v2749 = vunpack.c.l.b16 %v1356
        %v2750 = vpack.c.b16 %v2719, %v2718
        %v2751 = vpack.c.b16 %v2721, %v2720
        %v2752 = vpack.c.b16 %v2723, %v2722
        %v2753 = vpack.c.b16 %v2725, %v2724
        %v2754 = vpack.c.b16 %v2727, %v2726
        %v2755 = vpack.c.b16 %v2729, %v2728
        %v2756 = vpack.c.b16 %v2731, %v2730
        %v2757 = vpack.c.b16 %v2733, %v2732
        %v2758 = vpack.c.b16 %v2735, %v2734
        %v2759 = vpack.c.b16 %v2737, %v2736
        %v2760 = vpack.c.b16 %v2739, %v2738
        %v2761 = vpack.c.b16 %v2741, %v2740
        %v2762 = vpack.c.b16 %v2743, %v2742
        %v2763 = vpack.c.b16 %v2745, %v2744
        %v2764 = vpack.c.b16 %v2747, %v2746
        %v2765 = vpack.c.b16 %v2749, %v2748
        %v2798 = vunpack.c.l.b16 %v1357
        %v2799 = vunpack.c.l.b16 %v1358
        %v2800 = vunpack.c.l.b16 %v1359
        %v2801 = vunpack.c.l.b16 %v1360
        %v2802 = vunpack.c.l.b16 %v1361
        %v2803 = vunpack.c.l.b16 %v1362
        %v2804 = vunpack.c.l.b16 %v1363
        %v2805 = vunpack.c.l.b16 %v1364
        %v2806 = vunpack.c.l.b16 %v1365
        %v2807 = vunpack.c.l.b16 %v1366
        %v2808 = vunpack.c.l.b16 %v1367
        %v2809 = vunpack.c.l.b16 %v1368
        %v2810 = vunpack.c.l.b16 %v1369
        %v2811 = vunpack.c.l.b16 %v1370
        %v2812 = vunpack.c.l.b16 %v1371
        %v2813 = vunpack.c.l.b16 %v1372
        %v2814 = vunpack.c.l.b16 %v1373
        %v2815 = vunpack.c.l.b16 %v1374
        %v2816 = vunpack.c.l.b16 %v1375
        %v2817 = vunpack.c.l.b16 %v1376
        %v2818 = vunpack.c.l.b16 %v1377
        %v2819 = vunpack.c.l.b16 %v1378
        %v2820 = vunpack.c.l.b16 %v1379
        %v2821 = vunpack.c.l.b16 %v1380
        %v2822 = vunpack.c.l.b16 %v1381
        %v2823 = vunpack.c.l.b16 %v1382
        %v2824 = vunpack.c.l.b16 %v1383
        %v2825 = vunpack.c.l.b16 %v1384
        %v2826 = vunpack.c.l.b16 %v1385
        %v2827 = vunpack.c.l.b16 %v1386
        %v2828 = vunpack.c.l.b16 %v1387
        %v2829 = vunpack.c.l.b16 %v1388
        %v2830 = vpack.c.b16 %v2799, %v2798
        %v2831 = vpack.c.b16 %v2801, %v2800
        %v2832 = vpack.c.b16 %v2803, %v2802
        %v2833 = vpack.c.b16 %v2805, %v2804
        %v2834 = vpack.c.b16 %v2807, %v2806
        %v2835 = vpack.c.b16 %v2809, %v2808
        %v2836 = vpack.c.b16 %v2811, %v2810
        %v2837 = vpack.c.b16 %v2813, %v2812
        %v2838 = vpack.c.b16 %v2815, %v2814
        %v2839 = vpack.c.b16 %v2817, %v2816
        %v2840 = vpack.c.b16 %v2819, %v2818
        %v2841 = vpack.c.b16 %v2821, %v2820
        %v2842 = vpack.c.b16 %v2823, %v2822
        %v2843 = vpack.c.b16 %v2825, %v2824
        %v2844 = vpack.c.b16 %v2827, %v2826
        %v2845 = vpack.c.b16 %v2829, %v2828
        %v2862 = vunpack.c.l.b16 %v1418
        %v2863 = vunpack.c.l.b16 %v1428
        %v2864 = vunpack.c.l.b16 %v1442
        %v2865 = vunpack.c.l.b16 %v1452
        %v2866 = vunpack.c.l.b16 %v1466
        %v2867 = vunpack.c.l.b16 %v1476
        %v2868 = vunpack.c.l.b16 %v1490
        %v2869 = vunpack.c.l.b16 %v1500
        %v2870 = vunpack.c.l.b16 %v1514
        %v2871 = vunpack.c.l.b16 %v1524
        %v2872 = vunpack.c.l.b16 %v1538
        %v2873 = vunpack.c.l.b16 %v1548
        %v2874 = vunpack.c.l.b16 %v1562
        %v2875 = vunpack.c.l.b16 %v1572
        %v2876 = vunpack.c.l.b16 %v1586
        %v2877 = vunpack.c.l.b16 %v1596
        %v2878 = vunpack.c.l.b16 %v1610
        %v2879 = vunpack.c.l.b16 %v1620
        %v2880 = vunpack.c.l.b16 %v1634
        %v2881 = vunpack.c.l.b16 %v1644
        %v2882 = vunpack.c.l.b16 %v1658
        %v2883 = vunpack.c.l.b16 %v1668
        %v2884 = vunpack.c.l.b16 %v1682
        %v2885 = vunpack.c.l.b16 %v1692
        %v2886 = vunpack.c.l.b16 %v1706
        %v2887 = vunpack.c.l.b16 %v1716
        %v2888 = vunpack.c.l.b16 %v1730
        %v2889 = vunpack.c.l.b16 %v1740
        %v2890 = vunpack.c.l.b16 %v1754
        %v2891 = vunpack.c.l.b16 %v1764
        %v2892 = vunpack.c.l.b16 %v1778
        %v2893 = vunpack.c.l.b16 %v1788
        %v2894 = vpack.c.b16 %v2863, %v2862
        %v2895 = vpack.c.b16 %v2865, %v2864
        %v2896 = vpack.c.b16 %v2867, %v2866
        %v2897 = vpack.c.b16 %v2869, %v2868
        %v2898 = vpack.c.b16 %v2871, %v2870
        %v2899 = vpack.c.b16 %v2873, %v2872
        %v2900 = vpack.c.b16 %v2875, %v2874
        %v2901 = vpack.c.b16 %v2877, %v2876
        %v2902 = vpack.c.b16 %v2879, %v2878
        %v2903 = vpack.c.b16 %v2881, %v2880
        %v2904 = vpack.c.b16 %v2883, %v2882
        %v2905 = vpack.c.b16 %v2885, %v2884
        %v2906 = vpack.c.b16 %v2887, %v2886
        %v2907 = vpack.c.b16 %v2889, %v2888
        %v2908 = vpack.c.b16 %v2891, %v2890
        %v2909 = vpack.c.b16 %v2893, %v2892
        %v2926 = vunpack.c.l.b16 %v1856
        %v2927 = vunpack.c.l.b16 %v1859
        %v2928 = vunpack.c.l.b16 %v1863
        %v2929 = vunpack.c.l.b16 %v1866
        %v2930 = vunpack.c.l.b16 %v1870
        %v2931 = vunpack.c.l.b16 %v1873
        %v2932 = vunpack.c.l.b16 %v1877
        %v2933 = vunpack.c.l.b16 %v1880
        %v2934 = vunpack.c.l.b16 %v1884
        %v2935 = vunpack.c.l.b16 %v1887
        %v2936 = vunpack.c.l.b16 %v1891
        %v2937 = vunpack.c.l.b16 %v1894
        %v2938 = vunpack.c.l.b16 %v1898
        %v2939 = vunpack.c.l.b16 %v1901
        %v2940 = vunpack.c.l.b16 %v1905
        %v2941 = vunpack.c.l.b16 %v1908
        %v2942 = vunpack.c.l.b16 %v1912
        %v2943 = vunpack.c.l.b16 %v1915
        %v2944 = vunpack.c.l.b16 %v1919
        %v2945 = vunpack.c.l.b16 %v1922
        %v2946 = vunpack.c.l.b16 %v1926
        %v2947 = vunpack.c.l.b16 %v1929
        %v2948 = vunpack.c.l.b16 %v1933
        %v2949 = vunpack.c.l.b16 %v1936
        %v2950 = vunpack.c.l.b16 %v1940
        %v2951 = vunpack.c.l.b16 %v1943
        %v2952 = vunpack.c.l.b16 %v1947
        %v2953 = vunpack.c.l.b16 %v1950
        %v2954 = vunpack.c.l.b16 %v1954
        %v2955 = vunpack.c.l.b16 %v1957
        %v2956 = vunpack.c.l.b16 %v1961
        %v2957 = vunpack.c.l.b16 %v1964
        %v2958 = vpack.c.b16 %v2927, %v2926
        %v2959 = vpack.c.b16 %v2929, %v2928
        %v2960 = vpack.c.b16 %v2931, %v2930
        %v2961 = vpack.c.b16 %v2933, %v2932
        %v2962 = vpack.c.b16 %v2935, %v2934
        %v2963 = vpack.c.b16 %v2937, %v2936
        %v2964 = vpack.c.b16 %v2939, %v2938
        %v2965 = vpack.c.b16 %v2941, %v2940
        %v2966 = vpack.c.b16 %v2943, %v2942
        %v2967 = vpack.c.b16 %v2945, %v2944
        %v2968 = vpack.c.b16 %v2947, %v2946
        %v2969 = vpack.c.b16 %v2949, %v2948
        %v2970 = vpack.c.b16 %v2951, %v2950
        %v2971 = vpack.c.b16 %v2953, %v2952
        %v2972 = vpack.c.b16 %v2955, %v2954
        %v2973 = vpack.c.b16 %v2957, %v2956
        %v3006 = vunpack.c.l.b16 %v1966
        %v3007 = vunpack.c.l.b16 %v1967
        %v3008 = vunpack.c.l.b16 %v1968
        %v3009 = vunpack.c.l.b16 %v1969
        %v3010 = vunpack.c.l.b16 %v1970
        %v3011 = vunpack.c.l.b16 %v1971
        %v3012 = vunpack.c.l.b16 %v1972
        %v3013 = vunpack.c.l.b16 %v1973
        %v3014 = vunpack.c.l.b16 %v1974
        %v3015 = vunpack.c.l.b16 %v1975
        %v3016 = vunpack.c.l.b16 %v1976
        %v3017 = vunpack.c.l.b16 %v1977
        %v3018 = vunpack.c.l.b16 %v1978
        %v3019 = vunpack.c.l.b16 %v1979
        %v3020 = vunpack.c.l.b16 %v1980
        %v3021 = vunpack.c.l.b16 %v1981
        %v3022 = vunpack.c.l.b16 %v1982
        %v3023 = vunpack.c.l.b16 %v1983
        %v3024 = vunpack.c.l.b16 %v1984
        %v3025 = vunpack.c.l.b16 %v1985
        %v3026 = vunpack.c.l.b16 %v1986
        %v3027 = vunpack.c.l.b16 %v1987
        %v3028 = vunpack.c.l.b16 %v1988
        %v3029 = vunpack.c.l.b16 %v1989
        %v3030 = vunpack.c.l.b16 %v1990
        %v3031 = vunpack.c.l.b16 %v1991
        %v3032 = vunpack.c.l.b16 %v1992
        %v3033 = vunpack.c.l.b16 %v1993
        %v3034 = vunpack.c.l.b16 %v1994
        %v3035 = vunpack.c.l.b16 %v1995
        %v3036 = vunpack.c.l.b16 %v1996
        %v3037 = vunpack.c.l.b16 %v1997
        %v3038 = vpack.c.b16 %v3007, %v3006
        %v3039 = vpack.c.b16 %v3009, %v3008
        %v3040 = vpack.c.b16 %v3011, %v3010
        %v3041 = vpack.c.b16 %v3013, %v3012
        %v3042 = vpack.c.b16 %v3015, %v3014
        %v3043 = vpack.c.b16 %v3017, %v3016
        %v3044 = vpack.c.b16 %v3019, %v3018
        %v3045 = vpack.c.b16 %v3021, %v3020
        %v3046 = vpack.c.b16 %v3023, %v3022
        %v3047 = vpack.c.b16 %v3025, %v3024
        %v3048 = vpack.c.b16 %v3027, %v3026
        %v3049 = vpack.c.b16 %v3029, %v3028
        %v3050 = vpack.c.b16 %v3031, %v3030
        %v3051 = vpack.c.b16 %v3033, %v3032
        %v3052 = vpack.c.b16 %v3035, %v3034
        %v3053 = vpack.c.b16 %v3037, %v3036
        %v3070 = vunpack.c.l.b16 %v2027
        %v3071 = vunpack.c.l.b16 %v2037
        %v3072 = vunpack.c.l.b16 %v2051
        %v3073 = vunpack.c.l.b16 %v2061
        %v3074 = vunpack.c.l.b16 %v2075
        %v3075 = vunpack.c.l.b16 %v2085
        %v3076 = vunpack.c.l.b16 %v2099
        %v3077 = vunpack.c.l.b16 %v2109
        %v3078 = vunpack.c.l.b16 %v2123
        %v3079 = vunpack.c.l.b16 %v2133
        %v3080 = vunpack.c.l.b16 %v2147
        %v3081 = vunpack.c.l.b16 %v2157
        %v3082 = vunpack.c.l.b16 %v2171
        %v3083 = vunpack.c.l.b16 %v2181
        %v3084 = vunpack.c.l.b16 %v2195
        %v3085 = vunpack.c.l.b16 %v2205
        %v3086 = vunpack.c.l.b16 %v2219
        %v3087 = vunpack.c.l.b16 %v2229
        %v3088 = vunpack.c.l.b16 %v2243
        %v3089 = vunpack.c.l.b16 %v2253
        %v3090 = vunpack.c.l.b16 %v2267
        %v3091 = vunpack.c.l.b16 %v2277
        %v3092 = vunpack.c.l.b16 %v2291
        %v3093 = vunpack.c.l.b16 %v2301
        %v3094 = vunpack.c.l.b16 %v2315
        %v3095 = vunpack.c.l.b16 %v2325
        %v3096 = vunpack.c.l.b16 %v2339
        %v3097 = vunpack.c.l.b16 %v2349
        %v3098 = vunpack.c.l.b16 %v2363
        %v3099 = vunpack.c.l.b16 %v2373
        %v3100 = vunpack.c.l.b16 %v2387
        %v3101 = vunpack.c.l.b16 %v2397
        %v3102 = vpack.c.b16 %v3071, %v3070
        %v3103 = vpack.c.b16 %v3073, %v3072
        %v3104 = vpack.c.b16 %v3075, %v3074
        %v3105 = vpack.c.b16 %v3077, %v3076
        %v3106 = vpack.c.b16 %v3079, %v3078
        %v3107 = vpack.c.b16 %v3081, %v3080
        %v3108 = vpack.c.b16 %v3083, %v3082
        %v3109 = vpack.c.b16 %v3085, %v3084
        %v3110 = vpack.c.b16 %v3087, %v3086
        %v3111 = vpack.c.b16 %v3089, %v3088
        %v3112 = vpack.c.b16 %v3091, %v3090
        %v3113 = vpack.c.b16 %v3093, %v3092
        %v3114 = vpack.c.b16 %v3095, %v3094
        %v3115 = vpack.c.b16 %v3097, %v3096
        %v3116 = vpack.c.b16 %v3099, %v3098
        %v3117 = vpack.c.b16 %v3101, %v3100
        %v3134 = vunpack.c.l.b16 %v2465
        %v3135 = vunpack.c.l.b16 %v2468
        %v3136 = vunpack.c.l.b16 %v2472
        %v3137 = vunpack.c.l.b16 %v2475
        %v3138 = vunpack.c.l.b16 %v2479
        %v3139 = vunpack.c.l.b16 %v2482
        %v3140 = vunpack.c.l.b16 %v2486
        %v3141 = vunpack.c.l.b16 %v2489
        %v3142 = vunpack.c.l.b16 %v2493
        %v3143 = vunpack.c.l.b16 %v2496
        %v3144 = vunpack.c.l.b16 %v2500
        %v3145 = vunpack.c.l.b16 %v2503
        %v3146 = vunpack.c.l.b16 %v2507
        %v3147 = vunpack.c.l.b16 %v2510
        %v3148 = vunpack.c.l.b16 %v2514
        %v3149 = vunpack.c.l.b16 %v2517
        %v3150 = vunpack.c.l.b16 %v2521
        %v3151 = vunpack.c.l.b16 %v2524
        %v3152 = vunpack.c.l.b16 %v2528
        %v3153 = vunpack.c.l.b16 %v2531
        %v3154 = vunpack.c.l.b16 %v2535
        %v3155 = vunpack.c.l.b16 %v2538
        %v3156 = vunpack.c.l.b16 %v2542
        %v3157 = vunpack.c.l.b16 %v2545
        %v3158 = vunpack.c.l.b16 %v2549
        %v3159 = vunpack.c.l.b16 %v2552
        %v3160 = vunpack.c.l.b16 %v2556
        %v3161 = vunpack.c.l.b16 %v2559
        %v3162 = vunpack.c.l.b16 %v2563
        %v3163 = vunpack.c.l.b16 %v2566
        %v3164 = vunpack.c.l.b16 %v2570
        %v3165 = vunpack.c.l.b16 %v2573
        %v3166 = vpack.c.b16 %v3135, %v3134
        %v3167 = vpack.c.b16 %v3137, %v3136
        %v3168 = vpack.c.b16 %v3139, %v3138
        %v3169 = vpack.c.b16 %v3141, %v3140
        %v3170 = vpack.c.b16 %v3143, %v3142
        %v3171 = vpack.c.b16 %v3145, %v3144
        %v3172 = vpack.c.b16 %v3147, %v3146
        %v3173 = vpack.c.b16 %v3149, %v3148
        %v3174 = vpack.c.b16 %v3151, %v3150
        %v3175 = vpack.c.b16 %v3153, %v3152
        %v3176 = vpack.c.b16 %v3155, %v3154
        %v3177 = vpack.c.b16 %v3157, %v3156
        %v3178 = vpack.c.b16 %v3159, %v3158
        %v3179 = vpack.c.b16 %v3161, %v3160
        %v3180 = vpack.c.b16 %v3163, %v3162
        %v3181 = vpack.c.b16 %v3165, %v3164
        %v3198 = vld [vmem:[#allocation6] sm:$0xf]
        %v3199 = vld [vmem:[#allocation6 + $0x4] sm:$0xf]
        %v3200 = vld [vmem:[#allocation6 + $0x8] sm:$0xf]
        %v3201 = vld [vmem:[#allocation6 + $0xc] sm:$0xf]
        %v3202 = vld [vmem:[#allocation6 + $0x10] sm:$0xf]
        %v3203 = vld [vmem:[#allocation6 + $0x14] sm:$0xf]
        %v3204 = vld [vmem:[#allocation6 + $0x18] sm:$0xf]
        %v3205 = vld [vmem:[#allocation6 + $0x1c] sm:$0xf]
        %v3206 = vld [vmem:[#allocation6 + $0x20] sm:$0xf]
        %v3207 = vld [vmem:[#allocation6 + $0x24] sm:$0xf]
        %v3208 = vld [vmem:[#allocation6 + $0x28] sm:$0xf]
        %v3209 = vld [vmem:[#allocation6 + $0x2c] sm:$0xf]
        %v3210 = vld [vmem:[#allocation6 + $0x30] sm:$0xf]
        %v3211 = vld [vmem:[#allocation6 + $0x34] sm:$0xf]
        %v3212 = vld [vmem:[#allocation6 + $0x38] sm:$0xf]
        %v3213 = vld [vmem:[#allocation6 + $0x3c] sm:$0xf]
        %v3214 = vld [vmem:[#allocation6 + $0x40] sm:$0xf]
        %v3215 = vld [vmem:[#allocation6 + $0x44] sm:$0xf]
        %v3216 = vld [vmem:[#allocation6 + $0x48] sm:$0xf]
        %v3217 = vld [vmem:[#allocation6 + $0x4c] sm:$0xf]
        %v3218 = vld [vmem:[#allocation6 + $0x50] sm:$0xf]
        %v3219 = vld [vmem:[#allocation6 + $0x54] sm:$0xf]
        %v3220 = vld [vmem:[#allocation6 + $0x58] sm:$0xf]
        %v3221 = vld [vmem:[#allocation6 + $0x5c] sm:$0xf]
        %v3222 = vld [vmem:[#allocation6 + $0x60] sm:$0xf]
        %v3223 = vld [vmem:[#allocation6 + $0x64] sm:$0xf]
        %v3224 = vld [vmem:[#allocation6 + $0x68] sm:$0xf]
        %v3225 = vld [vmem:[#allocation6 + $0x6c] sm:$0xf]
        %v3226 = vld [vmem:[#allocation6 + $0x70] sm:$0xf]
        %v3227 = vld [vmem:[#allocation6 + $0x74] sm:$0xf]
        %v3228 = vld [vmem:[#allocation6 + $0x78] sm:$0xf]
        %v3229 = vld [vmem:[#allocation6 + $0x7c] sm:$0xf]
        %v3230 = vld [vmem:[#allocation6 + $0x80] sm:$0xf]
        %v3231 = vld [vmem:[#allocation6 + $0x84] sm:$0xf]
        %v3232 = vld [vmem:[#allocation6 + $0x88] sm:$0xf]
        %v3233 = vld [vmem:[#allocation6 + $0x8c] sm:$0xf]
        %v3234 = vld [vmem:[#allocation6 + $0x90] sm:$0xf]
        %v3235 = vld [vmem:[#allocation6 + $0x94] sm:$0xf]
        %v3236 = vld [vmem:[#allocation6 + $0x98] sm:$0xf]
        %v3237 = vld [vmem:[#allocation6 + $0x9c] sm:$0xf]
        %v3238 = vld [vmem:[#allocation6 + $0xa0] sm:$0xf]
        %v3239 = vld [vmem:[#allocation6 + $0xa4] sm:$0xf]
        %v3240 = vld [vmem:[#allocation6 + $0xa8] sm:$0xf]
        %v3241 = vld [vmem:[#allocation6 + $0xac] sm:$0xf]
        %v3242 = vld [vmem:[#allocation6 + $0xb0] sm:$0xf]
        %v3243 = vld [vmem:[#allocation6 + $0xb4] sm:$0xf]
        %v3244 = vld [vmem:[#allocation6 + $0xb8] sm:$0xf]
        %v3245 = vld [vmem:[#allocation6 + $0xbc] sm:$0xf]
        %v3246 = vld [vmem:[#allocation6 + $0xc0] sm:$0xf]
        %v3247 = vld [vmem:[#allocation6 + $0xc4] sm:$0xf]
        %v3248 = vld [vmem:[#allocation6 + $0xc8] sm:$0xf]
        %v3249 = vld [vmem:[#allocation6 + $0xcc] sm:$0xf]
        %v3250 = vld [vmem:[#allocation6 + $0xd0] sm:$0xf]
        %v3251 = vld [vmem:[#allocation6 + $0xd4] sm:$0xf]
        %v3252 = vld [vmem:[#allocation6 + $0xd8] sm:$0xf]
        %v3253 = vld [vmem:[#allocation6 + $0xdc] sm:$0xf]
        %v3254 = vld [vmem:[#allocation6 + $0xe0] sm:$0xf]
        %v3255 = vld [vmem:[#allocation6 + $0xe4] sm:$0xf]
        %v3256 = vld [vmem:[#allocation6 + $0xe8] sm:$0xf]
        %v3257 = vld [vmem:[#allocation6 + $0xec] sm:$0xf]
        %v3258 = vld [vmem:[#allocation6 + $0xf0] sm:$0xf]
        %v3259 = vld [vmem:[#allocation6 + $0xf4] sm:$0xf]
        %v3260 = vld [vmem:[#allocation6 + $0xf8] sm:$0xf]
        %v3261 = vld [vmem:[#allocation6 + $0xfc] sm:$0xf]
        %v3262 = vld [vmem:[#allocation6 + $0x100] sm:$0xf]
        %v3263 = vld [vmem:[#allocation6 + $0x104] sm:$0xf]
        %v3264 = vld [vmem:[#allocation6 + $0x108] sm:$0xf]
        %v3265 = vld [vmem:[#allocation6 + $0x10c] sm:$0xf]
        %v3266 = vld [vmem:[#allocation6 + $0x110] sm:$0xf]
        %v3267 = vld [vmem:[#allocation6 + $0x114] sm:$0xf]
        %v3268 = vld [vmem:[#allocation6 + $0x118] sm:$0xf]
        %v3269 = vld [vmem:[#allocation6 + $0x11c] sm:$0xf]
        %v3270 = vld [vmem:[#allocation6 + $0x120] sm:$0xf]
        %v3271 = vld [vmem:[#allocation6 + $0x124] sm:$0xf]
        %v3272 = vld [vmem:[#allocation6 + $0x128] sm:$0xf]
        %v3273 = vld [vmem:[#allocation6 + $0x12c] sm:$0xf]
        %v3274 = vld [vmem:[#allocation6 + $0x130] sm:$0xf]
        %v3275 = vld [vmem:[#allocation6 + $0x134] sm:$0xf]
        %v3276 = vld [vmem:[#allocation6 + $0x138] sm:$0xf]
        %v3277 = vld [vmem:[#allocation6 + $0x13c] sm:$0xf]
        %v3278 = vld [vmem:[#allocation6 + $0x140] sm:$0xf]
        %v3279 = vld [vmem:[#allocation6 + $0x144] sm:$0xf]
        %v3280 = vld [vmem:[#allocation6 + $0x148] sm:$0xf]
        %v3281 = vld [vmem:[#allocation6 + $0x14c] sm:$0xf]
        %v3282 = vld [vmem:[#allocation6 + $0x150] sm:$0xf]
        %v3283 = vld [vmem:[#allocation6 + $0x154] sm:$0xf]
        %v3284 = vld [vmem:[#allocation6 + $0x158] sm:$0xf]
        %v3285 = vld [vmem:[#allocation6 + $0x15c] sm:$0xf]
        %v3286 = vld [vmem:[#allocation6 + $0x160] sm:$0xf]
        %v3287 = vld [vmem:[#allocation6 + $0x164] sm:$0xf]
        %v3288 = vld [vmem:[#allocation6 + $0x168] sm:$0xf]
        %v3289 = vld [vmem:[#allocation6 + $0x16c] sm:$0xf]
        %v3290 = vld [vmem:[#allocation6 + $0x170] sm:$0xf]
        %v3291 = vld [vmem:[#allocation6 + $0x174] sm:$0xf]
        %v3292 = vld [vmem:[#allocation6 + $0x178] sm:$0xf]
        %v3293 = vld [vmem:[#allocation6 + $0x17c] sm:$0xf]
        %v3294 = vld [vmem:[#allocation6 + $0x180] sm:$0xf]
        %v3295 = vld [vmem:[#allocation6 + $0x184] sm:$0xf]
        %v3296 = vld [vmem:[#allocation6 + $0x188] sm:$0xf]
        %v3297 = vld [vmem:[#allocation6 + $0x18c] sm:$0xf]
        %v3298 = vld [vmem:[#allocation6 + $0x190] sm:$0xf]
        %v3299 = vld [vmem:[#allocation6 + $0x194] sm:$0xf]
        %v3300 = vld [vmem:[#allocation6 + $0x198] sm:$0xf]
        %v3301 = vld [vmem:[#allocation6 + $0x19c] sm:$0xf]
        %v3302 = vld [vmem:[#allocation6 + $0x1a0] sm:$0xf]
        %v3303 = vld [vmem:[#allocation6 + $0x1a4] sm:$0xf]
        %v3304 = vld [vmem:[#allocation6 + $0x1a8] sm:$0xf]
        %v3305 = vld [vmem:[#allocation6 + $0x1ac] sm:$0xf]
        %v3306 = vld [vmem:[#allocation6 + $0x1b0] sm:$0xf]
        %v3307 = vld [vmem:[#allocation6 + $0x1b4] sm:$0xf]
        %v3308 = vld [vmem:[#allocation6 + $0x1b8] sm:$0xf]
        %v3309 = vld [vmem:[#allocation6 + $0x1bc] sm:$0xf]
        %v3310 = vld [vmem:[#allocation6 + $0x1c0] sm:$0xf]
        %v3311 = vld [vmem:[#allocation6 + $0x1c4] sm:$0xf]
        %v3312 = vld [vmem:[#allocation6 + $0x1c8] sm:$0xf]
        %v3313 = vld [vmem:[#allocation6 + $0x1cc] sm:$0xf]
        %v3314 = vld [vmem:[#allocation6 + $0x1d0] sm:$0xf]
        %v3315 = vld [vmem:[#allocation6 + $0x1d4] sm:$0xf]
        %v3316 = vld [vmem:[#allocation6 + $0x1d8] sm:$0xf]
        %v3317 = vld [vmem:[#allocation6 + $0x1dc] sm:$0xf]
        %v3318 = vld [vmem:[#allocation6 + $0x1e0] sm:$0xf]
        %v3319 = vld [vmem:[#allocation6 + $0x1e4] sm:$0xf]
        %v3320 = vld [vmem:[#allocation6 + $0x1e8] sm:$0xf]
        %v3321 = vld [vmem:[#allocation6 + $0x1ec] sm:$0xf]
        %v3322 = vld [vmem:[#allocation6 + $0x1f0] sm:$0xf]
        %v3323 = vld [vmem:[#allocation6 + $0x1f4] sm:$0xf]
        %v3324 = vld [vmem:[#allocation6 + $0x1f8] sm:$0xf]
        %v3325 = vld [vmem:[#allocation6 + $0x1fc] sm:$0xf]
        %v3326 = vld [vmem:[#allocation6 + $0x200] sm:$0xf]
        %v3327 = vld [vmem:[#allocation6 + $0x204] sm:$0xf]
        %v3328 = vld [vmem:[#allocation6 + $0x208] sm:$0xf]
        %v3329 = vld [vmem:[#allocation6 + $0x20c] sm:$0xf]
        %v3330 = vld [vmem:[#allocation6 + $0x210] sm:$0xf]
        %v3331 = vld [vmem:[#allocation6 + $0x214] sm:$0xf]
        %v3332 = vld [vmem:[#allocation6 + $0x218] sm:$0xf]
        %v3333 = vld [vmem:[#allocation6 + $0x21c] sm:$0xf]
        %v3334 = vld [vmem:[#allocation6 + $0x220] sm:$0xf]
        %v3335 = vld [vmem:[#allocation6 + $0x224] sm:$0xf]
        %v3336 = vld [vmem:[#allocation6 + $0x228] sm:$0xf]
        %v3337 = vld [vmem:[#allocation6 + $0x22c] sm:$0xf]
        %v3338 = vld [vmem:[#allocation6 + $0x230] sm:$0xf]
        %v3339 = vld [vmem:[#allocation6 + $0x234] sm:$0xf]
        %v3340 = vld [vmem:[#allocation6 + $0x238] sm:$0xf]
        %v3341 = vld [vmem:[#allocation6 + $0x23c] sm:$0xf]
        %v3486 = vunpack.c.l.b16 %v3198
        %v3487 = vunpack.c.l.b16 %v3199
        %v3488 = vunpack.c.l.b16 %v3200
        %v3489 = vunpack.c.l.b16 %v3201
        %v3490 = vunpack.c.l.b16 %v3202
        %v3491 = vunpack.c.l.b16 %v3203
        %v3492 = vunpack.c.l.b16 %v3204
        %v3493 = vunpack.c.l.b16 %v3205
        %v3494 = vunpack.c.l.b16 %v3206
        %v3495 = vunpack.c.l.b16 %v3207
        %v3496 = vunpack.c.l.b16 %v3208
        %v3497 = vunpack.c.l.b16 %v3209
        %v3498 = vunpack.c.l.b16 %v3210
        %v3499 = vunpack.c.l.b16 %v3211
        %v3500 = vunpack.c.l.b16 %v3212
        %v3501 = vunpack.c.l.b16 %v3213
        %v3502 = vunpack.c.l.b16 %v3214
        %v3503 = vunpack.c.l.b16 %v3215
        %v3504 = vunpack.c.l.b16 %v3216
        %v3505 = vunpack.c.l.b16 %v3217
        %v3506 = vunpack.c.l.b16 %v3218
        %v3507 = vunpack.c.l.b16 %v3219
        %v3508 = vunpack.c.l.b16 %v3220
        %v3509 = vunpack.c.l.b16 %v3221
        %v3510 = vunpack.c.l.b16 %v3222
        %v3511 = vunpack.c.l.b16 %v3223
        %v3512 = vunpack.c.l.b16 %v3224
        %v3513 = vunpack.c.l.b16 %v3225
        %v3514 = vunpack.c.l.b16 %v3226
        %v3515 = vunpack.c.l.b16 %v3227
        %v3516 = vunpack.c.l.b16 %v3228
        %v3517 = vunpack.c.l.b16 %v3229
        %v3518 = vunpack.c.l.b16 %v3230
        %v3519 = vunpack.c.l.b16 %v3231
        %v3520 = vunpack.c.l.b16 %v3232
        %v3521 = vunpack.c.l.b16 %v3233
        %v3522 = vunpack.c.l.b16 %v3234
        %v3523 = vunpack.c.l.b16 %v3235
        %v3524 = vunpack.c.l.b16 %v3236
        %v3525 = vunpack.c.l.b16 %v3237
        %v3526 = vunpack.c.l.b16 %v3238
        %v3527 = vunpack.c.l.b16 %v3239
        %v3528 = vunpack.c.l.b16 %v3240
        %v3529 = vunpack.c.l.b16 %v3241
        %v3530 = vunpack.c.l.b16 %v3242
        %v3531 = vunpack.c.l.b16 %v3243
        %v3532 = vunpack.c.l.b16 %v3244
        %v3533 = vunpack.c.l.b16 %v3245
        %v3534 = vunpack.c.l.b16 %v3246
        %v3535 = vunpack.c.l.b16 %v3247
        %v3536 = vunpack.c.l.b16 %v3248
        %v3537 = vunpack.c.l.b16 %v3249
        %v3538 = vunpack.c.l.b16 %v3250
        %v3539 = vunpack.c.l.b16 %v3251
        %v3540 = vunpack.c.l.b16 %v3252
        %v3541 = vunpack.c.l.b16 %v3253
        %v3542 = vunpack.c.l.b16 %v3254
        %v3543 = vunpack.c.l.b16 %v3255
        %v3544 = vunpack.c.l.b16 %v3256
        %v3545 = vunpack.c.l.b16 %v3257
        %v3546 = vunpack.c.l.b16 %v3258
        %v3547 = vunpack.c.l.b16 %v3259
        %v3548 = vunpack.c.l.b16 %v3260
        %v3549 = vunpack.c.l.b16 %v3261
        %v3550 = vunpack.c.l.b16 %v3262
        %v3551 = vunpack.c.l.b16 %v3263
        %v3552 = vunpack.c.l.b16 %v3264
        %v3553 = vunpack.c.l.b16 %v3265
        %v3554 = vunpack.c.l.b16 %v3266
        %v3555 = vunpack.c.l.b16 %v3267
        %v3556 = vunpack.c.l.b16 %v3268
        %v3557 = vunpack.c.l.b16 %v3269
        %v3558 = vunpack.c.l.b16 %v3270
        %v3559 = vunpack.c.l.b16 %v3271
        %v3560 = vunpack.c.l.b16 %v3272
        %v3561 = vunpack.c.l.b16 %v3273
        %v3562 = vunpack.c.l.b16 %v3274
        %v3563 = vunpack.c.l.b16 %v3275
        %v3564 = vunpack.c.l.b16 %v3276
        %v3565 = vunpack.c.l.b16 %v3277
        %v3566 = vunpack.c.l.b16 %v3278
        %v3567 = vunpack.c.l.b16 %v3279
        %v3568 = vunpack.c.l.b16 %v3280
        %v3569 = vunpack.c.l.b16 %v3281
        %v3570 = vunpack.c.l.b16 %v3282
        %v3571 = vunpack.c.l.b16 %v3283
        %v3572 = vunpack.c.l.b16 %v3284
        %v3573 = vunpack.c.l.b16 %v3285
        %v3574 = vunpack.c.l.b16 %v3286
        %v3575 = vunpack.c.l.b16 %v3287
        %v3576 = vunpack.c.l.b16 %v3288
        %v3577 = vunpack.c.l.b16 %v3289
        %v3578 = vunpack.c.l.b16 %v3290
        %v3579 = vunpack.c.l.b16 %v3291
        %v3580 = vunpack.c.l.b16 %v3292
        %v3581 = vunpack.c.l.b16 %v3293
        %v3582 = vunpack.c.l.b16 %v3294
        %v3583 = vunpack.c.l.b16 %v3295
        %v3584 = vunpack.c.l.b16 %v3296
        %v3585 = vunpack.c.l.b16 %v3297
        %v3586 = vunpack.c.l.b16 %v3298
        %v3587 = vunpack.c.l.b16 %v3299
        %v3588 = vunpack.c.l.b16 %v3300
        %v3589 = vunpack.c.l.b16 %v3301
        %v3590 = vunpack.c.l.b16 %v3302
        %v3591 = vunpack.c.l.b16 %v3303
        %v3592 = vunpack.c.l.b16 %v3304
        %v3593 = vunpack.c.l.b16 %v3305
        %v3594 = vunpack.c.l.b16 %v3306
        %v3595 = vunpack.c.l.b16 %v3307
        %v3596 = vunpack.c.l.b16 %v3308
        %v3597 = vunpack.c.l.b16 %v3309
        %v3598 = vunpack.c.l.b16 %v3310
        %v3599 = vunpack.c.l.b16 %v3311
        %v3600 = vunpack.c.l.b16 %v3312
        %v3601 = vunpack.c.l.b16 %v3313
        %v3602 = vunpack.c.l.b16 %v3314
        %v3603 = vunpack.c.l.b16 %v3315
        %v3604 = vunpack.c.l.b16 %v3316
        %v3605 = vunpack.c.l.b16 %v3317
        %v3606 = vunpack.c.l.b16 %v3318
        %v3607 = vunpack.c.l.b16 %v3319
        %v3608 = vunpack.c.l.b16 %v3320
        %v3609 = vunpack.c.l.b16 %v3321
        %v3610 = vunpack.c.l.b16 %v3322
        %v3611 = vunpack.c.l.b16 %v3323
        %v3612 = vunpack.c.l.b16 %v3324
        %v3613 = vunpack.c.l.b16 %v3325
        %v3614 = vunpack.c.l.b16 %v3326
        %v3615 = vunpack.c.l.b16 %v3327
        %v3616 = vunpack.c.l.b16 %v3328
        %v3617 = vunpack.c.l.b16 %v3329
        %v3618 = vunpack.c.l.b16 %v3330
        %v3619 = vunpack.c.l.b16 %v3331
        %v3620 = vunpack.c.l.b16 %v3332
        %v3621 = vunpack.c.l.b16 %v3333
        %v3622 = vunpack.c.l.b16 %v3334
        %v3623 = vunpack.c.l.b16 %v3335
        %v3624 = vunpack.c.l.b16 %v3336
        %v3625 = vunpack.c.l.b16 %v3337
        %v3626 = vunpack.c.l.b16 %v3338
        %v3627 = vunpack.c.l.b16 %v3339
        %v3628 = vunpack.c.l.b16 %v3340
        %v3629 = vunpack.c.l.b16 %v3341
        %v3630 = vpack.c.b16 %v3487, %v3486
        %v3631 = vpack.c.b16 %v3489, %v3488
        %v3632 = vpack.c.b16 %v3491, %v3490
        %v3633 = vpack.c.b16 %v3493, %v3492
        %v3634 = vpack.c.b16 %v3495, %v3494
        %v3635 = vpack.c.b16 %v3497, %v3496
        %v3636 = vpack.c.b16 %v3499, %v3498
        %v3637 = vpack.c.b16 %v3501, %v3500
        %v3638 = vpack.c.b16 %v3503, %v3502
        %v3639 = vpack.c.b16 %v3505, %v3504
        %v3640 = vpack.c.b16 %v3507, %v3506
        %v3641 = vpack.c.b16 %v3509, %v3508
        %v3642 = vpack.c.b16 %v3511, %v3510
        %v3643 = vpack.c.b16 %v3513, %v3512
        %v3644 = vpack.c.b16 %v3515, %v3514
        %v3645 = vpack.c.b16 %v3517, %v3516
        %v3646 = vpack.c.b16 %v3519, %v3518
        %v3647 = vpack.c.b16 %v3521, %v3520
        %v3648 = vpack.c.b16 %v3523, %v3522
        %v3649 = vpack.c.b16 %v3525, %v3524
        %v3650 = vpack.c.b16 %v3527, %v3526
        %v3651 = vpack.c.b16 %v3529, %v3528
        %v3652 = vpack.c.b16 %v3531, %v3530
        %v3653 = vpack.c.b16 %v3533, %v3532
        %v3654 = vpack.c.b16 %v3535, %v3534
        %v3655 = vpack.c.b16 %v3537, %v3536
        %v3656 = vpack.c.b16 %v3539, %v3538
        %v3657 = vpack.c.b16 %v3541, %v3540
        %v3658 = vpack.c.b16 %v3543, %v3542
        %v3659 = vpack.c.b16 %v3545, %v3544
        %v3660 = vpack.c.b16 %v3547, %v3546
        %v3661 = vpack.c.b16 %v3549, %v3548
        %v3662 = vpack.c.b16 %v3551, %v3550
        %v3663 = vpack.c.b16 %v3553, %v3552
        %v3664 = vpack.c.b16 %v3555, %v3554
        %v3665 = vpack.c.b16 %v3557, %v3556
        %v3666 = vpack.c.b16 %v3559, %v3558
        %v3667 = vpack.c.b16 %v3561, %v3560
        %v3668 = vpack.c.b16 %v3563, %v3562
        %v3669 = vpack.c.b16 %v3565, %v3564
        %v3670 = vpack.c.b16 %v3567, %v3566
        %v3671 = vpack.c.b16 %v3569, %v3568
        %v3672 = vpack.c.b16 %v3571, %v3570
        %v3673 = vpack.c.b16 %v3573, %v3572
        %v3674 = vpack.c.b16 %v3575, %v3574
        %v3675 = vpack.c.b16 %v3577, %v3576
        %v3676 = vpack.c.b16 %v3579, %v3578
        %v3677 = vpack.c.b16 %v3581, %v3580
        %v3678 = vpack.c.b16 %v3583, %v3582
        %v3679 = vpack.c.b16 %v3585, %v3584
        %v3680 = vpack.c.b16 %v3587, %v3586
        %v3681 = vpack.c.b16 %v3589, %v3588
        %v3682 = vpack.c.b16 %v3591, %v3590
        %v3683 = vpack.c.b16 %v3593, %v3592
        %v3684 = vpack.c.b16 %v3595, %v3594
        %v3685 = vpack.c.b16 %v3597, %v3596
        %v3686 = vpack.c.b16 %v3599, %v3598
        %v3687 = vpack.c.b16 %v3601, %v3600
        %v3688 = vpack.c.b16 %v3603, %v3602
        %v3689 = vpack.c.b16 %v3605, %v3604
        %v3690 = vpack.c.b16 %v3607, %v3606
        %v3691 = vpack.c.b16 %v3609, %v3608
        %v3692 = vpack.c.b16 %v3611, %v3610
        %v3693 = vpack.c.b16 %v3613, %v3612
        %v3694 = vpack.c.b16 %v3615, %v3614
        %v3695 = vpack.c.b16 %v3617, %v3616
        %v3696 = vpack.c.b16 %v3619, %v3618
        %v3697 = vpack.c.b16 %v3621, %v3620
        %v3698 = vpack.c.b16 %v3623, %v3622
        %v3699 = vpack.c.b16 %v3625, %v3624
        %v3700 = vpack.c.b16 %v3627, %v3626
        %v3701 = vpack.c.b16 %v3629, %v3628
        %3774 = vmatprep.subr.bf16.mxu0 0
        %3775 = vmatpush1.bf16.msra.mxu0 %v3637
        %3776 = vmatprep.subr.bf16.mxu0 0
        %3777 = vmatpush1.bf16.msra.mxu0 %v3636
        %3778 = vmatprep.subr.bf16.mxu0 0
        %3779 = vmatpush1.bf16.msra.mxu0 %v3635
        %3780 = vmatprep.subr.bf16.mxu0 0
        %3781 = vmatpush1.bf16.msra.mxu0 %v3634
        %3782 = vmatprep.subr.bf16.mxu0 0
        %3783 = vmatpush1.bf16.msra.mxu0 %v3633
        %3784 = vmatprep.subr.bf16.mxu0 0
        %3785 = vmatpush1.bf16.msra.mxu0 %v3632
        %3786 = vmatprep.subr.bf16.mxu0 0
        %3787 = vmatpush1.bf16.msra.mxu0 %v3631
        %3788 = vmatprep.subr.bf16.mxu0 0
        %3789 = vmatpush1.bf16.msra.mxu0 %v3630
        %3790 = vmatprep.subr.bf16.mxu0 0
        %3791 = vmatpush2.bf16.msra.mxu0 %v3645
        %3792 = vmatprep.subr.bf16.mxu0 0
        %3793 = vmatpush2.bf16.msra.mxu0 %v3644
        %3794 = vmatprep.subr.bf16.mxu0 0
        %3795 = vmatpush2.bf16.msra.mxu0 %v3643
        %3796 = vmatprep.subr.bf16.mxu0 0
        %3797 = vmatpush2.bf16.msra.mxu0 %v3642
        %3798 = vmatprep.subr.bf16.mxu0 0
        %3799 = vmatpush2.bf16.msra.mxu0 %v3641
        %3800 = vmatprep.subr.bf16.mxu0 0
        %3801 = vmatpush2.bf16.msra.mxu0 %v3640
        %3802 = vmatprep.subr.bf16.mxu0 0
        %3803 = vmatpush2.bf16.msra.mxu0 %v3639
        %3804 = vmatprep.subr.bf16.mxu0 0
        %3805 = vmatpush2.bf16.msra.mxu0 %v3638
        %3806 = vmatprep.mubr.bf16.mxu0 %v2686
        %3807 = vmatmul.mubr.bf16.gmra.mxu0 %v2622
        %v3808 = vpop.f32.mrf.mxu0
        %v3809 = vadd.f32 0.0, %v3808
        %v3810 = vpop.f32.mrf.mxu0
        %v3811 = vpop.f32.mrf.mxu0
        %v3812 = vadd.f32 0.0, %v3811
        %v3813 = vpop.f32.mrf.mxu0
        %3814 = vmatprep.mubr.bf16.mxu0 %v2687
        %3815 = vmatmul.mubr.bf16.gmra.mxu0 %v2623
        %v3816 = vpop.f32.mrf.mxu0
        %v3817 = vadd.f32 0.0, %v3816
        %v3818 = vpop.f32.mrf.mxu0
        %v3819 = vpop.f32.mrf.mxu0
        %v3820 = vadd.f32 0.0, %v3819
        %v3821 = vpop.f32.mrf.mxu0
        %3822 = vmatprep.mubr.bf16.mxu0 %v2688
        %3823 = vmatmul.mubr.bf16.gmra.mxu0 %v2624
        %v3824 = vpop.f32.mrf.mxu0
        %v3825 = vadd.f32 0.0, %v3824
        %v3826 = vpop.f32.mrf.mxu0
        %v3827 = vpop.f32.mrf.mxu0
        %v3828 = vadd.f32 0.0, %v3827
        %v3829 = vpop.f32.mrf.mxu0
        %3830 = vmatprep.mubr.bf16.mxu0 %v2689
        %3831 = vmatmul.mubr.bf16.gmra.mxu0 %v2625
        %v3832 = vpop.f32.mrf.mxu0
        %v3833 = vadd.f32 0.0, %v3832
        %v3834 = vpop.f32.mrf.mxu0
        %v3835 = vpop.f32.mrf.mxu0
        %v3836 = vadd.f32 0.0, %v3835
        %v3837 = vpop.f32.mrf.mxu0
        %3838 = vmatprep.mubr.bf16.mxu0 %v2690
        %3839 = vmatmul.mubr.bf16.gmra.mxu0 %v2626
        %v3840 = vpop.f32.mrf.mxu0
        %v3841 = vadd.f32 0.0, %v3840
        %v3842 = vpop.f32.mrf.mxu0
        %v3843 = vpop.f32.mrf.mxu0
        %v3844 = vadd.f32 0.0, %v3843
        %v3845 = vpop.f32.mrf.mxu0
        %3846 = vmatprep.mubr.bf16.mxu0 %v2691
        %3847 = vmatmul.mubr.bf16.gmra.mxu0 %v2627
        %v3848 = vpop.f32.mrf.mxu0
        %v3849 = vadd.f32 0.0, %v3848
        %v3850 = vpop.f32.mrf.mxu0
        %v3851 = vpop.f32.mrf.mxu0
        %v3852 = vadd.f32 0.0, %v3851
        %v3853 = vpop.f32.mrf.mxu0
        %3854 = vmatprep.mubr.bf16.mxu0 %v2692
        %3855 = vmatmul.mubr.bf16.gmra.mxu0 %v2628
        %v3856 = vpop.f32.mrf.mxu0
        %v3857 = vadd.f32 0.0, %v3856
        %v3858 = vpop.f32.mrf.mxu0
        %v3859 = vpop.f32.mrf.mxu0
        %v3860 = vadd.f32 0.0, %v3859
        %v3861 = vpop.f32.mrf.mxu0
        %3862 = vmatprep.mubr.bf16.mxu0 %v2693
        %3863 = vmatmul.mubr.bf16.gmra.mxu0 %v2629
        %v3864 = vpop.f32.mrf.mxu0
        %v3865 = vadd.f32 0.0, %v3864
        %v3866 = vpop.f32.mrf.mxu0
        %v3867 = vpop.f32.mrf.mxu0
        %v3868 = vadd.f32 0.0, %v3867
        %v3869 = vpop.f32.mrf.mxu0
        %3870 = vmatprep.mubr.bf16.mxu0 %v2694
        %3871 = vmatmul.mubr.bf16.gmra.mxu0 %v2630
        %v3872 = vpop.f32.mrf.mxu0
        %v3873 = vadd.f32 0.0, %v3872
        %v3874 = vpop.f32.mrf.mxu0
        %v3875 = vpop.f32.mrf.mxu0
        %v3876 = vadd.f32 0.0, %v3875
        %v3877 = vpop.f32.mrf.mxu0
        %3878 = vmatprep.mubr.bf16.mxu0 %v2695
        %3879 = vmatmul.mubr.bf16.gmra.mxu0 %v2631
        %v3880 = vpop.f32.mrf.mxu0
        %v3881 = vadd.f32 0.0, %v3880
        %v3882 = vpop.f32.mrf.mxu0
        %v3883 = vpop.f32.mrf.mxu0
        %v3884 = vadd.f32 0.0, %v3883
        %v3885 = vpop.f32.mrf.mxu0
        %3886 = vmatprep.mubr.bf16.mxu0 %v2696
        %3887 = vmatmul.mubr.bf16.gmra.mxu0 %v2632
        %v3888 = vpop.f32.mrf.mxu0
        %v3889 = vadd.f32 0.0, %v3888
        %v3890 = vpop.f32.mrf.mxu0
        %v3891 = vpop.f32.mrf.mxu0
        %v3892 = vadd.f32 0.0, %v3891
        %v3893 = vpop.f32.mrf.mxu0
        %3894 = vmatprep.mubr.bf16.mxu0 %v2697
        %3895 = vmatmul.mubr.bf16.gmra.mxu0 %v2633
        %v3896 = vpop.f32.mrf.mxu0
        %v3897 = vadd.f32 0.0, %v3896
        %v3898 = vpop.f32.mrf.mxu0
        %v3899 = vpop.f32.mrf.mxu0
        %v3900 = vadd.f32 0.0, %v3899
        %v3901 = vpop.f32.mrf.mxu0
        %3902 = vmatprep.mubr.bf16.mxu0 %v2698
        %3903 = vmatmul.mubr.bf16.gmra.mxu0 %v2634
        %v3904 = vpop.f32.mrf.mxu0
        %v3905 = vadd.f32 0.0, %v3904
        %v3906 = vpop.f32.mrf.mxu0
        %v3907 = vpop.f32.mrf.mxu0
        %v3908 = vadd.f32 0.0, %v3907
        %v3909 = vpop.f32.mrf.mxu0
        %3910 = vmatprep.mubr.bf16.mxu0 %v2699
        %3911 = vmatmul.mubr.bf16.gmra.mxu0 %v2635
        %v3912 = vpop.f32.mrf.mxu0
        %v3913 = vadd.f32 0.0, %v3912
        %v3914 = vpop.f32.mrf.mxu0
        %v3915 = vpop.f32.mrf.mxu0
        %v3916 = vadd.f32 0.0, %v3915
        %v3917 = vpop.f32.mrf.mxu0
        %3918 = vmatprep.mubr.bf16.mxu0 %v2700
        %3919 = vmatmul.mubr.bf16.gmra.mxu0 %v2636
        %v3920 = vpop.f32.mrf.mxu0
        %v3921 = vadd.f32 0.0, %v3920
        %v3922 = vpop.f32.mrf.mxu0
        %v3923 = vpop.f32.mrf.mxu0
        %v3924 = vadd.f32 0.0, %v3923
        %v3925 = vpop.f32.mrf.mxu0
        %3926 = vmatprep.mubr.bf16.mxu0 %v2701
        %3927 = vmatmul.mubr.bf16.gmra.mxu0 %v2637
        %v3928 = vpop.f32.mrf.mxu0
        %v3929 = vadd.f32 0.0, %v3928
        %v3930 = vpop.f32.mrf.mxu0
        %v3931 = vpop.f32.mrf.mxu0
        %v3932 = vadd.f32 0.0, %v3931
        %v3933 = vpop.f32.mrf.mxu0
        %3934 = vdwg.mxu0
        %3935 = vmatprep.subr.bf16.mxu0 0
        %3936 = vmatpush1.bf16.msra.mxu0 %v3653
        %3937 = vmatprep.subr.bf16.mxu0 0
        %3938 = vmatpush1.bf16.msra.mxu0 %v3652
        %3939 = vmatprep.subr.bf16.mxu0 0
        %3940 = vmatpush1.bf16.msra.mxu0 %v3651
        %3941 = vmatprep.subr.bf16.mxu0 0
        %3942 = vmatpush1.bf16.msra.mxu0 %v3650
        %3943 = vmatprep.subr.bf16.mxu0 0
        %3944 = vmatpush1.bf16.msra.mxu0 %v3649
        %3945 = vmatprep.subr.bf16.mxu0 0
        %3946 = vmatpush1.bf16.msra.mxu0 %v3648
        %3947 = vmatprep.subr.bf16.mxu0 0
        %3948 = vmatpush1.bf16.msra.mxu0 %v3647
        %3949 = vmatprep.subr.bf16.mxu0 0
        %3950 = vmatpush1.bf16.msra.mxu0 %v3646
        %3951 = vmatprep.subr.bf16.mxu0 0
        %3952 = vmatpush2.bf16.msra.mxu0 %v3661
        %3953 = vmatprep.subr.bf16.mxu0 0
        %3954 = vmatpush2.bf16.msra.mxu0 %v3660
        %3955 = vmatprep.subr.bf16.mxu0 0
        %3956 = vmatpush2.bf16.msra.mxu0 %v3659
        %3957 = vmatprep.subr.bf16.mxu0 0
        %3958 = vmatpush2.bf16.msra.mxu0 %v3658
        %3959 = vmatprep.subr.bf16.mxu0 0
        %3960 = vmatpush2.bf16.msra.mxu0 %v3657
        %3961 = vmatprep.subr.bf16.mxu0 0
        %3962 = vmatpush2.bf16.msra.mxu0 %v3656
        %3963 = vmatprep.subr.bf16.mxu0 0
        %3964 = vmatpush2.bf16.msra.mxu0 %v3655
        %3965 = vmatprep.subr.bf16.mxu0 0
        %3966 = vmatpush2.bf16.msra.mxu0 %v3654
        %3967 = vmatprep.mubr.bf16.mxu0 %v2830
        %3968 = vmatmul.mubr.bf16.gmra.mxu0 %v2750
        %v3969 = vpop.f32.mrf.mxu0
        %v3970 = vadd.f32 %v3809, %v3969
        %v3971 = vpop.f32.mrf.mxu0
        %v3972 = vpop.f32.mrf.mxu0
        %v3973 = vadd.f32 %v3812, %v3972
        %v3974 = vpop.f32.mrf.mxu0
        %3975 = vmatprep.mubr.bf16.mxu0 %v2831
        %3976 = vmatmul.mubr.bf16.gmra.mxu0 %v2751
        %v3977 = vpop.f32.mrf.mxu0
        %v3978 = vadd.f32 %v3817, %v3977
        %v3979 = vpop.f32.mrf.mxu0
        %v3980 = vpop.f32.mrf.mxu0
        %v3981 = vadd.f32 %v3820, %v3980
        %v3982 = vpop.f32.mrf.mxu0
        %3983 = vmatprep.mubr.bf16.mxu0 %v2832
        %3984 = vmatmul.mubr.bf16.gmra.mxu0 %v2752
        %v3985 = vpop.f32.mrf.mxu0
        %v3986 = vadd.f32 %v3825, %v3985
        %v3987 = vpop.f32.mrf.mxu0
        %v3988 = vpop.f32.mrf.mxu0
        %v3989 = vadd.f32 %v3828, %v3988
        %v3990 = vpop.f32.mrf.mxu0
        %3991 = vmatprep.mubr.bf16.mxu0 %v2833
        %3992 = vmatmul.mubr.bf16.gmra.mxu0 %v2753
        %v3993 = vpop.f32.mrf.mxu0
        %v3994 = vadd.f32 %v3833, %v3993
        %v3995 = vpop.f32.mrf.mxu0
        %v3996 = vpop.f32.mrf.mxu0
        %v3997 = vadd.f32 %v3836, %v3996
        %v3998 = vpop.f32.mrf.mxu0
        %3999 = vmatprep.mubr.bf16.mxu0 %v2834
        %4000 = vmatmul.mubr.bf16.gmra.mxu0 %v2754
        %v4001 = vpop.f32.mrf.mxu0
        %v4002 = vadd.f32 %v3841, %v4001
        %v4003 = vpop.f32.mrf.mxu0
        %v4004 = vpop.f32.mrf.mxu0
        %v4005 = vadd.f32 %v3844, %v4004
        %v4006 = vpop.f32.mrf.mxu0
        %4007 = vmatprep.mubr.bf16.mxu0 %v2835
        %4008 = vmatmul.mubr.bf16.gmra.mxu0 %v2755
        %v4009 = vpop.f32.mrf.mxu0
        %v4010 = vadd.f32 %v3849, %v4009
        %v4011 = vpop.f32.mrf.mxu0
        %v4012 = vpop.f32.mrf.mxu0
        %v4013 = vadd.f32 %v3852, %v4012
        %v4014 = vpop.f32.mrf.mxu0
        %4015 = vmatprep.mubr.bf16.mxu0 %v2836
        %4016 = vmatmul.mubr.bf16.gmra.mxu0 %v2756
        %v4017 = vpop.f32.mrf.mxu0
        %v4018 = vadd.f32 %v3857, %v4017
        %v4019 = vpop.f32.mrf.mxu0
        %v4020 = vpop.f32.mrf.mxu0
        %v4021 = vadd.f32 %v3860, %v4020
        %v4022 = vpop.f32.mrf.mxu0
        %4023 = vmatprep.mubr.bf16.mxu0 %v2837
        %4024 = vmatmul.mubr.bf16.gmra.mxu0 %v2757
        %v4025 = vpop.f32.mrf.mxu0
        %v4026 = vadd.f32 %v3865, %v4025
        %v4027 = vpop.f32.mrf.mxu0
        %v4028 = vpop.f32.mrf.mxu0
        %v4029 = vadd.f32 %v3868, %v4028
        %v4030 = vpop.f32.mrf.mxu0
        %4031 = vmatprep.mubr.bf16.mxu0 %v2838
        %4032 = vmatmul.mubr.bf16.gmra.mxu0 %v2758
        %v4033 = vpop.f32.mrf.mxu0
        %v4034 = vadd.f32 %v3873, %v4033
        %v4035 = vpop.f32.mrf.mxu0
        %v4036 = vpop.f32.mrf.mxu0
        %v4037 = vadd.f32 %v3876, %v4036
        %v4038 = vpop.f32.mrf.mxu0
        %4039 = vmatprep.mubr.bf16.mxu0 %v2839
        %4040 = vmatmul.mubr.bf16.gmra.mxu0 %v2759
        %v4041 = vpop.f32.mrf.mxu0
        %v4042 = vadd.f32 %v3881, %v4041
        %v4043 = vpop.f32.mrf.mxu0
        %v4044 = vpop.f32.mrf.mxu0
        %v4045 = vadd.f32 %v3884, %v4044
        %v4046 = vpop.f32.mrf.mxu0
        %4047 = vmatprep.mubr.bf16.mxu0 %v2840
        %4048 = vmatmul.mubr.bf16.gmra.mxu0 %v2760
        %v4049 = vpop.f32.mrf.mxu0
        %v4050 = vadd.f32 %v3889, %v4049
        %v4051 = vpop.f32.mrf.mxu0
        %v4052 = vpop.f32.mrf.mxu0
        %v4053 = vadd.f32 %v3892, %v4052
        %v4054 = vpop.f32.mrf.mxu0
        %4055 = vmatprep.mubr.bf16.mxu0 %v2841
        %4056 = vmatmul.mubr.bf16.gmra.mxu0 %v2761
        %v4057 = vpop.f32.mrf.mxu0
        %v4058 = vadd.f32 %v3897, %v4057
        %v4059 = vpop.f32.mrf.mxu0
        %v4060 = vpop.f32.mrf.mxu0
        %v4061 = vadd.f32 %v3900, %v4060
        %v4062 = vpop.f32.mrf.mxu0
        %4063 = vmatprep.mubr.bf16.mxu0 %v2842
        %4064 = vmatmul.mubr.bf16.gmra.mxu0 %v2762
        %v4065 = vpop.f32.mrf.mxu0
        %v4066 = vadd.f32 %v3905, %v4065
        %v4067 = vpop.f32.mrf.mxu0
        %v4068 = vpop.f32.mrf.mxu0
        %v4069 = vadd.f32 %v3908, %v4068
        %v4070 = vpop.f32.mrf.mxu0
        %4071 = vmatprep.mubr.bf16.mxu0 %v2843
        %4072 = vmatmul.mubr.bf16.gmra.mxu0 %v2763
        %v4073 = vpop.f32.mrf.mxu0
        %v4074 = vadd.f32 %v3913, %v4073
        %v4075 = vpop.f32.mrf.mxu0
        %v4076 = vpop.f32.mrf.mxu0
        %v4077 = vadd.f32 %v3916, %v4076
        %v4078 = vpop.f32.mrf.mxu0
        %4079 = vmatprep.mubr.bf16.mxu0 %v2844
        %4080 = vmatmul.mubr.bf16.gmra.mxu0 %v2764
        %v4081 = vpop.f32.mrf.mxu0
        %v4082 = vadd.f32 %v3921, %v4081
        %v4083 = vpop.f32.mrf.mxu0
        %v4084 = vpop.f32.mrf.mxu0
        %v4085 = vadd.f32 %v3924, %v4084
        %v4086 = vpop.f32.mrf.mxu0
        %4087 = vmatprep.mubr.bf16.mxu0 %v2845
        %4088 = vmatmul.mubr.bf16.gmra.mxu0 %v2765
        %v4089 = vpop.f32.mrf.mxu0
        %v4090 = vadd.f32 %v3929, %v4089
        %v4091 = vpop.f32.mrf.mxu0
        %v4092 = vpop.f32.mrf.mxu0
        %v4093 = vadd.f32 %v3932, %v4092
        %v4094 = vpop.f32.mrf.mxu0
        %4095 = vdwg.mxu0
        %4096 = vmatprep.subr.bf16.mxu0 0
        %4097 = vmatpush1.bf16.msra.mxu0 %v3669
        %4098 = vmatprep.subr.bf16.mxu0 0
        %4099 = vmatpush1.bf16.msra.mxu0 %v3668
        %4100 = vmatprep.subr.bf16.mxu0 0
        %4101 = vmatpush1.bf16.msra.mxu0 %v3667
        %4102 = vmatprep.subr.bf16.mxu0 0
        %4103 = vmatpush1.bf16.msra.mxu0 %v3666
        %4104 = vmatprep.subr.bf16.mxu0 0
        %4105 = vmatpush1.bf16.msra.mxu0 %v3665
        %4106 = vmatprep.subr.bf16.mxu0 0
        %4107 = vmatpush1.bf16.msra.mxu0 %v3664
        %4108 = vmatprep.subr.bf16.mxu0 0
        %4109 = vmatpush1.bf16.msra.mxu0 %v3663
        %4110 = vmatprep.subr.bf16.mxu0 0
        %4111 = vmatpush1.bf16.msra.mxu0 %v3662
        %4112 = vmatprep.subr.bf16.mxu0 0
        %4113 = vmatpush2.bf16.msra.mxu0 %v3677
        %4114 = vmatprep.subr.bf16.mxu0 0
        %4115 = vmatpush2.bf16.msra.mxu0 %v3676
        %4116 = vmatprep.subr.bf16.mxu0 0
        %4117 = vmatpush2.bf16.msra.mxu0 %v3675
        %4118 = vmatprep.subr.bf16.mxu0 0
        %4119 = vmatpush2.bf16.msra.mxu0 %v3674
        %4120 = vmatprep.subr.bf16.mxu0 0
        %4121 = vmatpush2.bf16.msra.mxu0 %v3673
        %4122 = vmatprep.subr.bf16.mxu0 0
        %4123 = vmatpush2.bf16.msra.mxu0 %v3672
        %4124 = vmatprep.subr.bf16.mxu0 0
        %4125 = vmatpush2.bf16.msra.mxu0 %v3671
        %4126 = vmatprep.subr.bf16.mxu0 0
        %4127 = vmatpush2.bf16.msra.mxu0 %v3670
        %4128 = vmatprep.mubr.bf16.mxu0 %v2958
        %4129 = vmatmul.mubr.bf16.gmra.mxu0 %v2894
        %v4130 = vpop.f32.mrf.mxu0
        %v4131 = vadd.f32 %v3970, %v4130
        %v4132 = vpop.f32.mrf.mxu0
        %v4133 = vpop.f32.mrf.mxu0
        %v4134 = vadd.f32 %v3973, %v4133
        %v4135 = vpop.f32.mrf.mxu0
        %4136 = vmatprep.mubr.bf16.mxu0 %v2959
        %4137 = vmatmul.mubr.bf16.gmra.mxu0 %v2895
        %v4138 = vpop.f32.mrf.mxu0
        %v4139 = vadd.f32 %v3978, %v4138
        %v4140 = vpop.f32.mrf.mxu0
        %v4141 = vpop.f32.mrf.mxu0
        %v4142 = vadd.f32 %v3981, %v4141
        %v4143 = vpop.f32.mrf.mxu0
        %4144 = vmatprep.mubr.bf16.mxu0 %v2960
        %4145 = vmatmul.mubr.bf16.gmra.mxu0 %v2896
        %v4146 = vpop.f32.mrf.mxu0
        %v4147 = vadd.f32 %v3986, %v4146
        %v4148 = vpop.f32.mrf.mxu0
        %v4149 = vpop.f32.mrf.mxu0
        %v4150 = vadd.f32 %v3989, %v4149
        %v4151 = vpop.f32.mrf.mxu0
        %4152 = vmatprep.mubr.bf16.mxu0 %v2961
        %4153 = vmatmul.mubr.bf16.gmra.mxu0 %v2897
        %v4154 = vpop.f32.mrf.mxu0
        %v4155 = vadd.f32 %v3994, %v4154
        %v4156 = vpop.f32.mrf.mxu0
        %v4157 = vpop.f32.mrf.mxu0
        %v4158 = vadd.f32 %v3997, %v4157
        %v4159 = vpop.f32.mrf.mxu0
        %4160 = vmatprep.mubr.bf16.mxu0 %v2962
        %4161 = vmatmul.mubr.bf16.gmra.mxu0 %v2898
        %v4162 = vpop.f32.mrf.mxu0
        %v4163 = vadd.f32 %v4002, %v4162
        %v4164 = vpop.f32.mrf.mxu0
        %v4165 = vpop.f32.mrf.mxu0
        %v4166 = vadd.f32 %v4005, %v4165
        %v4167 = vpop.f32.mrf.mxu0
        %4168 = vmatprep.mubr.bf16.mxu0 %v2963
        %4169 = vmatmul.mubr.bf16.gmra.mxu0 %v2899
        %v4170 = vpop.f32.mrf.mxu0
        %v4171 = vadd.f32 %v4010, %v4170
        %v4172 = vpop.f32.mrf.mxu0
        %v4173 = vpop.f32.mrf.mxu0
        %v4174 = vadd.f32 %v4013, %v4173
        %v4175 = vpop.f32.mrf.mxu0
        %4176 = vmatprep.mubr.bf16.mxu0 %v2964
        %4177 = vmatmul.mubr.bf16.gmra.mxu0 %v2900
        %v4178 = vpop.f32.mrf.mxu0
        %v4179 = vadd.f32 %v4018, %v4178
        %v4180 = vpop.f32.mrf.mxu0
        %v4181 = vpop.f32.mrf.mxu0
        %v4182 = vadd.f32 %v4021, %v4181
        %v4183 = vpop.f32.mrf.mxu0
        %4184 = vmatprep.mubr.bf16.mxu0 %v2965
        %4185 = vmatmul.mubr.bf16.gmra.mxu0 %v2901
        %v4186 = vpop.f32.mrf.mxu0
        %v4187 = vadd.f32 %v4026, %v4186
        %v4188 = vpop.f32.mrf.mxu0
        %v4189 = vpop.f32.mrf.mxu0
        %v4190 = vadd.f32 %v4029, %v4189
        %v4191 = vpop.f32.mrf.mxu0
        %4192 = vmatprep.mubr.bf16.mxu0 %v2966
        %4193 = vmatmul.mubr.bf16.gmra.mxu0 %v2902
        %v4194 = vpop.f32.mrf.mxu0
        %v4195 = vadd.f32 %v4034, %v4194
        %v4196 = vpop.f32.mrf.mxu0
        %v4197 = vpop.f32.mrf.mxu0
        %v4198 = vadd.f32 %v4037, %v4197
        %v4199 = vpop.f32.mrf.mxu0
        %4200 = vmatprep.mubr.bf16.mxu0 %v2967
        %4201 = vmatmul.mubr.bf16.gmra.mxu0 %v2903
        %v4202 = vpop.f32.mrf.mxu0
        %v4203 = vadd.f32 %v4042, %v4202
        %v4204 = vpop.f32.mrf.mxu0
        %v4205 = vpop.f32.mrf.mxu0
        %v4206 = vadd.f32 %v4045, %v4205
        %v4207 = vpop.f32.mrf.mxu0
        %4208 = vmatprep.mubr.bf16.mxu0 %v2968
        %4209 = vmatmul.mubr.bf16.gmra.mxu0 %v2904
        %v4210 = vpop.f32.mrf.mxu0
        %v4211 = vadd.f32 %v4050, %v4210
        %v4212 = vpop.f32.mrf.mxu0
        %v4213 = vpop.f32.mrf.mxu0
        %v4214 = vadd.f32 %v4053, %v4213
        %v4215 = vpop.f32.mrf.mxu0
        %4216 = vmatprep.mubr.bf16.mxu0 %v2969
        %4217 = vmatmul.mubr.bf16.gmra.mxu0 %v2905
        %v4218 = vpop.f32.mrf.mxu0
        %v4219 = vadd.f32 %v4058, %v4218
        %v4220 = vpop.f32.mrf.mxu0
        %v4221 = vpop.f32.mrf.mxu0
        %v4222 = vadd.f32 %v4061, %v4221
        %v4223 = vpop.f32.mrf.mxu0
        %4224 = vmatprep.mubr.bf16.mxu0 %v2970
        %4225 = vmatmul.mubr.bf16.gmra.mxu0 %v2906
        %v4226 = vpop.f32.mrf.mxu0
        %v4227 = vadd.f32 %v4066, %v4226
        %v4228 = vpop.f32.mrf.mxu0
        %v4229 = vpop.f32.mrf.mxu0
        %v4230 = vadd.f32 %v4069, %v4229
        %v4231 = vpop.f32.mrf.mxu0
        %4232 = vmatprep.mubr.bf16.mxu0 %v2971
        %4233 = vmatmul.mubr.bf16.gmra.mxu0 %v2907
        %v4234 = vpop.f32.mrf.mxu0
        %v4235 = vadd.f32 %v4074, %v4234
        %v4236 = vpop.f32.mrf.mxu0
        %v4237 = vpop.f32.mrf.mxu0
        %v4238 = vadd.f32 %v4077, %v4237
        %v4239 = vpop.f32.mrf.mxu0
        %4240 = vmatprep.mubr.bf16.mxu0 %v2972
        %4241 = vmatmul.mubr.bf16.gmra.mxu0 %v2908
        %v4242 = vpop.f32.mrf.mxu0
        %v4243 = vadd.f32 %v4082, %v4242
        %v4244 = vpop.f32.mrf.mxu0
        %v4245 = vpop.f32.mrf.mxu0
        %v4246 = vadd.f32 %v4085, %v4245
        %v4247 = vpop.f32.mrf.mxu0
        %4248 = vmatprep.mubr.bf16.mxu0 %v2973
        %4249 = vmatmul.mubr.bf16.gmra.mxu0 %v2909
        %v4250 = vpop.f32.mrf.mxu0
        %v4251 = vadd.f32 %v4090, %v4250
        %v4252 = vpop.f32.mrf.mxu0
        %v4253 = vpop.f32.mrf.mxu0
        %v4254 = vadd.f32 %v4093, %v4253
        %v4255 = vpop.f32.mrf.mxu0
        %4256 = vdwg.mxu0
        %4257 = vmatprep.subr.bf16.mxu0 0
        %4258 = vmatpush1.bf16.msra.mxu0 %v3685
        %4259 = vmatprep.subr.bf16.mxu0 0
        %4260 = vmatpush1.bf16.msra.mxu0 %v3684
        %4261 = vmatprep.subr.bf16.mxu0 0
        %4262 = vmatpush1.bf16.msra.mxu0 %v3683
        %4263 = vmatprep.subr.bf16.mxu0 0
        %4264 = vmatpush1.bf16.msra.mxu0 %v3682
        %4265 = vmatprep.subr.bf16.mxu0 0
        %4266 = vmatpush1.bf16.msra.mxu0 %v3681
        %4267 = vmatprep.subr.bf16.mxu0 0
        %4268 = vmatpush1.bf16.msra.mxu0 %v3680
        %4269 = vmatprep.subr.bf16.mxu0 0
        %4270 = vmatpush1.bf16.msra.mxu0 %v3679
        %4271 = vmatprep.subr.bf16.mxu0 0
        %4272 = vmatpush1.bf16.msra.mxu0 %v3678
        %4273 = vmatprep.subr.bf16.mxu0 0
        %4274 = vmatpush2.bf16.msra.mxu0 %v3693
        %4275 = vmatprep.subr.bf16.mxu0 0
        %4276 = vmatpush2.bf16.msra.mxu0 %v3692
        %4277 = vmatprep.subr.bf16.mxu0 0
        %4278 = vmatpush2.bf16.msra.mxu0 %v3691
        %4279 = vmatprep.subr.bf16.mxu0 0
        %4280 = vmatpush2.bf16.msra.mxu0 %v3690
        %4281 = vmatprep.subr.bf16.mxu0 0
        %4282 = vmatpush2.bf16.msra.mxu0 %v3689
        %4283 = vmatprep.subr.bf16.mxu0 0
        %4284 = vmatpush2.bf16.msra.mxu0 %v3688
        %4285 = vmatprep.subr.bf16.mxu0 0
        %4286 = vmatpush2.bf16.msra.mxu0 %v3687
        %4287 = vmatprep.subr.bf16.mxu0 0
        %4288 = vmatpush2.bf16.msra.mxu0 %v3686
        %4289 = vmatprep.mubr.bf16.mxu0 %v3102
        %4290 = vmatmul.mubr.bf16.gmra.mxu0 %v3038
        %v4291 = vpop.f32.mrf.mxu0
        %v4292 = vadd.f32 %v4131, %v4291
        %v4293 = vpop.f32.mrf.mxu0
        %v4294 = vpop.f32.mrf.mxu0
        %v4295 = vadd.f32 %v4134, %v4294
        %v4296 = vpop.f32.mrf.mxu0
        %4297 = vmatprep.mubr.bf16.mxu0 %v3103
        %4298 = vmatmul.mubr.bf16.gmra.mxu0 %v3039
        %v4299 = vpop.f32.mrf.mxu0
        %v4300 = vadd.f32 %v4139, %v4299
        %v4301 = vpop.f32.mrf.mxu0
        %v4302 = vpop.f32.mrf.mxu0
        %v4303 = vadd.f32 %v4142, %v4302
        %v4304 = vpop.f32.mrf.mxu0
        %4305 = vmatprep.mubr.bf16.mxu0 %v3104
        %4306 = vmatmul.mubr.bf16.gmra.mxu0 %v3040
        %v4307 = vpop.f32.mrf.mxu0
        %v4308 = vadd.f32 %v4147, %v4307
        %v4309 = vpop.f32.mrf.mxu0
        %v4310 = vpop.f32.mrf.mxu0
        %v4311 = vadd.f32 %v4150, %v4310
        %v4312 = vpop.f32.mrf.mxu0
        %4313 = vmatprep.mubr.bf16.mxu0 %v3105
        %4314 = vmatmul.mubr.bf16.gmra.mxu0 %v3041
        %v4315 = vpop.f32.mrf.mxu0
        %v4316 = vadd.f32 %v4155, %v4315
        %v4317 = vpop.f32.mrf.mxu0
        %v4318 = vpop.f32.mrf.mxu0
        %v4319 = vadd.f32 %v4158, %v4318
        %v4320 = vpop.f32.mrf.mxu0
        %4321 = vmatprep.mubr.bf16.mxu0 %v3106
        %4322 = vmatmul.mubr.bf16.gmra.mxu0 %v3042
        %v4323 = vpop.f32.mrf.mxu0
        %v4324 = vadd.f32 %v4163, %v4323
        %v4325 = vpop.f32.mrf.mxu0
        %v4326 = vpop.f32.mrf.mxu0
        %v4327 = vadd.f32 %v4166, %v4326
        %v4328 = vpop.f32.mrf.mxu0
        %4329 = vmatprep.mubr.bf16.mxu0 %v3107
        %4330 = vmatmul.mubr.bf16.gmra.mxu0 %v3043
        %v4331 = vpop.f32.mrf.mxu0
        %v4332 = vadd.f32 %v4171, %v4331
        %v4333 = vpop.f32.mrf.mxu0
        %v4334 = vpop.f32.mrf.mxu0
        %v4335 = vadd.f32 %v4174, %v4334
        %v4336 = vpop.f32.mrf.mxu0
        %4337 = vmatprep.mubr.bf16.mxu0 %v3108
        %4338 = vmatmul.mubr.bf16.gmra.mxu0 %v3044
        %v4339 = vpop.f32.mrf.mxu0
        %v4340 = vadd.f32 %v4179, %v4339
        %v4341 = vpop.f32.mrf.mxu0
        %v4342 = vpop.f32.mrf.mxu0
        %v4343 = vadd.f32 %v4182, %v4342
        %v4344 = vpop.f32.mrf.mxu0
        %4345 = vmatprep.mubr.bf16.mxu0 %v3109
        %4346 = vmatmul.mubr.bf16.gmra.mxu0 %v3045
        %v4347 = vpop.f32.mrf.mxu0
        %v4348 = vadd.f32 %v4187, %v4347
        %v4349 = vpop.f32.mrf.mxu0
        %v4350 = vpop.f32.mrf.mxu0
        %v4351 = vadd.f32 %v4190, %v4350
        %v4352 = vpop.f32.mrf.mxu0
        %4353 = vmatprep.mubr.bf16.mxu0 %v3110
        %4354 = vmatmul.mubr.bf16.gmra.mxu0 %v3046
        %v4355 = vpop.f32.mrf.mxu0
        %v4356 = vadd.f32 %v4195, %v4355
        %v4357 = vpop.f32.mrf.mxu0
        %v4358 = vpop.f32.mrf.mxu0
        %v4359 = vadd.f32 %v4198, %v4358
        %v4360 = vpop.f32.mrf.mxu0
        %4361 = vmatprep.mubr.bf16.mxu0 %v3111
        %4362 = vmatmul.mubr.bf16.gmra.mxu0 %v3047
        %v4363 = vpop.f32.mrf.mxu0
        %v4364 = vadd.f32 %v4203, %v4363
        %v4365 = vpop.f32.mrf.mxu0
        %v4366 = vpop.f32.mrf.mxu0
        %v4367 = vadd.f32 %v4206, %v4366
        %v4368 = vpop.f32.mrf.mxu0
        %4369 = vmatprep.mubr.bf16.mxu0 %v3112
        %4370 = vmatmul.mubr.bf16.gmra.mxu0 %v3048
        %v4371 = vpop.f32.mrf.mxu0
        %v4372 = vadd.f32 %v4211, %v4371
        %v4373 = vpop.f32.mrf.mxu0
        %v4374 = vpop.f32.mrf.mxu0
        %v4375 = vadd.f32 %v4214, %v4374
        %v4376 = vpop.f32.mrf.mxu0
        %4377 = vmatprep.mubr.bf16.mxu0 %v3113
        %4378 = vmatmul.mubr.bf16.gmra.mxu0 %v3049
        %v4379 = vpop.f32.mrf.mxu0
        %v4380 = vadd.f32 %v4219, %v4379
        %v4381 = vpop.f32.mrf.mxu0
        %v4382 = vpop.f32.mrf.mxu0
        %v4383 = vadd.f32 %v4222, %v4382
        %v4384 = vpop.f32.mrf.mxu0
        %4385 = vmatprep.mubr.bf16.mxu0 %v3114
        %4386 = vmatmul.mubr.bf16.gmra.mxu0 %v3050
        %v4387 = vpop.f32.mrf.mxu0
        %v4388 = vadd.f32 %v4227, %v4387
        %v4389 = vpop.f32.mrf.mxu0
        %v4390 = vpop.f32.mrf.mxu0
        %v4391 = vadd.f32 %v4230, %v4390
        %v4392 = vpop.f32.mrf.mxu0
        %4393 = vmatprep.mubr.bf16.mxu0 %v3115
        %4394 = vmatmul.mubr.bf16.gmra.mxu0 %v3051
        %v4395 = vpop.f32.mrf.mxu0
        %v4396 = vadd.f32 %v4235, %v4395
        %v4397 = vpop.f32.mrf.mxu0
        %v4398 = vpop.f32.mrf.mxu0
        %v4399 = vadd.f32 %v4238, %v4398
        %v4400 = vpop.f32.mrf.mxu0
        %4401 = vmatprep.mubr.bf16.mxu0 %v3116
        %4402 = vmatmul.mubr.bf16.gmra.mxu0 %v3052
        %v4403 = vpop.f32.mrf.mxu0
        %v4404 = vadd.f32 %v4243, %v4403
        %v4405 = vpop.f32.mrf.mxu0
        %v4406 = vpop.f32.mrf.mxu0
        %v4407 = vadd.f32 %v4246, %v4406
        %v4408 = vpop.f32.mrf.mxu0
        %4409 = vmatprep.mubr.bf16.mxu0 %v3117
        %4410 = vmatmul.mubr.bf16.gmra.mxu0 %v3053
        %v4411 = vpop.f32.mrf.mxu0
        %v4412 = vadd.f32 %v4251, %v4411
        %v4413 = vpop.f32.mrf.mxu0
        %v4414 = vpop.f32.mrf.mxu0
        %v4415 = vadd.f32 %v4254, %v4414
        %v4416 = vpop.f32.mrf.mxu0
        %4417 = vdwg.mxu0
        %4418 = vmatprep.subr.bf16.mxu0 0
        %4419 = vmatpush1.bf16.msra.mxu0 %v3701
        %4420 = vmatprep.subr.bf16.mxu0 0
        %4421 = vmatpush1.bf16.msra.mxu0 %v3700
        %4422 = vmatprep.subr.bf16.mxu0 0
        %4423 = vmatpush1.bf16.msra.mxu0 %v3699
        %4424 = vmatprep.subr.bf16.mxu0 0
        %4425 = vmatpush1.bf16.msra.mxu0 %v3698
        %4426 = vmatprep.subr.bf16.mxu0 0
        %4427 = vmatpush1.bf16.msra.mxu0 %v3697
        %4428 = vmatprep.subr.bf16.mxu0 0
        %4429 = vmatpush1.bf16.msra.mxu0 %v3696
        %4430 = vmatprep.subr.bf16.mxu0 0
        %4431 = vmatpush1.bf16.msra.mxu0 %v3695
        %4432 = vmatprep.subr.bf16.mxu0 0
        %4433 = vmatpush1.bf16.msra.mxu0 %v3694
        %4434 = vmatprep.subr.bf16.mxu0 0
        %4435 = vmatpush2.bf16.msra.mxu0 0
        %4436 = vmatprep.subr.bf16.mxu0 0
        %4437 = vmatpush2.bf16.msra.mxu0 0
        %4438 = vmatprep.subr.bf16.mxu0 0
        %4439 = vmatpush2.bf16.msra.mxu0 0
        %4440 = vmatprep.subr.bf16.mxu0 0
        %4441 = vmatpush2.bf16.msra.mxu0 0
        %4442 = vmatprep.subr.bf16.mxu0 0
        %4443 = vmatpush2.bf16.msra.mxu0 0
        %4444 = vmatprep.subr.bf16.mxu0 0
        %4445 = vmatpush2.bf16.msra.mxu0 0
        %4446 = vmatprep.subr.bf16.mxu0 0
        %4447 = vmatpush2.bf16.msra.mxu0 0
        %4448 = vmatprep.subr.bf16.mxu0 0
        %4449 = vmatpush2.bf16.msra.mxu0 0
        %4450 = vmatprep.mubr.bf16.mxu0 0
        %4451 = vmatmul.mubr.bf16.gmra.mxu0 %v3166
        %v4452 = vpop.f32.mrf.mxu0
        %v4453 = vadd.f32 %v4292, %v4452
        %v4454 = vpop.f32.mrf.mxu0
        %v4455 = vpop.f32.mrf.mxu0
        %v4456 = vadd.f32 %v4295, %v4455
        %v4457 = vpop.f32.mrf.mxu0
        %4458 = vmatprep.mubr.bf16.mxu0 0
        %4459 = vmatmul.mubr.bf16.gmra.mxu0 %v3167
        %v4460 = vpop.f32.mrf.mxu0
        %v4461 = vadd.f32 %v4300, %v4460
        %v4462 = vpop.f32.mrf.mxu0
        %v4463 = vpop.f32.mrf.mxu0
        %v4464 = vadd.f32 %v4303, %v4463
        %v4465 = vpop.f32.mrf.mxu0
        %4466 = vmatprep.mubr.bf16.mxu0 0
        %4467 = vmatmul.mubr.bf16.gmra.mxu0 %v3168
        %v4468 = vpop.f32.mrf.mxu0
        %v4469 = vadd.f32 %v4308, %v4468
        %v4470 = vpop.f32.mrf.mxu0
        %v4471 = vpop.f32.mrf.mxu0
        %v4472 = vadd.f32 %v4311, %v4471
        %v4473 = vpop.f32.mrf.mxu0
        %4474 = vmatprep.mubr.bf16.mxu0 0
        %4475 = vmatmul.mubr.bf16.gmra.mxu0 %v3169
        %v4476 = vpop.f32.mrf.mxu0
        %v4477 = vadd.f32 %v4316, %v4476
        %v4478 = vpop.f32.mrf.mxu0
        %v4479 = vpop.f32.mrf.mxu0
        %v4480 = vadd.f32 %v4319, %v4479
        %v4481 = vpop.f32.mrf.mxu0
        %4482 = vmatprep.mubr.bf16.mxu0 0
        %4483 = vmatmul.mubr.bf16.gmra.mxu0 %v3170
        %v4484 = vpop.f32.mrf.mxu0
        %v4485 = vadd.f32 %v4324, %v4484
        %v4486 = vpop.f32.mrf.mxu0
        %v4487 = vpop.f32.mrf.mxu0
        %v4488 = vadd.f32 %v4327, %v4487
        %v4489 = vpop.f32.mrf.mxu0
        %4490 = vmatprep.mubr.bf16.mxu0 0
        %4491 = vmatmul.mubr.bf16.gmra.mxu0 %v3171
        %v4492 = vpop.f32.mrf.mxu0
        %v4493 = vadd.f32 %v4332, %v4492
        %v4494 = vpop.f32.mrf.mxu0
        %v4495 = vpop.f32.mrf.mxu0
        %v4496 = vadd.f32 %v4335, %v4495
        %v4497 = vpop.f32.mrf.mxu0
        %4498 = vmatprep.mubr.bf16.mxu0 0
        %4499 = vmatmul.mubr.bf16.gmra.mxu0 %v3172
        %v4500 = vpop.f32.mrf.mxu0
        %v4501 = vadd.f32 %v4340, %v4500
        %v4502 = vpop.f32.mrf.mxu0
        %v4503 = vpop.f32.mrf.mxu0
        %v4504 = vadd.f32 %v4343, %v4503
        %v4505 = vpop.f32.mrf.mxu0
        %4506 = vmatprep.mubr.bf16.mxu0 0
        %4507 = vmatmul.mubr.bf16.gmra.mxu0 %v3173
        %v4508 = vpop.f32.mrf.mxu0
        %v4509 = vadd.f32 %v4348, %v4508
        %v4510 = vpop.f32.mrf.mxu0
        %v4511 = vpop.f32.mrf.mxu0
        %v4512 = vadd.f32 %v4351, %v4511
        %v4513 = vpop.f32.mrf.mxu0
        %4514 = vmatprep.mubr.bf16.mxu0 0
        %4515 = vmatmul.mubr.bf16.gmra.mxu0 %v3174
        %v4516 = vpop.f32.mrf.mxu0
        %v4517 = vadd.f32 %v4356, %v4516
        %v4518 = vpop.f32.mrf.mxu0
        %v4519 = vpop.f32.mrf.mxu0
        %v4520 = vadd.f32 %v4359, %v4519
        %v4521 = vpop.f32.mrf.mxu0
        %4522 = vmatprep.mubr.bf16.mxu0 0
        %4523 = vmatmul.mubr.bf16.gmra.mxu0 %v3175
        %v4524 = vpop.f32.mrf.mxu0
        %v4525 = vadd.f32 %v4364, %v4524
        %v4526 = vpop.f32.mrf.mxu0
        %v4527 = vpop.f32.mrf.mxu0
        %v4528 = vadd.f32 %v4367, %v4527
        %v4529 = vpop.f32.mrf.mxu0
        %4530 = vmatprep.mubr.bf16.mxu0 0
        %4531 = vmatmul.mubr.bf16.gmra.mxu0 %v3176
        %v4532 = vpop.f32.mrf.mxu0
        %v4533 = vadd.f32 %v4372, %v4532
        %v4534 = vpop.f32.mrf.mxu0
        %v4535 = vpop.f32.mrf.mxu0
        %v4536 = vadd.f32 %v4375, %v4535
        %v4537 = vpop.f32.mrf.mxu0
        %4538 = vmatprep.mubr.bf16.mxu0 0
        %4539 = vmatmul.mubr.bf16.gmra.mxu0 %v3177
        %v4540 = vpop.f32.mrf.mxu0
        %v4541 = vadd.f32 %v4380, %v4540
        %v4542 = vpop.f32.mrf.mxu0
        %v4543 = vpop.f32.mrf.mxu0
        %v4544 = vadd.f32 %v4383, %v4543
        %v4545 = vpop.f32.mrf.mxu0
        %4546 = vmatprep.mubr.bf16.mxu0 0
        %4547 = vmatmul.mubr.bf16.gmra.mxu0 %v3178
        %v4548 = vpop.f32.mrf.mxu0
        %v4549 = vadd.f32 %v4388, %v4548
        %v4550 = vpop.f32.mrf.mxu0
        %v4551 = vpop.f32.mrf.mxu0
        %v4552 = vadd.f32 %v4391, %v4551
        %v4553 = vpop.f32.mrf.mxu0
        %4554 = vmatprep.mubr.bf16.mxu0 0
        %4555 = vmatmul.mubr.bf16.gmra.mxu0 %v3179
        %v4556 = vpop.f32.mrf.mxu0
        %v4557 = vadd.f32 %v4396, %v4556
        %v4558 = vpop.f32.mrf.mxu0
        %v4559 = vpop.f32.mrf.mxu0
        %v4560 = vadd.f32 %v4399, %v4559
        %v4561 = vpop.f32.mrf.mxu0
        %4562 = vmatprep.mubr.bf16.mxu0 0
        %4563 = vmatmul.mubr.bf16.gmra.mxu0 %v3180
        %v4564 = vpop.f32.mrf.mxu0
        %v4565 = vadd.f32 %v4404, %v4564
        %v4566 = vpop.f32.mrf.mxu0
        %v4567 = vpop.f32.mrf.mxu0
        %v4568 = vadd.f32 %v4407, %v4567
        %v4569 = vpop.f32.mrf.mxu0
        %4570 = vmatprep.mubr.bf16.mxu0 0
        %4571 = vmatmul.mubr.bf16.gmra.mxu0 %v3181
        %v4572 = vpop.f32.mrf.mxu0
        %v4573 = vadd.f32 %v4412, %v4572
        %v4574 = vpop.f32.mrf.mxu0
        %v4575 = vpop.f32.mrf.mxu0
        %v4576 = vadd.f32 %v4415, %v4575
        %v4577 = vpop.f32.mrf.mxu0
        %4578 = vdwg.mxu0
        %v4579 = vpack.c.bf16 %v4456, %v4453
        %v4580 = vpack.c.bf16 %v4464, %v4461
        %v4581 = vpack.c.bf16 %v4472, %v4469
        %v4582 = vpack.c.bf16 %v4480, %v4477
        %v4583 = vpack.c.bf16 %v4488, %v4485
        %v4584 = vpack.c.bf16 %v4496, %v4493
        %v4585 = vpack.c.bf16 %v4504, %v4501
        %v4586 = vpack.c.bf16 %v4512, %v4509
        %v4587 = vpack.c.bf16 %v4520, %v4517
        %v4588 = vpack.c.bf16 %v4528, %v4525
        %v4589 = vpack.c.bf16 %v4536, %v4533
        %v4590 = vpack.c.bf16 %v4544, %v4541
        %v4591 = vpack.c.bf16 %v4552, %v4549
        %v4592 = vpack.c.bf16 %v4560, %v4557
        %v4593 = vpack.c.bf16 %v4568, %v4565
        %v4594 = vpack.c.bf16 %v4576, %v4573
        %v4611 = vunpack.c.l.b16 %v4579
        %v4612 = vunpack.c.h.b16 %v4579
        %v4613 = vunpack.c.l.b16 %v4580
        %v4614 = vunpack.c.h.b16 %v4580
        %v4615 = vunpack.c.l.b16 %v4581
        %v4616 = vunpack.c.h.b16 %v4581
        %v4617 = vunpack.c.l.b16 %v4582
        %v4618 = vunpack.c.h.b16 %v4582
        %v4619 = vunpack.c.l.b16 %v4583
        %v4620 = vunpack.c.h.b16 %v4583
        %v4621 = vunpack.c.l.b16 %v4584
        %v4622 = vunpack.c.h.b16 %v4584
        %v4623 = vunpack.c.l.b16 %v4585
        %v4624 = vunpack.c.h.b16 %v4585
        %v4625 = vunpack.c.l.b16 %v4586
        %v4626 = vunpack.c.h.b16 %v4586
        %v4627 = vunpack.c.l.b16 %v4587
        %v4628 = vunpack.c.h.b16 %v4587
        %v4629 = vunpack.c.l.b16 %v4588
        %v4630 = vunpack.c.h.b16 %v4588
        %v4631 = vunpack.c.l.b16 %v4589
        %v4632 = vunpack.c.h.b16 %v4589
        %v4633 = vunpack.c.l.b16 %v4590
        %v4634 = vunpack.c.h.b16 %v4590
        %v4635 = vunpack.c.l.b16 %v4591
        %v4636 = vunpack.c.h.b16 %v4591
        %v4637 = vunpack.c.l.b16 %v4592
        %v4638 = vunpack.c.h.b16 %v4592
        %v4639 = vunpack.c.l.b16 %v4593
        %v4640 = vunpack.c.h.b16 %v4593
        %v4641 = vunpack.c.l.b16 %v4594
        %v4642 = vunpack.c.h.b16 %v4594
        %v4643 = vpack.c.b16 %v4611, %v4611
        %v4644 = vpack.c.b16 %v4612, %v4612
        %v4645 = vpack.c.b16 %v4613, %v4613
        %v4646 = vpack.c.b16 %v4614, %v4614
        %v4647 = vpack.c.b16 %v4615, %v4615
        %v4648 = vpack.c.b16 %v4616, %v4616
        %v4649 = vpack.c.b16 %v4617, %v4617
        %v4650 = vpack.c.b16 %v4618, %v4618
        %v4651 = vpack.c.b16 %v4619, %v4619
        %v4652 = vpack.c.b16 %v4620, %v4620
        %v4653 = vpack.c.b16 %v4621, %v4621
        %v4654 = vpack.c.b16 %v4622, %v4622
        %v4655 = vpack.c.b16 %v4623, %v4623
        %v4656 = vpack.c.b16 %v4624, %v4624
        %v4657 = vpack.c.b16 %v4625, %v4625
        %v4658 = vpack.c.b16 %v4626, %v4626
        %v4659 = vpack.c.b16 %v4627, %v4627
        %v4660 = vpack.c.b16 %v4628, %v4628
        %v4661 = vpack.c.b16 %v4629, %v4629
        %v4662 = vpack.c.b16 %v4630, %v4630
        %v4663 = vpack.c.b16 %v4631, %v4631
        %v4664 = vpack.c.b16 %v4632, %v4632
        %v4665 = vpack.c.b16 %v4633, %v4633
        %v4666 = vpack.c.b16 %v4634, %v4634
        %v4667 = vpack.c.b16 %v4635, %v4635
        %v4668 = vpack.c.b16 %v4636, %v4636
        %v4669 = vpack.c.b16 %v4637, %v4637
        %v4670 = vpack.c.b16 %v4638, %v4638
        %v4671 = vpack.c.b16 %v4639, %v4639
        %v4672 = vpack.c.b16 %v4640, %v4640
        %v4673 = vpack.c.b16 %v4641, %v4641
        %v4674 = vpack.c.b16 %v4642, %v4642
        %4707 = vst [vmem:[%s207] sm:$0xf] %v4643
        %4708 = vst [vmem:[%s207 + $0x4] sm:$0xf] %v4644
        %4709 = vst [vmem:[%s207 + $0x8] sm:$0xf] %v4645
        %4710 = vst [vmem:[%s207 + $0xc] sm:$0xf] %v4646
        %4711 = vst [vmem:[%s207 + $0x10] sm:$0xf] %v4647
        %4712 = vst [vmem:[%s207 + $0x14] sm:$0xf] %v4648
        %4713 = vst [vmem:[%s207 + $0x18] sm:$0xf] %v4649
        %4714 = vst [vmem:[%s207 + $0x1c] sm:$0xf] %v4650
        %4715 = vst [vmem:[%s207 + $0x20] sm:$0xf] %v4651
        %4716 = vst [vmem:[%s207 + $0x24] sm:$0xf] %v4652
        %4717 = vst [vmem:[%s207 + $0x28] sm:$0xf] %v4653
        %4718 = vst [vmem:[%s207 + $0x2c] sm:$0xf] %v4654
        %4719 = vst [vmem:[%s207 + $0x30] sm:$0xf] %v4655
        %4720 = vst [vmem:[%s207 + $0x34] sm:$0xf] %v4656
        %4721 = vst [vmem:[%s207 + $0x38] sm:$0xf] %v4657
        %4722 = vst [vmem:[%s207 + $0x3c] sm:$0xf] %v4658
        %4723 = vst [vmem:[%s207 + $0x40] sm:$0xf] %v4659
        %4724 = vst [vmem:[%s207 + $0x44] sm:$0xf] %v4660
        %4725 = vst [vmem:[%s207 + $0x48] sm:$0xf] %v4661
        %4726 = vst [vmem:[%s207 + $0x4c] sm:$0xf] %v4662
        %4727 = vst [vmem:[%s207 + $0x50] sm:$0xf] %v4663
        %4728 = vst [vmem:[%s207 + $0x54] sm:$0xf] %v4664
        %4729 = vst [vmem:[%s207 + $0x58] sm:$0xf] %v4665
        %4730 = vst [vmem:[%s207 + $0x5c] sm:$0xf] %v4666
        %4731 = vst [vmem:[%s207 + $0x60] sm:$0xf] %v4667
        %4732 = vst [vmem:[%s207 + $0x64] sm:$0xf] %v4668
        %4733 = vst [vmem:[%s207 + $0x68] sm:$0xf] %v4669
        %4734 = vst [vmem:[%s207 + $0x6c] sm:$0xf] %v4670
        %4735 = vst [vmem:[%s207 + $0x70] sm:$0xf] %v4671
        %4736 = vst [vmem:[%s207 + $0x74] sm:$0xf] %v4672
        %4737 = vst [vmem:[%s207 + $0x78] sm:$0xf] %v4673
        %4738 = vst [vmem:[%s207 + $0x7c] sm:$0xf] %v4674
        %v4739 = vadd.f32 %v4453, %v4456
        %v4740 = vadd.f32 %v4739, %v4461
        %v4741 = vadd.f32 %v4740, %v4464
        %v4742 = vadd.f32 %v4741, %v4469
        %v4743 = vadd.f32 %v4742, %v4472
        %v4744 = vadd.f32 %v4743, %v4477
        %v4745 = vadd.f32 %v4744, %v4480
        %v4746 = vadd.f32 %v4745, %v4485
        %v4747 = vadd.f32 %v4746, %v4488
        %v4748 = vadd.f32 %v4747, %v4493
        %v4749 = vadd.f32 %v4748, %v4496
        %v4750 = vadd.f32 %v4749, %v4501
        %v4751 = vadd.f32 %v4750, %v4504
        %v4752 = vadd.f32 %v4751, %v4509
        %v4753 = vadd.f32 %v4752, %v4512
        %v4754 = vadd.f32 %v4753, %v4517
        %v4755 = vadd.f32 %v4754, %v4520
        %v4756 = vadd.f32 %v4755, %v4525
        %v4757 = vadd.f32 %v4756, %v4528
        %v4758 = vadd.f32 %v4757, %v4533
        %v4759 = vadd.f32 %v4758, %v4536
        %v4760 = vadd.f32 %v4759, %v4541
        %v4761 = vadd.f32 %v4760, %v4544
        %v4762 = vadd.f32 %v4761, %v4549
        %v4763 = vadd.f32 %v4762, %v4552
        %v4764 = vadd.f32 %v4763, %v4557
        %v4765 = vadd.f32 %v4764, %v4560
        %v4766 = vadd.f32 %v4765, %v4565
        %v4767 = vadd.f32 %v4766, %v4568
        %v4768 = vadd.f32 %v4767, %v4573
        %v4769 = vadd.f32 %v4768, %v4576
        %v4770 = vrot.slane %v4769, 4
        %v4771 = vadd.f32 %v4769, %v4770
        %v4772 = vrot.slane %v4771, 2
        %v4773 = vadd.f32 %v4771, %v4772
        %v4774 = vrot.slane %v4773, 1
        %v4775 = vadd.f32 %v4773, %v4774
        %v4776 = vmul.f32 %v4775, 0.00390625
        %v4777 = vsub.f32 %v4453, %v4776
        %v4778 = vsub.f32 %v4456, %v4776
        %v4779 = vsub.f32 %v4461, %v4776
        %v4780 = vsub.f32 %v4464, %v4776
        %v4781 = vsub.f32 %v4469, %v4776
        %v4782 = vsub.f32 %v4472, %v4776
        %v4783 = vsub.f32 %v4477, %v4776
        %v4784 = vsub.f32 %v4480, %v4776
        %v4785 = vsub.f32 %v4485, %v4776
        %v4786 = vsub.f32 %v4488, %v4776
        %v4787 = vsub.f32 %v4493, %v4776
        %v4788 = vsub.f32 %v4496, %v4776
        %v4789 = vsub.f32 %v4501, %v4776
        %v4790 = vsub.f32 %v4504, %v4776
        %v4791 = vsub.f32 %v4509, %v4776
        %v4792 = vsub.f32 %v4512, %v4776
        %v4793 = vsub.f32 %v4517, %v4776
        %v4794 = vsub.f32 %v4520, %v4776
        %v4795 = vsub.f32 %v4525, %v4776
        %v4796 = vsub.f32 %v4528, %v4776
        %v4797 = vsub.f32 %v4533, %v4776
        %v4798 = vsub.f32 %v4536, %v4776
        %v4799 = vsub.f32 %v4541, %v4776
        %v4800 = vsub.f32 %v4544, %v4776
        %v4801 = vsub.f32 %v4549, %v4776
        %v4802 = vsub.f32 %v4552, %v4776
        %v4803 = vsub.f32 %v4557, %v4776
        %v4804 = vsub.f32 %v4560, %v4776
        %v4805 = vsub.f32 %v4565, %v4776
        %v4806 = vsub.f32 %v4568, %v4776
        %v4807 = vsub.f32 %v4573, %v4776
        %v4808 = vsub.f32 %v4576, %v4776
        %v4809 = vmul.f32 %v4777, %v4777
        %v4810 = vmul.f32 %v4778, %v4778
        %v4811 = vmul.f32 %v4779, %v4779
        %v4812 = vmul.f32 %v4780, %v4780
        %v4813 = vmul.f32 %v4781, %v4781
        %v4814 = vmul.f32 %v4782, %v4782
        %v4815 = vmul.f32 %v4783, %v4783
        %v4816 = vmul.f32 %v4784, %v4784
        %v4817 = vmul.f32 %v4785, %v4785
        %v4818 = vmul.f32 %v4786, %v4786
        %v4819 = vmul.f32 %v4787, %v4787
        %v4820 = vmul.f32 %v4788, %v4788
        %v4821 = vmul.f32 %v4789, %v4789
        %v4822 = vmul.f32 %v4790, %v4790
        %v4823 = vmul.f32 %v4791, %v4791
        %v4824 = vmul.f32 %v4792, %v4792
        %v4825 = vmul.f32 %v4793, %v4793
        %v4826 = vmul.f32 %v4794, %v4794
        %v4827 = vmul.f32 %v4795, %v4795
        %v4828 = vmul.f32 %v4796, %v4796
        %v4829 = vmul.f32 %v4797, %v4797
        %v4830 = vmul.f32 %v4798, %v4798
        %v4831 = vmul.f32 %v4799, %v4799
        %v4832 = vmul.f32 %v4800, %v4800
        %v4833 = vmul.f32 %v4801, %v4801
        %v4834 = vmul.f32 %v4802, %v4802
        %v4835 = vmul.f32 %v4803, %v4803
        %v4836 = vmul.f32 %v4804, %v4804
        %v4837 = vmul.f32 %v4805, %v4805
        %v4838 = vmul.f32 %v4806, %v4806
        %v4839 = vmul.f32 %v4807, %v4807
        %v4840 = vmul.f32 %v4808, %v4808
        %v4841 = vadd.f32 %v4809, %v4810
        %v4842 = vadd.f32 %v4841, %v4811
        %v4843 = vadd.f32 %v4842, %v4812
        %v4844 = vadd.f32 %v4843, %v4813
        %v4845 = vadd.f32 %v4844, %v4814
        %v4846 = vadd.f32 %v4845, %v4815
        %v4847 = vadd.f32 %v4846, %v4816
        %v4848 = vadd.f32 %v4847, %v4817
        %v4849 = vadd.f32 %v4848, %v4818
        %v4850 = vadd.f32 %v4849, %v4819
        %v4851 = vadd.f32 %v4850, %v4820
        %v4852 = vadd.f32 %v4851, %v4821
        %v4853 = vadd.f32 %v4852, %v4822
        %v4854 = vadd.f32 %v4853, %v4823
        %v4855 = vadd.f32 %v4854, %v4824
        %v4856 = vadd.f32 %v4855, %v4825
        %v4857 = vadd.f32 %v4856, %v4826
        %v4858 = vadd.f32 %v4857, %v4827
        %v4859 = vadd.f32 %v4858, %v4828
        %v4860 = vadd.f32 %v4859, %v4829
        %v4861 = vadd.f32 %v4860, %v4830
        %v4862 = vadd.f32 %v4861, %v4831
        %v4863 = vadd.f32 %v4862, %v4832
        %v4864 = vadd.f32 %v4863, %v4833
        %v4865 = vadd.f32 %v4864, %v4834
        %v4866 = vadd.f32 %v4865, %v4835
        %v4867 = vadd.f32 %v4866, %v4836
        %v4868 = vadd.f32 %v4867, %v4837
        %v4869 = vadd.f32 %v4868, %v4838
        %v4870 = vadd.f32 %v4869, %v4839
        %v4871 = vadd.f32 %v4870, %v4840
        %v4872 = vrot.slane %v4871, 4
        %v4873 = vadd.f32 %v4871, %v4872
        %v4874 = vrot.slane %v4873, 2
        %v4875 = vadd.f32 %v4873, %v4874
        %v4876 = vrot.slane %v4875, 1
        %v4877 = vadd.f32 %v4875, %v4876
        %vm4878 = vcmask 1040384
        %v4879 = vsel %vm4878, %v4776, %v4877
        %4880 = vst [vmem:[%s214] sm:$0x3] %v4879
        %s4881 = sand.u32 %s80, 1
        %s4882 = scalar_lea.sflag [#allocation5], %s4881
        %s4883 = sand.u32 %s80, 1
        %s4884 = smul.addr %s4883, 128
        %s4885 = scalar_lea.vmem [#allocation8], %s4884
        %s4886 = sand.u32 %s106, 1
        %s4887 = scalar_lea.sflag [#allocation10], %s4886
        %s4888 = sand.u32 %s106, 1
        %s4889 = smul.addr %s4888, 2
        %s4890 = scalar_lea.vmem [#allocation9], %s4889
        // Predicated region
        $region37: #{tpu_custom_call.1} parent=27 // pred_check
          %p4891 = pneg %p90
        $region38: #{tpu_custom_call.1} parent=27 // pred_check_branch
          %4893 = sbr.rel (%p4891) target = $region40
        $region39: #{tpu_custom_call.1} parent=27 // pred_region
          %s4895 = ssub.s32 2048, 2048
          %4896 = vsyncadd %s4882, %s4895
          %s4897 = smul.addr %s25, 32
          %s4898 = smul.addr %s4897, 64
          %s4899 = scalar_lea.hbm %s2, %s4898
          %s4900 = sshll.u32 %s4885, 4
          %s4901 = int_to_ptr.vmem [resolvable:$true] %s4900
          %4906 = dma.vmem_to_hbm [thread:$0]  %s4901, 2048, %s4899, %s4882, 64, 64, 4
        $region40: #{tpu_custom_call.1} parent=27 // pred_fallthru
          _
        // Predicated region
        $region41: #{tpu_custom_call.1} parent=27 // pred_check
          %p4907 = pneg %p116
        $region42: #{tpu_custom_call.1} parent=27 // pred_check_branch
          %4909 = sbr.rel (%p4907) target = $region44
        $region43: #{tpu_custom_call.1} parent=27 // pred_region
          %s4911 = ssub.s32 32, 32
          %4912 = vsyncadd %s4887, %s4911
          %s4913 = smul.addr %s25, 32
          %s4914 = scalar_lea.hbm %s3, %s4913
          %s4916 = sshll.u32 %s4890, 4
          %s4917 = int_to_ptr.vmem [resolvable:$true] %s4916
          %4919 = dma.vmem_to_hbm [thread:$0]  %s4917, 32, %s4914, %s4887
        $region44: #{tpu_custom_call.1} parent=27 // pred_fallthru
          _
      $region28: #{tpu_custom_call.1} parent=5 // pred_fallthru
        _
      %p4920 = scmp.le.s32.totalorder 2, %s20
      // Predicated region
      $region45: #{tpu_custom_call.1} parent=5 // pred_check
        %p4921 = pneg %p4920
      $region46: #{tpu_custom_call.1} parent=5 // pred_check_branch
        %4923 = sbr.rel (%p4921) target = $region48
      $region47: #{tpu_custom_call.1} parent=5 // pred_region
        %s4924 = ssub.s32 %s20, 2
        // Predicated region
        $region49: #{tpu_custom_call.1} parent=47 // pred_check
          %p4925 = pneg %p96
        $region50: #{tpu_custom_call.1} parent=47 // pred_check_branch
          %4927 = sbr.rel (%p4925) target = $region52
        $region51: #{tpu_custom_call.1} parent=47 // pred_region
          %s4928 = sand.u32 %s81, 1
          %s4929 = scalar_lea.sflag [#allocation5], %s4928
          %s4930 = sand.u32 %s81, 1
          %s4931 = smul.addr %s4930, 128
          %s4932 = scalar_lea.vmem [#allocation8], %s4931
          %4933 = dma.done %s4929, 2048
        $region52: #{tpu_custom_call.1} parent=47 // pred_fallthru
          _
        // Predicated region
        $region53: #{tpu_custom_call.1} parent=47 // pred_check
          %p4934 = pneg %p122
        $region54: #{tpu_custom_call.1} parent=47 // pred_check_branch
          %4936 = sbr.rel (%p4934) target = $region56
        $region55: #{tpu_custom_call.1} parent=47 // pred_region
          %s4937 = sand.u32 %s107, 1
          %s4938 = scalar_lea.sflag [#allocation10], %s4937
          %s4939 = sand.u32 %s107, 1
          %s4940 = smul.addr %s4939, 2
          %s4941 = scalar_lea.vmem [#allocation9], %s4940
          %4942 = dma.done %s4938, 32
        $region56: #{tpu_custom_call.1} parent=47 // pred_fallthru
          _
      $region48: #{tpu_custom_call.1} parent=5 // pred_fallthru
        _
    $region6: #{tpu_custom_call.1} parent=1 // loop_footer
      %s24 = sadd.s32 1, %s20
    $region7: #{tpu_custom_call.1} parent=1 // loop_footer_branch
      %19 = sbr.rel target = $region3
    $region8: #{tpu_custom_call.1} parent=1 // loop_exit
      _
    %4943 = vsyncpa [#allocation4], 1
    %s4944 = scalar_lea.sflag [#allocation4], 1
    %4945 = vsyncpa %s4944, 1
    %4946 = vsyncpa [#allocation7], 1
    %4947 = vsyncpa [#allocation5], 1
    %s4948 = scalar_lea.sflag [#allocation5], 1
    %4949 = vsyncpa %s4948, 1
    %4950 = vsyncpa [#allocation10], 1
    %s4951 = scalar_lea.sflag [#allocation10], 1
    %4952 = vsyncpa %s4951, 1

</llo_original>
